<compile_context>
chip_gen: v7x
topology: tpu7x:2x2x1
jax: 0.10.0
libtpu: 0.0.40
codegen_flags: <defaults>
</compile_context>

<pallas_src>
import functools
import math

import jax
import jax.numpy as jnp
from jax import lax
from jax.experimental import pallas as pl
from jax.experimental.pallas import tpu as pltpu

_BF16 = jnp.bfloat16


# --------------------------------------------------------------------------
# In-kernel helpers
# --------------------------------------------------------------------------
def _layernorm(x, gamma, beta, eps):
    mu = jnp.mean(x, axis=-1, keepdims=True)
    var = jnp.mean(jnp.square(x - mu), axis=-1, keepdims=True)
    return (x - mu) * lax.rsqrt(var + eps) * gamma + beta


def _attend(q, k, v, nhead, mask):
    # q: (Sq, D) f32 (already scaled), k/v: (Sk, D) f32.
    # Returns lane-dense (Sq, D) f32 (heads concatenated) so the following
    # output projection is ONE full-width (Sq,D)x(D,D) MXU matmul.
    _, D = q.shape
    Dh = D // nhead
    outs = []
    for h in range(nhead):                         # static unroll over heads
        lo = h * Dh
        qh = q[:, lo:lo + Dh].astype(_BF16)
        kh = k[:, lo:lo + Dh].astype(_BF16)
        vh = v[:, lo:lo + Dh].astype(_BF16)
        # contracting ((1,),(1,)) -> q @ k^T without a materialized transpose
        s = lax.dot_general(qh, kh, (((1,), (1,)), ((), ())),
                            preferred_element_type=jnp.float32)
        if mask is not None:
            s = s + mask
        m = jnp.max(s, axis=-1, keepdims=True)
        p = jnp.exp(s - m)
        l = jnp.sum(p, axis=-1, keepdims=True)
        pv = jnp.dot(p.astype(_BF16), vh, preferred_element_type=jnp.float32)
        outs.append(pv / l)                        # exact softmax normalization
    return jnp.concatenate(outs, axis=-1)          # (Sq, D)


# --------------------------------------------------------------------------
# Fused kernels
# --------------------------------------------------------------------------
def _self_attn_block_kernel(x_ref, wqkv_ref, bqkv_ref, wo_ref, bo_ref,
                            g_ref, b_ref, *rest, nhead, eps, causal, has_mask):
    # One batch element per grid step.  x: (Sq, D) f32.
    if has_mask:
        mask_ref, o_ref = rest
    else:
        (o_ref,) = rest
    x = x_ref[0]
    Sq, D = x.shape
    scale = 1.0 / math.sqrt(D // nhead)

    qkv = (jnp.dot(x.astype(_BF16), wqkv_ref[...],
                   preferred_element_type=jnp.float32) + bqkv_ref[...])  # (Sq,3D)
    q = qkv[:, :D] * scale                      # fold 1/sqrt(Dh) into q once
    k = qkv[:, D:2 * D]
    v = qkv[:, 2 * D:]

    if causal:
        rows = lax.broadcasted_iota(jnp.int32, (Sq, Sq), 0)
        cols = lax.broadcasted_iota(jnp.int32, (Sq, Sq), 1)
        mask = jnp.where(rows >= cols, 0.0, -1e9).astype(jnp.float32)
    elif has_mask:
        mask = mask_ref[...]
    else:
        mask = None

    # TODO(synk): flash-style query/key tiling for Sq >= 512 to bound live
    # VMEM/vreg state (online softmax), instead of the monolithic (Sq,Sq) score.
    attn = _attend(q, k, v, nhead, mask)
    proj = (jnp.dot(attn.astype(_BF16), wo_ref[...],
                    preferred_element_type=jnp.float32) + bo_ref[...])
    o_ref[0] = _layernorm(x + proj, g_ref[...], b_ref[...], eps).astype(o_ref.dtype)


def _cross_attn_block_kernel(x_ref, kv_ref, wq_ref, bq_ref, wo_ref, bo_ref,
                             g_ref, b_ref, o_ref, *, nhead, eps):
    # Grid = (batch, query tile).  kv is the pre-computed memory K/V projection.
    x = x_ref[0]                                   # (TQ, D) f32
    kv = kv_ref[0].astype(jnp.float32)             # (Sk, 2D)
    _, D = x.shape
    scale = 1.0 / math.sqrt(D // nhead)
    q = (jnp.dot(x.astype(_BF16), wq_ref[...],
                 preferred_element_type=jnp.float32) + bq_ref[...]) * scale
    attn = _attend(q, kv[:, :D], kv[:, D:], nhead, None)   # no memory mask
    proj = (jnp.dot(attn.astype(_BF16), wo_ref[...],
                    preferred_element_type=jnp.float32) + bo_ref[...])
    o_ref[0] = _layernorm(x + proj, g_ref[...], b_ref[...], eps).astype(o_ref.dtype)


def _ffn_ln_kernel(x_ref, w1_ref, b1_ref, w2_ref, b2_ref, g_ref, b_ref, o_ref,
                   *, eps):
    x = x_ref[...]                                 # (TM, D) f32
    h = jnp.maximum(
        jnp.dot(x.astype(_BF16), w1_ref[...],
                preferred_element_type=jnp.float32) + b1_ref[...], 0.0)
    f = (jnp.dot(h.astype(_BF16), w2_ref[...],
                 preferred_element_type=jnp.float32) + b2_ref[...])
    o_ref[...] = _layernorm(x + f, g_ref[...], b_ref[...], eps).astype(o_ref.dtype)


def _linear_kernel(x_ref, w_ref, b_ref, o_ref):
    y = (jnp.dot(x_ref[...].astype(_BF16), w_ref[...],
                 preferred_element_type=jnp.float32) + b_ref[...])
    o_ref[...] = y.astype(o_ref.dtype)


# --------------------------------------------------------------------------
# Wrapper helpers
# --------------------------------------------------------------------------
def _wspec(shape):
    # Resident (constant block index) input: single-buffered -> half the VMEM.
    return pl.BlockSpec(shape, lambda *_: (0,) * len(shape),
                        pipeline_mode=pl.Buffered(1))


def _cparams(sem, *arrays):
    need = sum(int(a.size) * a.dtype.itemsize for a in arrays)
    limit = int(min(max(3 * need + (16 << 20), 32 << 20), 64 << 20))
    return pltpu.CompilerParams(dimension_semantics=sem, vmem_limit_bytes=limit)


def _row_tile(m):
    # Biggest convenient row tile (>=128 keeps the MXU/HBM pipeline busy).
    for t in (512, 256, 128):
        if m % t == 0:
            return t
    return m  # small / odd problems: single full block


def _nbytes(*arrays):
    return int(sum(int(a.size) * a.dtype.itemsize for a in arrays))


# --------------------------------------------------------------------------
# Fused blocks
# --------------------------------------------------------------------------
def self_attn_block(x, p, gamma, beta, tgt_mask, nhead, eps=1e-5):
    B, Sq, D = x.shape
    causal = isinstance(tgt_mask, str)             # "causal" -> build in-kernel
    has_mask = (tgt_mask is not None) and not causal
    kern = functools.partial(_self_attn_block_kernel, nhead=nhead, eps=eps,
                             causal=causal, has_mask=has_mask)
    inputs = [x, p["wqkv"], p["bqkv"], p["wo"], p["bo"], gamma, beta]
    in_specs = [
        pl.BlockSpec((1, Sq, D), lambda i: (i, 0, 0)),   # x (also residual)
        _wspec((D, 3 * D)),                              # fused Wqkv (resident)
        _wspec((1, 3 * D)),
        _wspec((D, D)),                                  # Wo
        _wspec((1, D)),
        _wspec((1, D)),                                  # ln gamma
        _wspec((1, D)),                                  # ln beta
    ]
    if has_mask:
        inputs.append(jnp.asarray(tgt_mask, jnp.float32))
        in_specs.append(_wspec((Sq, Sq)))
    flops = B * (2 * Sq * D * 3 * D + 4 * Sq * Sq * D + 2 * Sq * D * D)
    return pl.pallas_call(
        kern,
        out_shape=jax.ShapeDtypeStruct((B, Sq, D), jnp.float32),
        grid=(B,),
        in_specs=in_specs,
        out_specs=pl.BlockSpec((1, Sq, D), lambda i: (i, 0, 0)),
        compiler_params=_cparams(("parallel",), *inputs),
        cost_estimate=pl.CostEstimate(flops=int(flops),
                                      transcendentals=int(B * nhead * Sq * Sq),
                                      bytes_accessed=_nbytes(*inputs) + _nbytes(x)),
    )(*inputs)


def cross_attn_block(x, mem_kv, p, gamma, beta, nhead, eps=1e-5):
    B, Sq, D = x.shape
    Sk = mem_kv.shape[1]
    TQ = 256 if Sq % 256 == 0 else Sq              # query tile (more grid work)
    NQ = Sq // TQ
    kern = functools.partial(_cross_attn_block_kernel, nhead=nhead, eps=eps)
    inputs = [x, mem_kv, p["wq"], p["bq"], p["wo"], p["bo"], gamma, beta]
    flops = B * (2 * Sq * D * D + 4 * Sq * Sk * D + 2 * Sq * D * D)
    return pl.pallas_call(
        kern,
        out_shape=jax.ShapeDtypeStruct((B, Sq, D), jnp.float32),
        grid=(B, NQ),
        in_specs=[
            pl.BlockSpec((1, TQ, D), lambda b, q: (b, q, 0)),     # x tile
            pl.BlockSpec((1, Sk, 2 * D), lambda b, q: (b, 0, 0)), # precomputed KV
            _wspec((D, D)),                                       # Wq
            _wspec((1, D)),
            _wspec((D, D)),                                       # Wo
            _wspec((1, D)),
            _wspec((1, D)),                                       # ln gamma
            _wspec((1, D)),                                       # ln beta
        ],
        out_specs=pl.BlockSpec((1, TQ, D), lambda b, q: (b, q, 0)),
        compiler_params=_cparams(("parallel", "parallel"), *inputs),
        cost_estimate=pl.CostEstimate(flops=int(flops),
                                      transcendentals=int(B * nhead * Sq * Sk),
                                      bytes_accessed=_nbytes(*inputs) + _nbytes(x)),
    )(*inputs)


def ffn_ln_block(x, p, gamma, beta, eps=1e-5):
    B, S, D = x.shape
    M = B * S
    F = p["w1"].shape[1]
    x2d = x.reshape(M, D)
    TM = _row_tile(M)
    kern = functools.partial(_ffn_ln_kernel, eps=eps)
    inputs = [x2d, p["w1"], p["b1"], p["w2"], p["b2"], gamma, beta]
    out = pl.pallas_call(
        kern,
        out_shape=jax.ShapeDtypeStruct((M, D), jnp.float32),
        grid=(M // TM,),
        in_specs=[
            pl.BlockSpec((TM, D), lambda i: (i, 0)),   # activation tile (streamed)
            _wspec((D, F)),                            # W1 (resident)
            _wspec((1, F)),
            _wspec((F, D)),                            # W2 (resident)
            _wspec((1, D)),
            _wspec((1, D)),                            # ln gamma
            _wspec((1, D)),                            # ln beta
        ],
        out_specs=pl.BlockSpec((TM, D), lambda i: (i, 0)),
        compiler_params=_cparams(("parallel",), *inputs),
        cost_estimate=pl.CostEstimate(flops=int(4 * M * D * F), transcendentals=0,
                                      bytes_accessed=_nbytes(*inputs) + _nbytes(x2d)),
    )(*inputs)
    return out.reshape(B, S, D)


def linear_block(x, w, b, out_dtype=_BF16):
    # Simple fused linear (used once for the hoisted memory K/V projection).
    B, S, D = x.shape
    N = w.shape[1]
    M = B * S
    x2d = x.reshape(M, D)
    TM = _row_tile(M)
    out = pl.pallas_call(
        _linear_kernel,
        out_shape=jax.ShapeDtypeStruct((M, N), out_dtype),
        grid=(M // TM,),
        in_specs=[pl.BlockSpec((TM, D), lambda i: (i, 0)),
                  _wspec((D, N)), _wspec((1, N))],
        out_specs=pl.BlockSpec((TM, N), lambda i: (i, 0)),
        compiler_params=_cparams(("parallel",), x2d, w, b),
        cost_estimate=pl.CostEstimate(flops=int(2 * M * D * N), transcendentals=0,
                                      bytes_accessed=_nbytes(x2d, w, b)),
    )(x2d, w, b)
    return out.reshape(B, S, N)


# --------------------------------------------------------------------------
# Decoder layer / stack
# --------------------------------------------------------------------------
def decoder_layer(x, mem_kv, params, nhead, tgt_mask):
    x = self_attn_block(x, params["self_attn"], params["ln1_g"], params["ln1_b"],
                        tgt_mask, nhead)
    x = cross_attn_block(x, mem_kv, params["cross_attn"], params["ln2_g"],
                         params["ln2_b"], nhead)
    x = ffn_ln_block(x, params, params["ln3_g"], params["ln3_b"])
    return x


def transformer_decoder(tgt, memory, params, tgt_mask="causal", *,
                        num_layers, nhead):
    # clones(): every layer shares one parameter set and `memory` is fixed, so
    # the cross-attention K/V projection is identical every layer -> compute it
    # ONCE here instead of num_layers times.
    ca = params["cross_attn"]
    mem_kv = linear_block(memory, ca["wkv"], ca["bkv"])   # (B, Sk, 2D) bf16
    out = tgt
    # TODO(synk): fold the shared-weight layer loop into a single pallas_call
    # (grid axis over layers, weights resident in VMEM, activations in scratch)
    # to remove per-layer activation HBM round-trips and weight re-DMA.
    for _ in range(num_layers):
        out = decoder_layer(out, mem_kv, params, nhead, tgt_mask)
    return out


# --------------------------------------------------------------------------
# Deterministic parameter init (fused weight layouts, bf16 weight matrices)
# --------------------------------------------------------------------------
def init_params(key, d_model, nhead, dim_ff):
    ks = jax.random.split(key, 8)
    s = 0.05
    D = d_model
    f32 = jnp.float32

    def w(k, shape):
        return (jax.random.normal(k, shape, f32) * s).astype(_BF16)

    return {
        "self_attn": {
            "wqkv": w(ks[0], (D, 3 * D)),             # fused [Wq | Wk | Wv]
            "bqkv": jnp.zeros((1, 3 * D), f32),
            "wo": w(ks[1], (D, D)),
            "bo": jnp.zeros((1, D), f32),
        },
        "cross_attn": {
            "wq": w(ks[2], (D, D)),
            "bq": jnp.zeros((1, D), f32),
            "wkv": w(ks[3], (D, 2 * D)),              # fused [Wk | Wv]
            "bkv": jnp.zeros((1, 2 * D), f32),
            "wo": w(ks[4], (D, D)),
            "bo": jnp.zeros((1, D), f32),
        },
        "w1": w(ks[5], (D, dim_ff)),
        "b1": jnp.zeros((1, dim_ff), f32),
        "w2": w(ks[6], (dim_ff, D)),
        "b2": jnp.zeros((1, D), f32),
        "ln1_g": jnp.ones((1, D), f32), "ln1_b": jnp.zeros((1, D), f32),
        "ln2_g": jnp.ones((1, D), f32), "ln2_b": jnp.zeros((1, D), f32),
        "ln3_g": jnp.ones((1, D), f32), "ln3_b": jnp.zeros((1, D), f32),
    }


if __name__ == "__main__":
    B, S_TGT, S_MEM = 2, 8, 8
    D_MODEL, NHEAD, DIM_FF, NUM_LAYERS = 32, 4, 64, 2

    key = jax.random.PRNGKey(0)
    k_tgt, k_mem, k_par = jax.random.split(key, 3)

    tgt = jax.random.normal(k_tgt, (B, S_TGT, D_MODEL), jnp.float32)
    memory = jax.random.normal(k_mem, (B, S_MEM, D_MODEL), jnp.float32)
    params = init_params(k_par, D_MODEL, NHEAD, DIM_FF)

    # Causal target mask is generated in-kernel (no (Sq,Sq) array is DMA'd).
    decoder = jax.jit(functools.partial(
        transformer_decoder, tgt_mask="causal",
        num_layers=NUM_LAYERS, nhead=NHEAD))
    out = decoder(tgt, memory, params)
    jax.block_until_ready(out)
    assert out.shape == (B, S_TGT, D_MODEL)
    print("KERNEL_OK")
</pallas_src>

<mosaic_0001>
module attributes {stable_mosaic.version = 11 : i64} {
  func.func @_linear_kernel(%arg0: i32, %arg1: memref<16x32xf32, #tpu.memory_space<vmem>>, %arg2: memref<32x64xbf16, #tpu.memory_space<vmem>>, %arg3: memref<1x64xf32, #tpu.memory_space<vmem>>, %arg4: memref<16x64xbf16, #tpu.memory_space<vmem>>) attributes {dimension_semantics = [#tpu.dimension_semantics<parallel>], iteration_bounds = array<i64: 1>, scalar_prefetch = 0 : i64, scratch_operands = 0 : i64, tpu.core_type = #tpu.core_type<tc>, window_params = [{transform_indices = @transform_0, window_bounds = array<i64: 16, 32>}, {pipeline_mode = #tpu.pipeline_mode<synchronous>, transform_indices = @transform_1, window_bounds = array<i64: 32, 64>}, {pipeline_mode = #tpu.pipeline_mode<synchronous>, transform_indices = @transform_2, window_bounds = array<i64: 1, 64>}, {transform_indices = @transform_3, window_bounds = array<i64: 16, 64>}]} {
    %c0 = arith.constant 0 : index
    %c0_0 = arith.constant 0 : index
    %0 = vector.load %arg1[%c0, %c0_0] : memref<16x32xf32, #tpu.memory_space<vmem>>, vector<16x32xf32>
    %1 = arith.truncf %0 : vector<16x32xf32> to vector<16x32xbf16>
    %c0_1 = arith.constant 0 : index
    %c0_2 = arith.constant 0 : index
    %2 = vector.load %arg2[%c0_1, %c0_2] : memref<32x64xbf16, #tpu.memory_space<vmem>>, vector<32x64xbf16>
    %cst = arith.constant dense<0.000000e+00> : vector<16x64xf32>
    %3 = tpu.matmul %1, %2, %cst {dimension_numbers = #tpu.dot_dimension_numbers<[1], [0], [0], [1], [0, 0, 1, 1], [], []>} : vector<16x32xbf16>, vector<32x64xbf16>, vector<16x64xf32> -> vector<16x64xf32>
    %c0_3 = arith.constant 0 : index
    %c0_4 = arith.constant 0 : index
    %4 = vector.load %arg3[%c0_3, %c0_4] : memref<1x64xf32, #tpu.memory_space<vmem>>, vector<1x64xf32>
    %5 = vector.broadcast %4 : vector<1x64xf32> to vector<16x64xf32>
    %6 = arith.addf %3, %5 : vector<16x64xf32>
    %7 = arith.truncf %6 : vector<16x64xf32> to vector<16x64xbf16>
    %c0_5 = arith.constant 0 : index
    %c0_6 = arith.constant 0 : index
    %8 = vector.load %arg4[%c0_5, %c0_6] : memref<16x64xbf16, #tpu.memory_space<vmem>>, vector<16x64xbf16>
    tpu.vector_store %arg4[%c0_5, %c0_6], %7 {strides = array<i32>} : memref<16x64xbf16, #tpu.memory_space<vmem>>, vector<16x64xbf16>,
    return
  }
  func.func @transform_0(%arg0: i32) -> (i32, i32) {
    %c0_i32 = arith.constant 0 : i32
    %c0_i32_0 = arith.constant 0 : i32
    return %arg0, %c0_i32 : i32, i32
  }
  func.func @transform_1(%arg0: i32) -> (i32, i32) {
    %c0_i32 = arith.constant 0 : i32
    %c0_i32_0 = arith.constant 0 : i32
    %c0_i32_1 = arith.constant 0 : i32
    return %c0_i32, %c0_i32_0 : i32, i32
  }
  func.func @transform_2(%arg0: i32) -> (i32, i32) {
    %c0_i32 = arith.constant 0 : i32
    %c0_i32_0 = arith.constant 0 : i32
    %c0_i32_1 = arith.constant 0 : i32
    return %c0_i32, %c0_i32_0 : i32, i32
  }
  func.func @transform_3(%arg0: i32) -> (i32, i32) {
    %c0_i32 = arith.constant 0 : i32
    %c0_i32_0 = arith.constant 0 : i32
    return %arg0, %c0_i32 : i32, i32
  }
}

module attributes {stable_mosaic.version = 11 : i64} {
  func.func @_self_attn_block_kernel(%arg0: i32, %arg1: memref<1x8x32xf32, #tpu.memory_space<vmem>>, %arg2: memref<32x96xbf16, #tpu.memory_space<vmem>>, %arg3: memref<1x96xf32, #tpu.memory_space<vmem>>, %arg4: memref<32x32xbf16, #tpu.memory_space<vmem>>, %arg5: memref<1x32xf32, #tpu.memory_space<vmem>>, %arg6: memref<1x32xf32, #tpu.memory_space<vmem>>, %arg7: memref<1x32xf32, #tpu.memory_space<vmem>>, %arg8: memref<1x8x32xf32, #tpu.memory_space<vmem>>) attributes {dimension_semantics = [#tpu.dimension_semantics<parallel>], iteration_bounds = array<i64: 2>, scalar_prefetch = 0 : i64, scratch_operands = 0 : i64, tpu.core_type = #tpu.core_type<tc>, window_params = [{transform_indices = @transform_0, window_bounds = array<i64: 1, 8, 32>}, {pipeline_mode = #tpu.pipeline_mode<synchronous>, transform_indices = @transform_1, window_bounds = array<i64: 32, 96>}, {pipeline_mode = #tpu.pipeline_mode<synchronous>, transform_indices = @transform_2, window_bounds = array<i64: 1, 96>}, {pipeline_mode = #tpu.pipeline_mode<synchronous>, transform_indices = @transform_3, window_bounds = array<i64: 32, 32>}, {pipeline_mode = #tpu.pipeline_mode<synchronous>, transform_indices = @transform_4, window_bounds = array<i64: 1, 32>}, {pipeline_mode = #tpu.pipeline_mode<synchronous>, transform_indices = @transform_5, window_bounds = array<i64: 1, 32>}, {pipeline_mode = #tpu.pipeline_mode<synchronous>, transform_indices = @transform_6, window_bounds = array<i64: 1, 32>}, {transform_indices = @transform_7, window_bounds = array<i64: 1, 8, 32>}]} {
    %c0 = arith.constant 0 : index
    %c0_0 = arith.constant 0 : index
    %c0_1 = arith.constant 0 : index
    %0 = vector.load %arg1[%c0, %c0_0, %c0_1] : memref<1x8x32xf32, #tpu.memory_space<vmem>>, vector<1x8x32xf32>
    %1 = vector.shape_cast %0 : vector<1x8x32xf32> to vector<8x32xf32>
    %2 = arith.truncf %1 : vector<8x32xf32> to vector<8x32xbf16>
    %c0_2 = arith.constant 0 : index
    %c0_3 = arith.constant 0 : index
    %3 = vector.load %arg2[%c0_2, %c0_3] : memref<32x96xbf16, #tpu.memory_space<vmem>>, vector<32x96xbf16>
    %cst = arith.constant dense<0.000000e+00> : vector<8x96xf32>
    %4 = tpu.matmul %2, %3, %cst {dimension_numbers = #tpu.dot_dimension_numbers<[1], [0], [0], [1], [0, 0, 1, 1], [], []>} : vector<8x32xbf16>, vector<32x96xbf16>, vector<8x96xf32> -> vector<8x96xf32>
    %c0_4 = arith.constant 0 : index
    %c0_5 = arith.constant 0 : index
    %5 = vector.load %arg3[%c0_4, %c0_5] : memref<1x96xf32, #tpu.memory_space<vmem>>, vector<1x96xf32>
    %6 = vector.broadcast %5 : vector<1x96xf32> to vector<8x96xf32>
    %7 = arith.addf %4, %6 : vector<8x96xf32>
    %8 = vector.extract_strided_slice %7 {offsets = [0, 0], sizes = [8, 32], strides = [1, 1]} : vector<8x96xf32> to vector<8x32xf32>
    %cst_6 = arith.constant 0.353553385 : f32
    %9 = vector.broadcast %cst_6 : f32 to vector<8x32xf32>
    %10 = arith.mulf %8, %9 : vector<8x32xf32>
    %11 = vector.extract_strided_slice %7 {offsets = [0, 32], sizes = [8, 32], strides = [1, 1]} : vector<8x96xf32> to vector<8x32xf32>
    %12 = vector.extract_strided_slice %7 {offsets = [0, 64], sizes = [8, 32], strides = [1, 1]} : vector<8x96xf32> to vector<8x32xf32>
    %13 = tpu.iota {dimensions = array<i32: 0>} : vector<8x8xi32>
    %14 = tpu.iota {dimensions = array<i32: 1>} : vector<8x8xi32>
    %15 = arith.cmpi sge, %13, %14 : vector<8x8xi32>
    %cst_7 = arith.constant 0.000000e+00 : f32
    %cst_8 = arith.constant -1.000000e+09 : f32
    %16 = vector.broadcast %cst_7 : f32 to vector<8x8xf32>
    %17 = vector.broadcast %cst_8 : f32 to vector<8x8xf32>
    %18 = arith.select %15, %16, %17 : vector<8x8xi1>, vector<8x8xf32>
    %19 = vector.extract_strided_slice %10 {offsets = [0, 0], sizes = [8, 8], strides = [1, 1]} : vector<8x32xf32> to vector<8x8xf32>
    %20 = arith.truncf %19 : vector<8x8xf32> to vector<8x8xbf16>
    %21 = vector.extract_strided_slice %11 {offsets = [0, 0], sizes = [8, 8], strides = [1, 1]} : vector<8x32xf32> to vector<8x8xf32>
    %22 = arith.truncf %21 : vector<8x8xf32> to vector<8x8xbf16>
    %23 = vector.extract_strided_slice %12 {offsets = [0, 0], sizes = [8, 8], strides = [1, 1]} : vector<8x32xf32> to vector<8x8xf32>
    %24 = arith.truncf %23 : vector<8x8xf32> to vector<8x8xbf16>
    %cst_9 = arith.constant dense<0.000000e+00> : vector<8x8xf32>
    %25 = tpu.matmul %20, %22, %cst_9 {dimension_numbers = #tpu.dot_dimension_numbers<[1], [1], [0], [0], [0, 0, 1, 0], [], []>} : vector<8x8xbf16>, vector<8x8xbf16>, vector<8x8xf32> -> vector<8x8xf32>
    %26 = arith.addf %25, %18 : vector<8x8xf32>
    %cst_10 = arith.constant dense<0xFF800000> : vector<8xf32>
    %27 = vector.multi_reduction <maximumf>, %26, %cst_10 [1] : vector<8x8xf32> to vector<8xf32>
    %28 = vector.shape_cast %27 : vector<8xf32> to vector<8x1xf32>
    %29 = vector.broadcast %28 : vector<8x1xf32> to vector<8x8xf32>
    %30 = arith.subf %26, %29 : vector<8x8xf32>
    %31 = math.exp %30 : vector<8x8xf32>
    %cst_11 = arith.constant dense<0.000000e+00> : vector<8xf32>
    %32 = vector.multi_reduction <add>, %31, %cst_11 [1] : vector<8x8xf32> to vector<8xf32>
    %33 = vector.shape_cast %32 : vector<8xf32> to vector<8x1xf32>
    %34 = arith.truncf %31 : vector<8x8xf32> to vector<8x8xbf16>
    %cst_12 = arith.constant dense<0.000000e+00> : vector<8x8xf32>
    %35 = tpu.matmul %34, %24, %cst_12 {dimension_numbers = #tpu.dot_dimension_numbers<[1], [0], [0], [1], [0, 0, 1, 1], [], []>} : vector<8x8xbf16>, vector<8x8xbf16>, vector<8x8xf32> -> vector<8x8xf32>
    %36 = vector.broadcast %33 : vector<8x1xf32> to vector<8x8xf32>
    %37 = arith.divf %35, %36 : vector<8x8xf32>
    %38 = vector.extract_strided_slice %10 {offsets = [0, 8], sizes = [8, 8], strides = [1, 1]} : vector<8x32xf32> to vector<8x8xf32>
    %39 = arith.truncf %38 : vector<8x8xf32> to vector<8x8xbf16>
    %40 = vector.extract_strided_slice %11 {offsets = [0, 8], sizes = [8, 8], strides = [1, 1]} : vector<8x32xf32> to vector<8x8xf32>
    %41 = arith.truncf %40 : vector<8x8xf32> to vector<8x8xbf16>
    %42 = vector.extract_strided_slice %12 {offsets = [0, 8], sizes = [8, 8], strides = [1, 1]} : vector<8x32xf32> to vector<8x8xf32>
    %43 = arith.truncf %42 : vector<8x8xf32> to vector<8x8xbf16>
    %cst_13 = arith.constant dense<0.000000e+00> : vector<8x8xf32>
    %44 = tpu.matmul %39, %41, %cst_13 {dimension_numbers = #tpu.dot_dimension_numbers<[1], [1], [0], [0], [0, 0, 1, 0], [], []>} : vector<8x8xbf16>, vector<8x8xbf16>, vector<8x8xf32> -> vector<8x8xf32>
    %45 = arith.addf %44, %18 : vector<8x8xf32>
    %cst_14 = arith.constant dense<0xFF800000> : vector<8xf32>
    %46 = vector.multi_reduction <maximumf>, %45, %cst_14 [1] : vector<8x8xf32> to vector<8xf32>
    %47 = vector.shape_cast %46 : vector<8xf32> to vector<8x1xf32>
    %48 = vector.broadcast %47 : vector<8x1xf32> to vector<8x8xf32>
    %49 = arith.subf %45, %48 : vector<8x8xf32>
    %50 = math.exp %49 : vector<8x8xf32>
    %cst_15 = arith.constant dense<0.000000e+00> : vector<8xf32>
    %51 = vector.multi_reduction <add>, %50, %cst_15 [1] : vector<8x8xf32> to vector<8xf32>
    %52 = vector.shape_cast %51 : vector<8xf32> to vector<8x1xf32>
    %53 = arith.truncf %50 : vector<8x8xf32> to vector<8x8xbf16>
    %cst_16 = arith.constant dense<0.000000e+00> : vector<8x8xf32>
    %54 = tpu.matmul %53, %43, %cst_16 {dimension_numbers = #tpu.dot_dimension_numbers<[1], [0], [0], [1], [0, 0, 1, 1], [], []>} : vector<8x8xbf16>, vector<8x8xbf16>, vector<8x8xf32> -> vector<8x8xf32>
    %55 = vector.broadcast %52 : vector<8x1xf32> to vector<8x8xf32>
    %56 = arith.divf %54, %55 : vector<8x8xf32>
    %57 = vector.extract_strided_slice %10 {offsets = [0, 16], sizes = [8, 8], strides = [1, 1]} : vector<8x32xf32> to vector<8x8xf32>
    %58 = arith.truncf %57 : vector<8x8xf32> to vector<8x8xbf16>
    %59 = vector.extract_strided_slice %11 {offsets = [0, 16], sizes = [8, 8], strides = [1, 1]} : vector<8x32xf32> to vector<8x8xf32>
    %60 = arith.truncf %59 : vector<8x8xf32> to vector<8x8xbf16>
    %61 = vector.extract_strided_slice %12 {offsets = [0, 16], sizes = [8, 8], strides = [1, 1]} : vector<8x32xf32> to vector<8x8xf32>
    %62 = arith.truncf %61 : vector<8x8xf32> to vector<8x8xbf16>
    %cst_17 = arith.constant dense<0.000000e+00> : vector<8x8xf32>
    %63 = tpu.matmul %58, %60, %cst_17 {dimension_numbers = #tpu.dot_dimension_numbers<[1], [1], [0], [0], [0, 0, 1, 0], [], []>} : vector<8x8xbf16>, vector<8x8xbf16>, vector<8x8xf32> -> vector<8x8xf32>
    %64 = arith.addf %63, %18 : vector<8x8xf32>
    %cst_18 = arith.constant dense<0xFF800000> : vector<8xf32>
    %65 = vector.multi_reduction <maximumf>, %64, %cst_18 [1] : vector<8x8xf32> to vector<8xf32>
    %66 = vector.shape_cast %65 : vector<8xf32> to vector<8x1xf32>
    %67 = vector.broadcast %66 : vector<8x1xf32> to vector<8x8xf32>
    %68 = arith.subf %64, %67 : vector<8x8xf32>
    %69 = math.exp %68 : vector<8x8xf32>
    %cst_19 = arith.constant dense<0.000000e+00> : vector<8xf32>
    %70 = vector.multi_reduction <add>, %69, %cst_19 [1] : vector<8x8xf32> to vector<8xf32>
    %71 = vector.shape_cast %70 : vector<8xf32> to vector<8x1xf32>
    %72 = arith.truncf %69 : vector<8x8xf32> to vector<8x8xbf16>
    %cst_20 = arith.constant dense<0.000000e+00> : vector<8x8xf32>
    %73 = tpu.matmul %72, %62, %cst_20 {dimension_numbers = #tpu.dot_dimension_numbers<[1], [0], [0], [1], [0, 0, 1, 1], [], []>} : vector<8x8xbf16>, vector<8x8xbf16>, vector<8x8xf32> -> vector<8x8xf32>
    %74 = vector.broadcast %71 : vector<8x1xf32> to vector<8x8xf32>
    %75 = arith.divf %73, %74 : vector<8x8xf32>
    %76 = vector.extract_strided_slice %10 {offsets = [0, 24], sizes = [8, 8], strides = [1, 1]} : vector<8x32xf32> to vector<8x8xf32>
    %77 = arith.truncf %76 : vector<8x8xf32> to vector<8x8xbf16>
    %78 = vector.extract_strided_slice %11 {offsets = [0, 24], sizes = [8, 8], strides = [1, 1]} : vector<8x32xf32> to vector<8x8xf32>
    %79 = arith.truncf %78 : vector<8x8xf32> to vector<8x8xbf16>
    %80 = vector.extract_strided_slice %12 {offsets = [0, 24], sizes = [8, 8], strides = [1, 1]} : vector<8x32xf32> to vector<8x8xf32>
    %81 = arith.truncf %80 : vector<8x8xf32> to vector<8x8xbf16>
    %cst_21 = arith.constant dense<0.000000e+00> : vector<8x8xf32>
    %82 = tpu.matmul %77, %79, %cst_21 {dimension_numbers = #tpu.dot_dimension_numbers<[1], [1], [0], [0], [0, 0, 1, 0], [], []>} : vector<8x8xbf16>, vector<8x8xbf16>, vector<8x8xf32> -> vector<8x8xf32>
    %83 = arith.addf %82, %18 : vector<8x8xf32>
    %cst_22 = arith.constant dense<0xFF800000> : vector<8xf32>
    %84 = vector.multi_reduction <maximumf>, %83, %cst_22 [1] : vector<8x8xf32> to vector<8xf32>
    %85 = vector.shape_cast %84 : vector<8xf32> to vector<8x1xf32>
    %86 = vector.broadcast %85 : vector<8x1xf32> to vector<8x8xf32>
    %87 = arith.subf %83, %86 : vector<8x8xf32>
    %88 = math.exp %87 : vector<8x8xf32>
    %cst_23 = arith.constant dense<0.000000e+00> : vector<8xf32>
    %89 = vector.multi_reduction <add>, %88, %cst_23 [1] : vector<8x8xf32> to vector<8xf32>
    %90 = vector.shape_cast %89 : vector<8xf32> to vector<8x1xf32>
    %91 = arith.truncf %88 : vector<8x8xf32> to vector<8x8xbf16>
    %cst_24 = arith.constant dense<0.000000e+00> : vector<8x8xf32>
    %92 = tpu.matmul %91, %81, %cst_24 {dimension_numbers = #tpu.dot_dimension_numbers<[1], [0], [0], [1], [0, 0, 1, 1], [], []>} : vector<8x8xbf16>, vector<8x8xbf16>, vector<8x8xf32> -> vector<8x8xf32>
    %93 = vector.broadcast %90 : vector<8x1xf32> to vector<8x8xf32>
    %94 = arith.divf %92, %93 : vector<8x8xf32>
    %95 = tpu.concatenate %37, %56, %75, %94 in 1 : vector<8x8xf32>, vector<8x8xf32>, vector<8x8xf32>, vector<8x8xf32> -> vector<8x32xf32>
    %96 = arith.truncf %95 : vector<8x32xf32> to vector<8x32xbf16>
    %c0_25 = arith.constant 0 : index
    %c0_26 = arith.constant 0 : index
    %97 = vector.load %arg4[%c0_25, %c0_26] : memref<32x32xbf16, #tpu.memory_space<vmem>>, vector<32x32xbf16>
    %cst_27 = arith.constant dense<0.000000e+00> : vector<8x32xf32>
    %98 = tpu.matmul %96, %97, %cst_27 {dimension_numbers = #tpu.dot_dimension_numbers<[1], [0], [0], [1], [0, 0, 1, 1], [], []>} : vector<8x32xbf16>, vector<32x32xbf16>, vector<8x32xf32> -> vector<8x32xf32>
    %c0_28 = arith.constant 0 : index
    %c0_29 = arith.constant 0 : index
    %99 = vector.load %arg5[%c0_28, %c0_29] : memref<1x32xf32, #tpu.memory_space<vmem>>, vector<1x32xf32>
    %100 = vector.broadcast %99 : vector<1x32xf32> to vector<8x32xf32>
    %101 = arith.addf %98, %100 : vector<8x32xf32>
    %102 = arith.addf %1, %101 : vector<8x32xf32>
    %c0_30 = arith.constant 0 : index
    %c0_31 = arith.constant 0 : index
    %103 = vector.load %arg6[%c0_30, %c0_31] : memref<1x32xf32, #tpu.memory_space<vmem>>, vector<1x32xf32>
    %c0_32 = arith.constant 0 : index
    %c0_33 = arith.constant 0 : index
    %104 = vector.load %arg7[%c0_32, %c0_33] : memref<1x32xf32, #tpu.memory_space<vmem>>, vector<1x32xf32>
    %cst_34 = arith.constant dense<0.000000e+00> : vector<8xf32>
    %105 = vector.multi_reduction <add>, %102, %cst_34 [1] : vector<8x32xf32> to vector<8xf32>
    %106 = vector.shape_cast %105 : vector<8xf32> to vector<8x1xf32>
    %cst_35 = arith.constant 3.200000e+01 : f32
    %107 = vector.broadcast %cst_35 : f32 to vector<8x1xf32>
    %108 = arith.divf %106, %107 : vector<8x1xf32>
    %109 = vector.broadcast %108 : vector<8x1xf32> to vector<8x32xf32>
    %110 = arith.subf %102, %109 : vector<8x32xf32>
    %111 = arith.mulf %110, %110 : vector<8x32xf32>
    %cst_36 = arith.constant dense<0.000000e+00> : vector<8xf32>
    %112 = vector.multi_reduction <add>, %111, %cst_36 [1] : vector<8x32xf32> to vector<8xf32>
    %113 = vector.shape_cast %112 : vector<8xf32> to vector<8x1xf32>
    %cst_37 = arith.constant 3.200000e+01 : f32
    %114 = vector.broadcast %cst_37 : f32 to vector<8x1xf32>
    %115 = arith.divf %113, %114 : vector<8x1xf32>
    %116 = vector.broadcast %108 : vector<8x1xf32> to vector<8x32xf32>
    %117 = arith.subf %102, %116 : vector<8x32xf32>
    %cst_38 = arith.constant 9.99999974E-6 : f32
    %118 = vector.broadcast %cst_38 : f32 to vector<8x1xf32>
    %119 = arith.addf %115, %118 : vector<8x1xf32>
    %120 = math.rsqrt %119 : vector<8x1xf32>
    %121 = vector.broadcast %120 : vector<8x1xf32> to vector<8x32xf32>
    %122 = arith.mulf %117, %121 : vector<8x32xf32>
    %123 = vector.broadcast %103 : vector<1x32xf32> to vector<8x32xf32>
    %124 = arith.mulf %122, %123 : vector<8x32xf32>
    %125 = vector.broadcast %104 : vector<1x32xf32> to vector<8x32xf32>
    %126 = arith.addf %124, %125 : vector<8x32xf32>
    %c0_39 = arith.constant 0 : index
    %c0_40 = arith.constant 0 : index
    %c0_41 = arith.constant 0 : index
    %127 = vector.load %arg8[%c0_39, %c0_40, %c0_41] : memref<1x8x32xf32, #tpu.memory_space<vmem>>, vector<1x8x32xf32>
    %128 = vector.shape_cast %127 : vector<1x8x32xf32> to vector<8x32xf32>
    %129 = vector.shape_cast %126 : vector<8x32xf32> to vector<1x8x32xf32>
    tpu.vector_store %arg8[%c0_39, %c0_40, %c0_41], %129 {strides = array<i32>} : memref<1x8x32xf32, #tpu.memory_space<vmem>>, vector<1x8x32xf32>,
    return
  }
  func.func @transform_0(%arg0: i32) -> (i32, i32, i32) {
    %c0_i32 = arith.constant 0 : i32
    %c0_i32_0 = arith.constant 0 : i32
    %c0_i32_1 = arith.constant 0 : i32
    return %arg0, %c0_i32, %c0_i32_0 : i32, i32, i32
  }
  func.func @transform_1(%arg0: i32) -> (i32, i32) {
    %c0_i32 = arith.constant 0 : i32
    %c0_i32_0 = arith.constant 0 : i32
    %c0_i32_1 = arith.constant 0 : i32
    return %c0_i32, %c0_i32_0 : i32, i32
  }
  func.func @transform_2(%arg0: i32) -> (i32, i32) {
    %c0_i32 = arith.constant 0 : i32
    %c0_i32_0 = arith.constant 0 : i32
    %c0_i32_1 = arith.constant 0 : i32
    return %c0_i32, %c0_i32_0 : i32, i32
  }
  func.func @transform_3(%arg0: i32) -> (i32, i32) {
    %c0_i32 = arith.constant 0 : i32
    %c0_i32_0 = arith.constant 0 : i32
    %c0_i32_1 = arith.constant 0 : i32
    return %c0_i32, %c0_i32_0 : i32, i32
  }
  func.func @transform_4(%arg0: i32) -> (i32, i32) {
    %c0_i32 = arith.constant 0 : i32
    %c0_i32_0 = arith.constant 0 : i32
    %c0_i32_1 = arith.constant 0 : i32
    return %c0_i32, %c0_i32_0 : i32, i32
  }
  func.func @transform_5(%arg0: i32) -> (i32, i32) {
    %c0_i32 = arith.constant 0 : i32
    %c0_i32_0 = arith.constant 0 : i32
    %c0_i32_1 = arith.constant 0 : i32
    return %c0_i32, %c0_i32_0 : i32, i32
  }
  func.func @transform_6(%arg0: i32) -> (i32, i32) {
    %c0_i32 = arith.constant 0 : i32
    %c0_i32_0 = arith.constant 0 : i32
    %c0_i32_1 = arith.constant 0 : i32
    return %c0_i32, %c0_i32_0 : i32, i32
  }
  func.func @transform_7(%arg0: i32) -> (i32, i32, i32) {
    %c0_i32 = arith.constant 0 : i32
    %c0_i32_0 = arith.constant 0 : i32
    %c0_i32_1 = arith.constant 0 : i32
    return %arg0, %c0_i32, %c0_i32_0 : i32, i32, i32
  }
}

module attributes {stable_mosaic.version = 11 : i64} {
  func.func @_cross_attn_block_kernel(%arg0: i32, %arg1: i32, %arg2: memref<1x8x32xf32, #tpu.memory_space<vmem>>, %arg3: memref<1x8x64xbf16, #tpu.memory_space<vmem>>, %arg4: memref<32x32xbf16, #tpu.memory_space<vmem>>, %arg5: memref<1x32xf32, #tpu.memory_space<vmem>>, %arg6: memref<32x32xbf16, #tpu.memory_space<vmem>>, %arg7: memref<1x32xf32, #tpu.memory_space<vmem>>, %arg8: memref<1x32xf32, #tpu.memory_space<vmem>>, %arg9: memref<1x32xf32, #tpu.memory_space<vmem>>, %arg10: memref<1x8x32xf32, #tpu.memory_space<vmem>>) attributes {dimension_semantics = [#tpu.dimension_semantics<parallel>, #tpu.dimension_semantics<parallel>], iteration_bounds = array<i64: 2, 1>, scalar_prefetch = 0 : i64, scratch_operands = 0 : i64, tpu.core_type = #tpu.core_type<tc>, window_params = [{transform_indices = @transform_0, window_bounds = array<i64: 1, 8, 32>}, {transform_indices = @transform_1, window_bounds = array<i64: 1, 8, 64>}, {pipeline_mode = #tpu.pipeline_mode<synchronous>, transform_indices = @transform_2, window_bounds = array<i64: 32, 32>}, {pipeline_mode = #tpu.pipeline_mode<synchronous>, transform_indices = @transform_3, window_bounds = array<i64: 1, 32>}, {pipeline_mode = #tpu.pipeline_mode<synchronous>, transform_indices = @transform_4, window_bounds = array<i64: 32, 32>}, {pipeline_mode = #tpu.pipeline_mode<synchronous>, transform_indices = @transform_5, window_bounds = array<i64: 1, 32>}, {pipeline_mode = #tpu.pipeline_mode<synchronous>, transform_indices = @transform_6, window_bounds = array<i64: 1, 32>}, {pipeline_mode = #tpu.pipeline_mode<synchronous>, transform_indices = @transform_7, window_bounds = array<i64: 1, 32>}, {transform_indices = @transform_8, window_bounds = array<i64: 1, 8, 32>}]} {
    %c0 = arith.constant 0 : index
    %c0_0 = arith.constant 0 : index
    %c0_1 = arith.constant 0 : index
    %0 = vector.load %arg2[%c0, %c0_0, %c0_1] : memref<1x8x32xf32, #tpu.memory_space<vmem>>, vector<1x8x32xf32>
    %1 = vector.shape_cast %0 : vector<1x8x32xf32> to vector<8x32xf32>
    %c0_2 = arith.constant 0 : index
    %c0_3 = arith.constant 0 : index
    %c0_4 = arith.constant 0 : index
    %2 = vector.load %arg3[%c0_2, %c0_3, %c0_4] : memref<1x8x64xbf16, #tpu.memory_space<vmem>>, vector<1x8x64xbf16>
    %3 = vector.shape_cast %2 : vector<1x8x64xbf16> to vector<8x64xbf16>
    %4 = arith.extf %3 : vector<8x64xbf16> to vector<8x64xf32>
    %5 = arith.truncf %1 : vector<8x32xf32> to vector<8x32xbf16>
    %c0_5 = arith.constant 0 : index
    %c0_6 = arith.constant 0 : index
    %6 = vector.load %arg4[%c0_5, %c0_6] : memref<32x32xbf16, #tpu.memory_space<vmem>>, vector<32x32xbf16>
    %cst = arith.constant dense<0.000000e+00> : vector<8x32xf32>
    %7 = tpu.matmul %5, %6, %cst {dimension_numbers = #tpu.dot_dimension_numbers<[1], [0], [0], [1], [0, 0, 1, 1], [], []>} : vector<8x32xbf16>, vector<32x32xbf16>, vector<8x32xf32> -> vector<8x32xf32>
    %c0_7 = arith.constant 0 : index
    %c0_8 = arith.constant 0 : index
    %8 = vector.load %arg5[%c0_7, %c0_8] : memref<1x32xf32, #tpu.memory_space<vmem>>, vector<1x32xf32>
    %9 = vector.broadcast %8 : vector<1x32xf32> to vector<8x32xf32>
    %10 = arith.addf %7, %9 : vector<8x32xf32>
    %cst_9 = arith.constant 0.353553385 : f32
    %11 = vector.broadcast %cst_9 : f32 to vector<8x32xf32>
    %12 = arith.mulf %10, %11 : vector<8x32xf32>
    %13 = vector.extract_strided_slice %4 {offsets = [0, 0], sizes = [8, 32], strides = [1, 1]} : vector<8x64xf32> to vector<8x32xf32>
    %14 = vector.extract_strided_slice %4 {offsets = [0, 32], sizes = [8, 32], strides = [1, 1]} : vector<8x64xf32> to vector<8x32xf32>
    %15 = vector.extract_strided_slice %12 {offsets = [0, 0], sizes = [8, 8], strides = [1, 1]} : vector<8x32xf32> to vector<8x8xf32>
    %16 = arith.truncf %15 : vector<8x8xf32> to vector<8x8xbf16>
    %17 = vector.extract_strided_slice %13 {offsets = [0, 0], sizes = [8, 8], strides = [1, 1]} : vector<8x32xf32> to vector<8x8xf32>
    %18 = arith.truncf %17 : vector<8x8xf32> to vector<8x8xbf16>
    %19 = vector.extract_strided_slice %14 {offsets = [0, 0], sizes = [8, 8], strides = [1, 1]} : vector<8x32xf32> to vector<8x8xf32>
    %20 = arith.truncf %19 : vector<8x8xf32> to vector<8x8xbf16>
    %cst_10 = arith.constant dense<0.000000e+00> : vector<8x8xf32>
    %21 = tpu.matmul %16, %18, %cst_10 {dimension_numbers = #tpu.dot_dimension_numbers<[1], [1], [0], [0], [0, 0, 1, 0], [], []>} : vector<8x8xbf16>, vector<8x8xbf16>, vector<8x8xf32> -> vector<8x8xf32>
    %cst_11 = arith.constant dense<0xFF800000> : vector<8xf32>
    %22 = vector.multi_reduction <maximumf>, %21, %cst_11 [1] : vector<8x8xf32> to vector<8xf32>
    %23 = vector.shape_cast %22 : vector<8xf32> to vector<8x1xf32>
    %24 = vector.broadcast %23 : vector<8x1xf32> to vector<8x8xf32>
    %25 = arith.subf %21, %24 : vector<8x8xf32>
    %26 = math.exp %25 : vector<8x8xf32>
    %cst_12 = arith.constant dense<0.000000e+00> : vector<8xf32>
    %27 = vector.multi_reduction <add>, %26, %cst_12 [1] : vector<8x8xf32> to vector<8xf32>
    %28 = vector.shape_cast %27 : vector<8xf32> to vector<8x1xf32>
    %29 = arith.truncf %26 : vector<8x8xf32> to vector<8x8xbf16>
    %cst_13 = arith.constant dense<0.000000e+00> : vector<8x8xf32>
    %30 = tpu.matmul %29, %20, %cst_13 {dimension_numbers = #tpu.dot_dimension_numbers<[1], [0], [0], [1], [0, 0, 1, 1], [], []>} : vector<8x8xbf16>, vector<8x8xbf16>, vector<8x8xf32> -> vector<8x8xf32>
    %31 = vector.broadcast %28 : vector<8x1xf32> to vector<8x8xf32>
    %32 = arith.divf %30, %31 : vector<8x8xf32>
    %33 = vector.extract_strided_slice %12 {offsets = [0, 8], sizes = [8, 8], strides = [1, 1]} : vector<8x32xf32> to vector<8x8xf32>
    %34 = arith.truncf %33 : vector<8x8xf32> to vector<8x8xbf16>
    %35 = vector.extract_strided_slice %13 {offsets = [0, 8], sizes = [8, 8], strides = [1, 1]} : vector<8x32xf32> to vector<8x8xf32>
    %36 = arith.truncf %35 : vector<8x8xf32> to vector<8x8xbf16>
    %37 = vector.extract_strided_slice %14 {offsets = [0, 8], sizes = [8, 8], strides = [1, 1]} : vector<8x32xf32> to vector<8x8xf32>
    %38 = arith.truncf %37 : vector<8x8xf32> to vector<8x8xbf16>
    %cst_14 = arith.constant dense<0.000000e+00> : vector<8x8xf32>
    %39 = tpu.matmul %34, %36, %cst_14 {dimension_numbers = #tpu.dot_dimension_numbers<[1], [1], [0], [0], [0, 0, 1, 0], [], []>} : vector<8x8xbf16>, vector<8x8xbf16>, vector<8x8xf32> -> vector<8x8xf32>
    %cst_15 = arith.constant dense<0xFF800000> : vector<8xf32>
    %40 = vector.multi_reduction <maximumf>, %39, %cst_15 [1] : vector<8x8xf32> to vector<8xf32>
    %41 = vector.shape_cast %40 : vector<8xf32> to vector<8x1xf32>
    %42 = vector.broadcast %41 : vector<8x1xf32> to vector<8x8xf32>
    %43 = arith.subf %39, %42 : vector<8x8xf32>
    %44 = math.exp %43 : vector<8x8xf32>
    %cst_16 = arith.constant dense<0.000000e+00> : vector<8xf32>
    %45 = vector.multi_reduction <add>, %44, %cst_16 [1] : vector<8x8xf32> to vector<8xf32>
    %46 = vector.shape_cast %45 : vector<8xf32> to vector<8x1xf32>
    %47 = arith.truncf %44 : vector<8x8xf32> to vector<8x8xbf16>
    %cst_17 = arith.constant dense<0.000000e+00> : vector<8x8xf32>
    %48 = tpu.matmul %47, %38, %cst_17 {dimension_numbers = #tpu.dot_dimension_numbers<[1], [0], [0], [1], [0, 0, 1, 1], [], []>} : vector<8x8xbf16>, vector<8x8xbf16>, vector<8x8xf32> -> vector<8x8xf32>
    %49 = vector.broadcast %46 : vector<8x1xf32> to vector<8x8xf32>
    %50 = arith.divf %48, %49 : vector<8x8xf32>
    %51 = vector.extract_strided_slice %12 {offsets = [0, 16], sizes = [8, 8], strides = [1, 1]} : vector<8x32xf32> to vector<8x8xf32>
    %52 = arith.truncf %51 : vector<8x8xf32> to vector<8x8xbf16>
    %53 = vector.extract_strided_slice %13 {offsets = [0, 16], sizes = [8, 8], strides = [1, 1]} : vector<8x32xf32> to vector<8x8xf32>
    %54 = arith.truncf %53 : vector<8x8xf32> to vector<8x8xbf16>
    %55 = vector.extract_strided_slice %14 {offsets = [0, 16], sizes = [8, 8], strides = [1, 1]} : vector<8x32xf32> to vector<8x8xf32>
    %56 = arith.truncf %55 : vector<8x8xf32> to vector<8x8xbf16>
    %cst_18 = arith.constant dense<0.000000e+00> : vector<8x8xf32>
    %57 = tpu.matmul %52, %54, %cst_18 {dimension_numbers = #tpu.dot_dimension_numbers<[1], [1], [0], [0], [0, 0, 1, 0], [], []>} : vector<8x8xbf16>, vector<8x8xbf16>, vector<8x8xf32> -> vector<8x8xf32>
    %cst_19 = arith.constant dense<0xFF800000> : vector<8xf32>
    %58 = vector.multi_reduction <maximumf>, %57, %cst_19 [1] : vector<8x8xf32> to vector<8xf32>
    %59 = vector.shape_cast %58 : vector<8xf32> to vector<8x1xf32>
    %60 = vector.broadcast %59 : vector<8x1xf32> to vector<8x8xf32>
    %61 = arith.subf %57, %60 : vector<8x8xf32>
    %62 = math.exp %61 : vector<8x8xf32>
    %cst_20 = arith.constant dense<0.000000e+00> : vector<8xf32>
    %63 = vector.multi_reduction <add>, %62, %cst_20 [1] : vector<8x8xf32> to vector<8xf32>
    %64 = vector.shape_cast %63 : vector<8xf32> to vector<8x1xf32>
    %65 = arith.truncf %62 : vector<8x8xf32> to vector<8x8xbf16>
    %cst_21 = arith.constant dense<0.000000e+00> : vector<8x8xf32>
    %66 = tpu.matmul %65, %56, %cst_21 {dimension_numbers = #tpu.dot_dimension_numbers<[1], [0], [0], [1], [0, 0, 1, 1], [], []>} : vector<8x8xbf16>, vector<8x8xbf16>, vector<8x8xf32> -> vector<8x8xf32>
    %67 = vector.broadcast %64 : vector<8x1xf32> to vector<8x8xf32>
    %68 = arith.divf %66, %67 : vector<8x8xf32>
    %69 = vector.extract_strided_slice %12 {offsets = [0, 24], sizes = [8, 8], strides = [1, 1]} : vector<8x32xf32> to vector<8x8xf32>
    %70 = arith.truncf %69 : vector<8x8xf32> to vector<8x8xbf16>
    %71 = vector.extract_strided_slice %13 {offsets = [0, 24], sizes = [8, 8], strides = [1, 1]} : vector<8x32xf32> to vector<8x8xf32>
    %72 = arith.truncf %71 : vector<8x8xf32> to vector<8x8xbf16>
    %73 = vector.extract_strided_slice %14 {offsets = [0, 24], sizes = [8, 8], strides = [1, 1]} : vector<8x32xf32> to vector<8x8xf32>
    %74 = arith.truncf %73 : vector<8x8xf32> to vector<8x8xbf16>
    %cst_22 = arith.constant dense<0.000000e+00> : vector<8x8xf32>
    %75 = tpu.matmul %70, %72, %cst_22 {dimension_numbers = #tpu.dot_dimension_numbers<[1], [1], [0], [0], [0, 0, 1, 0], [], []>} : vector<8x8xbf16>, vector<8x8xbf16>, vector<8x8xf32> -> vector<8x8xf32>
    %cst_23 = arith.constant dense<0xFF800000> : vector<8xf32>
    %76 = vector.multi_reduction <maximumf>, %75, %cst_23 [1] : vector<8x8xf32> to vector<8xf32>
    %77 = vector.shape_cast %76 : vector<8xf32> to vector<8x1xf32>
    %78 = vector.broadcast %77 : vector<8x1xf32> to vector<8x8xf32>
    %79 = arith.subf %75, %78 : vector<8x8xf32>
    %80 = math.exp %79 : vector<8x8xf32>
    %cst_24 = arith.constant dense<0.000000e+00> : vector<8xf32>
    %81 = vector.multi_reduction <add>, %80, %cst_24 [1] : vector<8x8xf32> to vector<8xf32>
    %82 = vector.shape_cast %81 : vector<8xf32> to vector<8x1xf32>
    %83 = arith.truncf %80 : vector<8x8xf32> to vector<8x8xbf16>
    %cst_25 = arith.constant dense<0.000000e+00> : vector<8x8xf32>
    %84 = tpu.matmul %83, %74, %cst_25 {dimension_numbers = #tpu.dot_dimension_numbers<[1], [0], [0], [1], [0, 0, 1, 1], [], []>} : vector<8x8xbf16>, vector<8x8xbf16>, vector<8x8xf32> -> vector<8x8xf32>
    %85 = vector.broadcast %82 : vector<8x1xf32> to vector<8x8xf32>
    %86 = arith.divf %84, %85 : vector<8x8xf32>
    %87 = tpu.concatenate %32, %50, %68, %86 in 1 : vector<8x8xf32>, vector<8x8xf32>, vector<8x8xf32>, vector<8x8xf32> -> vector<8x32xf32>
    %88 = arith.truncf %87 : vector<8x32xf32> to vector<8x32xbf16>
    %c0_26 = arith.constant 0 : index
    %c0_27 = arith.constant 0 : index
    %89 = vector.load %arg6[%c0_26, %c0_27] : memref<32x32xbf16, #tpu.memory_space<vmem>>, vector<32x32xbf16>
    %cst_28 = arith.constant dense<0.000000e+00> : vector<8x32xf32>
    %90 = tpu.matmul %88, %89, %cst_28 {dimension_numbers = #tpu.dot_dimension_numbers<[1], [0], [0], [1], [0, 0, 1, 1], [], []>} : vector<8x32xbf16>, vector<32x32xbf16>, vector<8x32xf32> -> vector<8x32xf32>
    %c0_29 = arith.constant 0 : index
    %c0_30 = arith.constant 0 : index
    %91 = vector.load %arg7[%c0_29, %c0_30] : memref<1x32xf32, #tpu.memory_space<vmem>>, vector<1x32xf32>
    %92 = vector.broadcast %91 : vector<1x32xf32> to vector<8x32xf32>
    %93 = arith.addf %90, %92 : vector<8x32xf32>
    %94 = arith.addf %1, %93 : vector<8x32xf32>
    %c0_31 = arith.constant 0 : index
    %c0_32 = arith.constant 0 : index
    %95 = vector.load %arg8[%c0_31, %c0_32] : memref<1x32xf32, #tpu.memory_space<vmem>>, vector<1x32xf32>
    %c0_33 = arith.constant 0 : index
    %c0_34 = arith.constant 0 : index
    %96 = vector.load %arg9[%c0_33, %c0_34] : memref<1x32xf32, #tpu.memory_space<vmem>>, vector<1x32xf32>
    %cst_35 = arith.constant dense<0.000000e+00> : vector<8xf32>
    %97 = vector.multi_reduction <add>, %94, %cst_35 [1] : vector<8x32xf32> to vector<8xf32>
    %98 = vector.shape_cast %97 : vector<8xf32> to vector<8x1xf32>
    %cst_36 = arith.constant 3.200000e+01 : f32
    %99 = vector.broadcast %cst_36 : f32 to vector<8x1xf32>
    %100 = arith.divf %98, %99 : vector<8x1xf32>
    %101 = vector.broadcast %100 : vector<8x1xf32> to vector<8x32xf32>
    %102 = arith.subf %94, %101 : vector<8x32xf32>
    %103 = arith.mulf %102, %102 : vector<8x32xf32>
    %cst_37 = arith.constant dense<0.000000e+00> : vector<8xf32>
    %104 = vector.multi_reduction <add>, %103, %cst_37 [1] : vector<8x32xf32> to vector<8xf32>
    %105 = vector.shape_cast %104 : vector<8xf32> to vector<8x1xf32>
    %cst_38 = arith.constant 3.200000e+01 : f32
    %106 = vector.broadcast %cst_38 : f32 to vector<8x1xf32>
    %107 = arith.divf %105, %106 : vector<8x1xf32>
    %108 = vector.broadcast %100 : vector<8x1xf32> to vector<8x32xf32>
    %109 = arith.subf %94, %108 : vector<8x32xf32>
    %cst_39 = arith.constant 9.99999974E-6 : f32
    %110 = vector.broadcast %cst_39 : f32 to vector<8x1xf32>
    %111 = arith.addf %107, %110 : vector<8x1xf32>
    %112 = math.rsqrt %111 : vector<8x1xf32>
    %113 = vector.broadcast %112 : vector<8x1xf32> to vector<8x32xf32>
    %114 = arith.mulf %109, %113 : vector<8x32xf32>
    %115 = vector.broadcast %95 : vector<1x32xf32> to vector<8x32xf32>
    %116 = arith.mulf %114, %115 : vector<8x32xf32>
    %117 = vector.broadcast %96 : vector<1x32xf32> to vector<8x32xf32>
    %118 = arith.addf %116, %117 : vector<8x32xf32>
    %c0_40 = arith.constant 0 : index
    %c0_41 = arith.constant 0 : index
    %c0_42 = arith.constant 0 : index
    %119 = vector.load %arg10[%c0_40, %c0_41, %c0_42] : memref<1x8x32xf32, #tpu.memory_space<vmem>>, vector<1x8x32xf32>
    %120 = vector.shape_cast %119 : vector<1x8x32xf32> to vector<8x32xf32>
    %121 = vector.shape_cast %118 : vector<8x32xf32> to vector<1x8x32xf32>
    tpu.vector_store %arg10[%c0_40, %c0_41, %c0_42], %121 {strides = array<i32>} : memref<1x8x32xf32, #tpu.memory_space<vmem>>, vector<1x8x32xf32>,
    return
  }
  func.func @transform_0(%arg0: i32, %arg1: i32) -> (i32, i32, i32) {
    %c0_i32 = arith.constant 0 : i32
    %c0_i32_0 = arith.constant 0 : i32
    return %arg0, %arg1, %c0_i32 : i32, i32, i32
  }
  func.func @transform_1(%arg0: i32, %arg1: i32) -> (i32, i32, i32) {
    %c0_i32 = arith.constant 0 : i32
    %c0_i32_0 = arith.constant 0 : i32
    %c0_i32_1 = arith.constant 0 : i32
    return %arg0, %c0_i32, %c0_i32_0 : i32, i32, i32
  }
  func.func @transform_2(%arg0: i32, %arg1: i32) -> (i32, i32) {
    %c0_i32 = arith.constant 0 : i32
    %c0_i32_0 = arith.constant 0 : i32
    %c0_i32_1 = arith.constant 0 : i32
    return %c0_i32, %c0_i32_0 : i32, i32
  }
  func.func @transform_3(%arg0: i32, %arg1: i32) -> (i32, i32) {
    %c0_i32 = arith.constant 0 : i32
    %c0_i32_0 = arith.constant 0 : i32
    %c0_i32_1 = arith.constant 0 : i32
    return %c0_i32, %c0_i32_0 : i32, i32
  }
  func.func @transform_4(%arg0: i32, %arg1: i32) -> (i32, i32) {
    %c0_i32 = arith.constant 0 : i32
    %c0_i32_0 = arith.constant 0 : i32
    %c0_i32_1 = arith.constant 0 : i32
    return %c0_i32, %c0_i32_0 : i32, i32
  }
  func.func @transform_5(%arg0: i32, %arg1: i32) -> (i32, i32) {
    %c0_i32 = arith.constant 0 : i32
    %c0_i32_0 = arith.constant 0 : i32
    %c0_i32_1 = arith.constant 0 : i32
    return %c0_i32, %c0_i32_0 : i32, i32
  }
  func.func @transform_6(%arg0: i32, %arg1: i32) -> (i32, i32) {
    %c0_i32 = arith.constant 0 : i32
    %c0_i32_0 = arith.constant 0 : i32
    %c0_i32_1 = arith.constant 0 : i32
    return %c0_i32, %c0_i32_0 : i32, i32
  }
  func.func @transform_7(%arg0: i32, %arg1: i32) -> (i32, i32) {
    %c0_i32 = arith.constant 0 : i32
    %c0_i32_0 = arith.constant 0 : i32
    %c0_i32_1 = arith.constant 0 : i32
    return %c0_i32, %c0_i32_0 : i32, i32
  }
  func.func @transform_8(%arg0: i32, %arg1: i32) -> (i32, i32, i32) {
    %c0_i32 = arith.constant 0 : i32
    %c0_i32_0 = arith.constant 0 : i32
    return %arg0, %arg1, %c0_i32 : i32, i32, i32
  }
}

module attributes {stable_mosaic.version = 11 : i64} {
  func.func @_ffn_ln_kernel(%arg0: i32, %arg1: memref<16x32xf32, #tpu.memory_space<vmem>>, %arg2: memref<32x64xbf16, #tpu.memory_space<vmem>>, %arg3: memref<1x64xf32, #tpu.memory_space<vmem>>, %arg4: memref<64x32xbf16, #tpu.memory_space<vmem>>, %arg5: memref<1x32xf32, #tpu.memory_space<vmem>>, %arg6: memref<1x32xf32, #tpu.memory_space<vmem>>, %arg7: memref<1x32xf32, #tpu.memory_space<vmem>>, %arg8: memref<16x32xf32, #tpu.memory_space<vmem>>) attributes {dimension_semantics = [#tpu.dimension_semantics<parallel>], iteration_bounds = array<i64: 1>, scalar_prefetch = 0 : i64, scratch_operands = 0 : i64, tpu.core_type = #tpu.core_type<tc>, window_params = [{transform_indices = @transform_0, window_bounds = array<i64: 16, 32>}, {pipeline_mode = #tpu.pipeline_mode<synchronous>, transform_indices = @transform_1, window_bounds = array<i64: 32, 64>}, {pipeline_mode = #tpu.pipeline_mode<synchronous>, transform_indices = @transform_2, window_bounds = array<i64: 1, 64>}, {pipeline_mode = #tpu.pipeline_mode<synchronous>, transform_indices = @transform_3, window_bounds = array<i64: 64, 32>}, {pipeline_mode = #tpu.pipeline_mode<synchronous>, transform_indices = @transform_4, window_bounds = array<i64: 1, 32>}, {pipeline_mode = #tpu.pipeline_mode<synchronous>, transform_indices = @transform_5, window_bounds = array<i64: 1, 32>}, {pipeline_mode = #tpu.pipeline_mode<synchronous>, transform_indices = @transform_6, window_bounds = array<i64: 1, 32>}, {transform_indices = @transform_7, window_bounds = array<i64: 16, 32>}]} {
    %c0 = arith.constant 0 : index
    %c0_0 = arith.constant 0 : index
    %0 = vector.load %arg1[%c0, %c0_0] : memref<16x32xf32, #tpu.memory_space<vmem>>, vector<16x32xf32>
    %1 = arith.truncf %0 : vector<16x32xf32> to vector<16x32xbf16>
    %c0_1 = arith.constant 0 : index
    %c0_2 = arith.constant 0 : index
    %2 = vector.load %arg2[%c0_1, %c0_2] : memref<32x64xbf16, #tpu.memory_space<vmem>>, vector<32x64xbf16>
    %cst = arith.constant dense<0.000000e+00> : vector<16x64xf32>
    %3 = tpu.matmul %1, %2, %cst {dimension_numbers = #tpu.dot_dimension_numbers<[1], [0], [0], [1], [0, 0, 1, 1], [], []>} : vector<16x32xbf16>, vector<32x64xbf16>, vector<16x64xf32> -> vector<16x64xf32>
    %c0_3 = arith.constant 0 : index
    %c0_4 = arith.constant 0 : index
    %4 = vector.load %arg3[%c0_3, %c0_4] : memref<1x64xf32, #tpu.memory_space<vmem>>, vector<1x64xf32>
    %5 = vector.broadcast %4 : vector<1x64xf32> to vector<16x64xf32>
    %6 = arith.addf %3, %5 : vector<16x64xf32>
    %cst_5 = arith.constant 0.000000e+00 : f32
    %7 = vector.broadcast %cst_5 : f32 to vector<16x64xf32>
    %8 = arith.maximumf %6, %7 : vector<16x64xf32>
    %9 = arith.truncf %8 : vector<16x64xf32> to vector<16x64xbf16>
    %c0_6 = arith.constant 0 : index
    %c0_7 = arith.constant 0 : index
    %10 = vector.load %arg4[%c0_6, %c0_7] : memref<64x32xbf16, #tpu.memory_space<vmem>>, vector<64x32xbf16>
    %cst_8 = arith.constant dense<0.000000e+00> : vector<16x32xf32>
    %11 = tpu.matmul %9, %10, %cst_8 {dimension_numbers = #tpu.dot_dimension_numbers<[1], [0], [0], [1], [0, 0, 1, 1], [], []>} : vector<16x64xbf16>, vector<64x32xbf16>, vector<16x32xf32> -> vector<16x32xf32>
    %c0_9 = arith.constant 0 : index
    %c0_10 = arith.constant 0 : index
    %12 = vector.load %arg5[%c0_9, %c0_10] : memref<1x32xf32, #tpu.memory_space<vmem>>, vector<1x32xf32>
    %13 = vector.broadcast %12 : vector<1x32xf32> to vector<16x32xf32>
    %14 = arith.addf %11, %13 : vector<16x32xf32>
    %15 = arith.addf %0, %14 : vector<16x32xf32>
    %c0_11 = arith.constant 0 : index
    %c0_12 = arith.constant 0 : index
    %16 = vector.load %arg6[%c0_11, %c0_12] : memref<1x32xf32, #tpu.memory_space<vmem>>, vector<1x32xf32>
    %c0_13 = arith.constant 0 : index
    %c0_14 = arith.constant 0 : index
    %17 = vector.load %arg7[%c0_13, %c0_14] : memref<1x32xf32, #tpu.memory_space<vmem>>, vector<1x32xf32>
    %cst_15 = arith.constant dense<0.000000e+00> : vector<16xf32>
    %18 = vector.multi_reduction <add>, %15, %cst_15 [1] : vector<16x32xf32> to vector<16xf32>
    %19 = vector.shape_cast %18 : vector<16xf32> to vector<16x1xf32>
    %cst_16 = arith.constant 3.200000e+01 : f32
    %20 = vector.broadcast %cst_16 : f32 to vector<16x1xf32>
    %21 = arith.divf %19, %20 : vector<16x1xf32>
    %22 = vector.broadcast %21 : vector<16x1xf32> to vector<16x32xf32>
    %23 = arith.subf %15, %22 : vector<16x32xf32>
    %24 = arith.mulf %23, %23 : vector<16x32xf32>
    %cst_17 = arith.constant dense<0.000000e+00> : vector<16xf32>
    %25 = vector.multi_reduction <add>, %24, %cst_17 [1] : vector<16x32xf32> to vector<16xf32>
    %26 = vector.shape_cast %25 : vector<16xf32> to vector<16x1xf32>
    %cst_18 = arith.constant 3.200000e+01 : f32
    %27 = vector.broadcast %cst_18 : f32 to vector<16x1xf32>
    %28 = arith.divf %26, %27 : vector<16x1xf32>
    %29 = vector.broadcast %21 : vector<16x1xf32> to vector<16x32xf32>
    %30 = arith.subf %15, %29 : vector<16x32xf32>
    %cst_19 = arith.constant 9.99999974E-6 : f32
    %31 = vector.broadcast %cst_19 : f32 to vector<16x1xf32>
    %32 = arith.addf %28, %31 : vector<16x1xf32>
    %33 = math.rsqrt %32 : vector<16x1xf32>
    %34 = vector.broadcast %33 : vector<16x1xf32> to vector<16x32xf32>
    %35 = arith.mulf %30, %34 : vector<16x32xf32>
    %36 = vector.broadcast %16 : vector<1x32xf32> to vector<16x32xf32>
    %37 = arith.mulf %35, %36 : vector<16x32xf32>
    %38 = vector.broadcast %17 : vector<1x32xf32> to vector<16x32xf32>
    %39 = arith.addf %37, %38 : vector<16x32xf32>
    %c0_20 = arith.constant 0 : index
    %c0_21 = arith.constant 0 : index
    %40 = vector.load %arg8[%c0_20, %c0_21] : memref<16x32xf32, #tpu.memory_space<vmem>>, vector<16x32xf32>
    tpu.vector_store %arg8[%c0_20, %c0_21], %39 {strides = array<i32>} : memref<16x32xf32, #tpu.memory_space<vmem>>, vector<16x32xf32>,
    return
  }
  func.func @transform_0(%arg0: i32) -> (i32, i32) {
    %c0_i32 = arith.constant 0 : i32
    %c0_i32_0 = arith.constant 0 : i32
    return %arg0, %c0_i32 : i32, i32
  }
  func.func @transform_1(%arg0: i32) -> (i32, i32) {
    %c0_i32 = arith.constant 0 : i32
    %c0_i32_0 = arith.constant 0 : i32
    %c0_i32_1 = arith.constant 0 : i32
    return %c0_i32, %c0_i32_0 : i32, i32
  }
  func.func @transform_2(%arg0: i32) -> (i32, i32) {
    %c0_i32 = arith.constant 0 : i32
    %c0_i32_0 = arith.constant 0 : i32
    %c0_i32_1 = arith.constant 0 : i32
    return %c0_i32, %c0_i32_0 : i32, i32
  }
  func.func @transform_3(%arg0: i32) -> (i32, i32) {
    %c0_i32 = arith.constant 0 : i32
    %c0_i32_0 = arith.constant 0 : i32
    %c0_i32_1 = arith.constant 0 : i32
    return %c0_i32, %c0_i32_0 : i32, i32
  }
  func.func @transform_4(%arg0: i32) -> (i32, i32) {
    %c0_i32 = arith.constant 0 : i32
    %c0_i32_0 = arith.constant 0 : i32
    %c0_i32_1 = arith.constant 0 : i32
    return %c0_i32, %c0_i32_0 : i32, i32
  }
  func.func @transform_5(%arg0: i32) -> (i32, i32) {
    %c0_i32 = arith.constant 0 : i32
    %c0_i32_0 = arith.constant 0 : i32
    %c0_i32_1 = arith.constant 0 : i32
    return %c0_i32, %c0_i32_0 : i32, i32
  }
  func.func @transform_6(%arg0: i32) -> (i32, i32) {
    %c0_i32 = arith.constant 0 : i32
    %c0_i32_0 = arith.constant 0 : i32
    %c0_i32_1 = arith.constant 0 : i32
    return %c0_i32, %c0_i32_0 : i32, i32
  }
  func.func @transform_7(%arg0: i32) -> (i32, i32) {
    %c0_i32 = arith.constant 0 : i32
    %c0_i32_0 = arith.constant 0 : i32
    return %arg0, %c0_i32 : i32, i32
  }
}

module attributes {stable_mosaic.version = 11 : i64} {
  func.func @_ffn_ln_kernel(%arg0: i32, %arg1: memref<16x32xf32, #tpu.memory_space<vmem>>, %arg2: memref<32x64xbf16, #tpu.memory_space<vmem>>, %arg3: memref<1x64xf32, #tpu.memory_space<vmem>>, %arg4: memref<64x32xbf16, #tpu.memory_space<vmem>>, %arg5: memref<1x32xf32, #tpu.memory_space<vmem>>, %arg6: memref<1x32xf32, #tpu.memory_space<vmem>>, %arg7: memref<1x32xf32, #tpu.memory_space<vmem>>, %arg8: memref<16x32xf32, #tpu.memory_space<vmem>>) attributes {dimension_semantics = [#tpu.dimension_semantics<parallel>], iteration_bounds = array<i64: 1>, scalar_prefetch = 0 : i64, scratch_operands = 0 : i64, tpu.core_type = #tpu.core_type<tc>, window_params = [{transform_indices = @transform_0, window_bounds = array<i64: 16, 32>}, {pipeline_mode = #tpu.pipeline_mode<synchronous>, transform_indices = @transform_1, window_bounds = array<i64: 32, 64>}, {pipeline_mode = #tpu.pipeline_mode<synchronous>, transform_indices = @transform_2, window_bounds = array<i64: 1, 64>}, {pipeline_mode = #tpu.pipeline_mode<synchronous>, transform_indices = @transform_3, window_bounds = array<i64: 64, 32>}, {pipeline_mode = #tpu.pipeline_mode<synchronous>, transform_indices = @transform_4, window_bounds = array<i64: 1, 32>}, {pipeline_mode = #tpu.pipeline_mode<synchronous>, transform_indices = @transform_5, window_bounds = array<i64: 1, 32>}, {pipeline_mode = #tpu.pipeline_mode<synchronous>, transform_indices = @transform_6, window_bounds = array<i64: 1, 32>}, {transform_indices = @transform_7, window_bounds = array<i64: 16, 32>}]} {
    %c0 = arith.constant 0 : index
    %c0_0 = arith.constant 0 : index
    %0 = vector.load %arg1[%c0, %c0_0] : memref<16x32xf32, #tpu.memory_space<vmem>>, vector<16x32xf32>
    %1 = arith.truncf %0 : vector<16x32xf32> to vector<16x32xbf16>
    %c0_1 = arith.constant 0 : index
    %c0_2 = arith.constant 0 : index
    %2 = vector.load %arg2[%c0_1, %c0_2] : memref<32x64xbf16, #tpu.memory_space<vmem>>, vector<32x64xbf16>
    %cst = arith.constant dense<0.000000e+00> : vector<16x64xf32>
    %3 = tpu.matmul %1, %2, %cst {dimension_numbers = #tpu.dot_dimension_numbers<[1], [0], [0], [1], [0, 0, 1, 1], [], []>} : vector<16x32xbf16>, vector<32x64xbf16>, vector<16x64xf32> -> vector<16x64xf32>
    %c0_3 = arith.constant 0 : index
    %c0_4 = arith.constant 0 : index
    %4 = vector.load %arg3[%c0_3, %c0_4] : memref<1x64xf32, #tpu.memory_space<vmem>>, vector<1x64xf32>
    %5 = vector.broadcast %4 : vector<1x64xf32> to vector<16x64xf32>
    %6 = arith.addf %3, %5 : vector<16x64xf32>
    %cst_5 = arith.constant 0.000000e+00 : f32
    %7 = vector.broadcast %cst_5 : f32 to vector<16x64xf32>
    %8 = arith.maximumf %6, %7 : vector<16x64xf32>
    %9 = arith.truncf %8 : vector<16x64xf32> to vector<16x64xbf16>
    %c0_6 = arith.constant 0 : index
    %c0_7 = arith.constant 0 : index
    %10 = vector.load %arg4[%c0_6, %c0_7] : memref<64x32xbf16, #tpu.memory_space<vmem>>, vector<64x32xbf16>
    %cst_8 = arith.constant dense<0.000000e+00> : vector<16x32xf32>
    %11 = tpu.matmul %9, %10, %cst_8 {dimension_numbers = #tpu.dot_dimension_numbers<[1], [0], [0], [1], [0, 0, 1, 1], [], []>} : vector<16x64xbf16>, vector<64x32xbf16>, vector<16x32xf32> -> vector<16x32xf32>
    %c0_9 = arith.constant 0 : index
    %c0_10 = arith.constant 0 : index
    %12 = vector.load %arg5[%c0_9, %c0_10] : memref<1x32xf32, #tpu.memory_space<vmem>>, vector<1x32xf32>
    %13 = vector.broadcast %12 : vector<1x32xf32> to vector<16x32xf32>
    %14 = arith.addf %11, %13 : vector<16x32xf32>
    %15 = arith.addf %0, %14 : vector<16x32xf32>
    %c0_11 = arith.constant 0 : index
    %c0_12 = arith.constant 0 : index
    %16 = vector.load %arg6[%c0_11, %c0_12] : memref<1x32xf32, #tpu.memory_space<vmem>>, vector<1x32xf32>
    %c0_13 = arith.constant 0 : index
    %c0_14 = arith.constant 0 : index
    %17 = vector.load %arg7[%c0_13, %c0_14] : memref<1x32xf32, #tpu.memory_space<vmem>>, vector<1x32xf32>
    %cst_15 = arith.constant dense<0.000000e+00> : vector<16xf32>
    %18 = vector.multi_reduction <add>, %15, %cst_15 [1] : vector<16x32xf32> to vector<16xf32>
    %19 = vector.shape_cast %18 : vector<16xf32> to vector<16x1xf32>
    %cst_16 = arith.constant 3.200000e+01 : f32
    %20 = vector.broadcast %cst_16 : f32 to vector<16x1xf32>
    %21 = arith.divf %19, %20 : vector<16x1xf32>
    %22 = vector.broadcast %21 : vector<16x1xf32> to vector<16x32xf32>
    %23 = arith.subf %15, %22 : vector<16x32xf32>
    %24 = arith.mulf %23, %23 : vector<16x32xf32>
    %cst_17 = arith.constant dense<0.000000e+00> : vector<16xf32>
    %25 = vector.multi_reduction <add>, %24, %cst_17 [1] : vector<16x32xf32> to vector<16xf32>
    %26 = vector.shape_cast %25 : vector<16xf32> to vector<16x1xf32>
    %cst_18 = arith.constant 3.200000e+01 : f32
    %27 = vector.broadcast %cst_18 : f32 to vector<16x1xf32>
    %28 = arith.divf %26, %27 : vector<16x1xf32>
    %29 = vector.broadcast %21 : vector<16x1xf32> to vector<16x32xf32>
    %30 = arith.subf %15, %29 : vector<16x32xf32>
    %cst_19 = arith.constant 9.99999974E-6 : f32
    %31 = vector.broadcast %cst_19 : f32 to vector<16x1xf32>
    %32 = arith.addf %28, %31 : vector<16x1xf32>
    %33 = math.rsqrt %32 : vector<16x1xf32>
    %34 = vector.broadcast %33 : vector<16x1xf32> to vector<16x32xf32>
    %35 = arith.mulf %30, %34 : vector<16x32xf32>
    %36 = vector.broadcast %16 : vector<1x32xf32> to vector<16x32xf32>
    %37 = arith.mulf %35, %36 : vector<16x32xf32>
    %38 = vector.broadcast %17 : vector<1x32xf32> to vector<16x32xf32>
    %39 = arith.addf %37, %38 : vector<16x32xf32>
    %c0_20 = arith.constant 0 : index
    %c0_21 = arith.constant 0 : index
    %40 = vector.load %arg8[%c0_20, %c0_21] : memref<16x32xf32, #tpu.memory_space<vmem>>, vector<16x32xf32>
    tpu.vector_store %arg8[%c0_20, %c0_21], %39 {strides = array<i32>} : memref<16x32xf32, #tpu.memory_space<vmem>>, vector<16x32xf32>,
    return
  }
  func.func @transform_0(%arg0: i32) -> (i32, i32) {
    %c0_i32 = arith.constant 0 : i32
    %c0_i32_0 = arith.constant 0 : i32
    return %arg0, %c0_i32 : i32, i32
  }
  func.func @transform_1(%arg0: i32) -> (i32, i32) {
    %c0_i32 = arith.constant 0 : i32
    %c0_i32_0 = arith.constant 0 : i32
    %c0_i32_1 = arith.constant 0 : i32
    return %c0_i32, %c0_i32_0 : i32, i32
  }
  func.func @transform_2(%arg0: i32) -> (i32, i32) {
    %c0_i32 = arith.constant 0 : i32
    %c0_i32_0 = arith.constant 0 : i32
    %c0_i32_1 = arith.constant 0 : i32
    return %c0_i32, %c0_i32_0 : i32, i32
  }
  func.func @transform_3(%arg0: i32) -> (i32, i32) {
    %c0_i32 = arith.constant 0 : i32
    %c0_i32_0 = arith.constant 0 : i32
    %c0_i32_1 = arith.constant 0 : i32
    return %c0_i32, %c0_i32_0 : i32, i32
  }
  func.func @transform_4(%arg0: i32) -> (i32, i32) {
    %c0_i32 = arith.constant 0 : i32
    %c0_i32_0 = arith.constant 0 : i32
    %c0_i32_1 = arith.constant 0 : i32
    return %c0_i32, %c0_i32_0 : i32, i32
  }
  func.func @transform_5(%arg0: i32) -> (i32, i32) {
    %c0_i32 = arith.constant 0 : i32
    %c0_i32_0 = arith.constant 0 : i32
    %c0_i32_1 = arith.constant 0 : i32
    return %c0_i32, %c0_i32_0 : i32, i32
  }
  func.func @transform_6(%arg0: i32) -> (i32, i32) {
    %c0_i32 = arith.constant 0 : i32
    %c0_i32_0 = arith.constant 0 : i32
    %c0_i32_1 = arith.constant 0 : i32
    return %c0_i32, %c0_i32_0 : i32, i32
  }
  func.func @transform_7(%arg0: i32) -> (i32, i32) {
    %c0_i32 = arith.constant 0 : i32
    %c0_i32_0 = arith.constant 0 : i32
    return %arg0, %c0_i32 : i32, i32
  }
}

</mosaic_0001>

<llo_original>
// kernel: transformer_decoder.7
$region0: #{transformer_decoder.7}
  #allocation0 [shape = 'u32[]', space=smem, size = 0x4, offset = 0x4, fixed_abs, tag = 'smem constant byte address 0x4 - core index']
  #allocation1 [shape = 'u32[144,128]{1,0:T(1,128)}', space=vmem, size = 0x12000, scoped, tag = 'internal scratch']
  %s0 = inlined_call_operand.hbm [shape: f32[16,32], index: 0, kind: input, shape index: {}]
  %s1 = inlined_call_operand.hbm [shape: bf16[32,64], index: 1, kind: input, shape index: {}]
  %s2 = inlined_call_operand.vmem [shape: f32[1,64], index: 2, kind: input, shape index: {}]
  %s3 = inlined_call_operand.vmem [shape: bf16[16,64], index: 3, kind: output, shape index: {}]
  %s4 = sld [smem:[#allocation0]]
  $region30: #{transformer_decoder.7} parent=0
    _
  %s6 = ssub.s32 1, %s4
  %s7 = scalar_select 0, %s6, %s4
  $region1: #{transformer_decoder.7} parent=0
    #allocation2 [shape = 'u8[8192]{0}', space=vmem, size = 0x2000, scoped, tag = 'input window, operand 0, single buffered']
    #allocation3 [shape = 's32[1]{0}', space=sflag, size = 0x4, scoped, tag = 'scoped memory for transformer_decoder.7']
    #allocation4 [shape = 'u8[8192]{0}', space=vmem, size = 0x2000, scoped, tag = 'input window, operand 1, single buffered']
    #allocation5 [shape = 's32[1]{0}', space=sflag, size = 0x4, scoped, tag = 'scoped memory for transformer_decoder.7']
    %8 = vsyncpa [#allocation3], 0
    %9 = vsyncpa [#allocation5], 0
    // Predicated region
    $region2: #{transformer_decoder.7} parent=1 // pred_check
      _
    $region3: #{transformer_decoder.7} parent=1 // pred_check_branch
      %11 = sbr.rel (0) target = $region5
    $region4: #{transformer_decoder.7} parent=1 // pred_region
      %s13 = ssub.s32 256, 256
      %14 = vsyncadd [#allocation3], %s13
      %s15 = sshll.u32 [#allocation2], 4
      %s16 = int_to_ptr.vmem [resolvable:$true] %s15
      %21 = dma.hbm_to_vmem [thread:$0]  %s0, 256, %s16, [#allocation3], 128, 128, 8
    $region5: #{transformer_decoder.7} parent=1 // pred_fallthru
      _
    // Predicated region
    $region6: #{transformer_decoder.7} parent=1 // pred_check
      _
    $region7: #{transformer_decoder.7} parent=1 // pred_check_branch
      %23 = sbr.rel (0) target = $region9
    $region8: #{transformer_decoder.7} parent=1 // pred_region
      %s25 = ssub.s32 256, 256
      %26 = vsyncadd [#allocation5], %s25
      %s27 = sshll.u32 [#allocation4], 4
      %s28 = int_to_ptr.vmem [resolvable:$true] %s27
      %33 = dma.hbm_to_vmem [thread:$0]  %s1, 256, %s28, [#allocation5], 64, 64, 4
    $region9: #{transformer_decoder.7} parent=1 // pred_fallthru
      _
    // Predicated region
    $region10: #{transformer_decoder.7} parent=1 // pred_check
      _
    $region11: #{transformer_decoder.7} parent=1 // pred_check_branch
      %35 = sbr.rel (0) target = $region13
    $region12: #{transformer_decoder.7} parent=1 // pred_region
      _
    $region13: #{transformer_decoder.7} parent=1 // pred_fallthru
      _
    // Predicated region
    $region14: #{transformer_decoder.7} parent=1 // pred_check
      _
    $region15: #{transformer_decoder.7} parent=1 // pred_check_branch
      %37 = sbr.rel (0) target = $region17
    $region16: #{transformer_decoder.7} parent=1 // pred_region
      %38 = dma.done [#allocation3], 256
    $region17: #{transformer_decoder.7} parent=1 // pred_fallthru
      _
    // Predicated region
    $region18: #{transformer_decoder.7} parent=1 // pred_check
      _
    $region19: #{transformer_decoder.7} parent=1 // pred_check_branch
      %40 = sbr.rel (0) target = $region21
    $region20: #{transformer_decoder.7} parent=1 // pred_region
      %41 = dma.done [#allocation5], 256
    $region21: #{transformer_decoder.7} parent=1 // pred_fallthru
      _
    %v43 = vld [vmem:[#allocation2] sm:$0xff]
    %v44 = vld [vmem:[#allocation2 + $0x8] sm:$0xff]
    %v45 = vpack.c.bf16 %v44, %v43
    %v46 = vld [vmem:[#allocation4] sm:$0xf]
    %v47 = vld [vmem:[#allocation4 + $0x4] sm:$0xf]
    %v48 = vld [vmem:[#allocation4 + $0x8] sm:$0xf]
    %v49 = vld [vmem:[#allocation4 + $0xc] sm:$0xf]
    %v50 = vld [vmem:[%s2] sm:$0x1]
    %v52 = vlaneseq
    %v53 = vshrl.u32 %v52, 7
    %v54 = vsub.s32 0, %v53
    %v55 = vrot.slane %v50, %v54
    %v61 = vunpack.c.l.b16 %v46
    %v62 = vunpack.c.l.b16 %v47
    %v63 = vunpack.c.l.b16 %v48
    %v64 = vunpack.c.l.b16 %v49
    %v65 = vpack.c.b16 %v62, %v61
    %v66 = vpack.c.b16 %v64, %v63
    %vm69 = vcmask 261120
    %v71 = vsel %vm69, %v45, 0
    %73 = vmatprep.subr.bf16.mxu0 0
    %74 = vmatpush1.bf16.msra.mxu0 %v65
    %75 = vmatprep.subr.bf16.mxu0 0
    %76 = vmatpush1.bf16.msra.mxu0 %v66
    %77 = vmatprep.subr.bf16.mxu0 0
    %78 = vmatpush1.bf16.msra.mxu0 0
    %79 = vmatprep.subr.bf16.mxu0 0
    %80 = vmatpush1.bf16.msra.mxu0 0
    %81 = vmatprep.subr.bf16.mxu0 0
    %82 = vmatpush1.bf16.msra.mxu0 0
    %83 = vmatprep.subr.bf16.mxu0 0
    %84 = vmatpush1.bf16.msra.mxu0 0
    %85 = vmatprep.subr.bf16.mxu0 0
    %86 = vmatpush1.bf16.msra.mxu0 0
    %87 = vmatprep.subr.bf16.mxu0 0
    %88 = vmatpush1.bf16.msra.mxu0 0
    %89 = vmatprep.subr.bf16.mxu0 0
    %90 = vmatpush1.bf16.msra.mxu0 0
    %91 = vmatprep.subr.bf16.mxu0 0
    %92 = vmatpush1.bf16.msra.mxu0 0
    %93 = vmatprep.subr.bf16.mxu0 0
    %94 = vmatpush1.bf16.msra.mxu0 0
    %95 = vmatprep.subr.bf16.mxu0 0
    %96 = vmatpush1.bf16.msra.mxu0 0
    %97 = vmatprep.subr.bf16.mxu0 0
    %98 = vmatpush1.bf16.msra.mxu0 0
    %99 = vmatprep.subr.bf16.mxu0 0
    %100 = vmatpush1.bf16.msra.mxu0 0
    %101 = vmatprep.subr.bf16.mxu0 0
    %102 = vmatpush1.bf16.msra.mxu0 0
    %103 = vmatprep.subr.bf16.mxu0 0
    %104 = vmatpush1.bf16.msra.mxu0 0
    %105 = vmatprep.mubr.bf16.mxu0 0
    %106 = vmatmul.mubr.bf16.gmra.mrb[0].mxu0 %v71
    %v107 = vpop.f32.mrb[0].mxu0
    %v108 = vadd.f32 %v55, %v107
    %v109 = vpop.f32.mrb[0].mxu0
    %v110 = vpop.f32.mrb[0].mxu0
    %v111 = vadd.f32 %v55, %v110
    %v112 = vpop.f32.mrb[0].mxu0
    %113 = vdwg.mxu0
    %v114 = vpack.c.bf16 %v111, %v108
    %v116 = vunpack.c.l.b16 %v114
    %v117 = vunpack.c.h.b16 %v114
    %v118 = vpack.c.b16 %v116, %v116
    %v119 = vpack.c.b16 %v117, %v117
    %vm122 = vcmask 519168
    %123 = vst.msk [vmem:[%s3] sm:$0xf] %vm122, %v118
    %124 = vst.msk [vmem:[%s3 + $0x4] sm:$0xf] %vm122, %v119
    // Predicated region
    $region22: #{transformer_decoder.7} parent=1 // pred_check
      _
    $region23: #{transformer_decoder.7} parent=1 // pred_check_branch
      %126 = sbr.rel (0) target = $region25
    $region24: #{transformer_decoder.7} parent=1 // pred_region
      _
    $region25: #{transformer_decoder.7} parent=1 // pred_fallthru
      _
    // Predicated region
    $region26: #{transformer_decoder.7} parent=1 // pred_check
      _
    $region27: #{transformer_decoder.7} parent=1 // pred_check_branch
      %128 = sbr.rel (0) target = $region29
    $region28: #{transformer_decoder.7} parent=1 // pred_region
      _
    $region29: #{transformer_decoder.7} parent=1 // pred_fallthru
      _
    %129 = vsyncpa [#allocation3], 1
    %130 = vsyncpa [#allocation5], 1

// kernel: transformer_decoder.8
$region0: #{transformer_decoder.8}
  #allocation0 [shape = 'u32[]', space=smem, size = 0x4, offset = 0x4, fixed_abs, tag = 'smem constant byte address 0x4 - core index']
  #allocation1 [shape = 'u32[144,128]{1,0:T(1,128)}', space=vmem, size = 0x12000, scoped, tag = 'internal scratch']
  %s0 = inlined_call_operand.vmem [shape: f32[2,8,32], index: 0, kind: input, shape index: {}]
  %s1 = inlined_call_operand.vmem [shape: bf16[32,96], index: 1, kind: input, shape index: {}]
  %s2 = inlined_call_operand.vmem [shape: f32[1,96], index: 2, kind: input, shape index: {}]
  %s3 = inlined_call_operand.vmem [shape: bf16[32,32], index: 3, kind: input, shape index: {}]
  %s4 = inlined_call_operand.vmem [shape: f32[1,32], index: 4, kind: input, shape index: {}]
  %s5 = inlined_call_operand.vmem [shape: f32[1,32], index: 5, kind: input, shape index: {}]
  %s6 = inlined_call_operand.vmem [shape: f32[1,32], index: 6, kind: input, shape index: {}]
  %s7 = inlined_call_operand.vmem [shape: f32[2,8,32], index: 7, kind: output, shape index: {}]
  %s8 = sld [smem:[#allocation0]]
  $region61: #{transformer_decoder.8} parent=0
    _
  %s10 = ssub.s32 1, %s8
  %s11 = scalar_select 0, %s10, %s8
  loop: start=0, step=1, limit=4
  $region2: #{transformer_decoder.8} parent=0 // loop_pre_header
    _
  $region3: #{transformer_decoder.8} parent=0 // loop_header
    %s13 = sphi 0, %s17
    %p14 = scmp.ge.s32.totalorder %s13, 4
    %s23 = sphi 0, %s25
    %s26 = sphi 0, %s23
    %s27 = sphi 0, %s26
    %s43 = sphi 0, %s27
    %s47 = sphi 0, %s47
    %s49 = sphi 0, %s47
    %s50 = sphi 0, %s49
    %s64 = sphi 0, %s50
    %s68 = sphi 0, %s68
    %s70 = sphi 0, %s68
    %s71 = sphi 0, %s70
    %s85 = sphi 0, %s71
    %s89 = sphi 0, %s89
    %s91 = sphi 0, %s89
    %s92 = sphi 0, %s91
    %s106 = sphi 0, %s92
    %s110 = sphi 0, %s110
    %s112 = sphi 0, %s110
    %s113 = sphi 0, %s112
    %s127 = sphi 0, %s113
    %s131 = sphi 0, %s131
    %s133 = sphi 0, %s131
    %s134 = sphi 0, %s133
    %s148 = sphi 0, %s134
    %s152 = sphi 0, %s152
    %s154 = sphi 0, %s152
    %s155 = sphi 0, %s154
    %s169 = sphi 0, %s155
    %s175 = sphi 0, %s177
    %s178 = sphi 0, %s175
    %s179 = sphi 0, %s178
    %s195 = sphi 0, %s179
  $region4: #{transformer_decoder.8} parent=0 // loop_header_branch
    %16 = sbr.rel (%p14) target = $region8
  $region5: #{transformer_decoder.8} parent=0 // loop_body
    %s18 = ssub.s32 %s13, 1
    %s19 = ssub.s32 %s13, 2
    %s20 = sadd.s32 %s13, 1
    %s21 = ssub.s32 %s13, %s20
    %p22 = scmp.eq.s32.totalorder %s21, 0
    %s24 = sadd.s32 %s23, 1
    %s25 = scalar_select %p22, %s23, %s24
    %p28 = pneg %p22
    %p29 = scmp.eq.s32.totalorder %s13, 1
    %p30 = por %p28, %p29
    %p31 = scmp.ne.s32.totalorder %s23, %s26
    %p32 = scmp.eq.s32.totalorder %s13, 0
    %p33 = por %p31, %p32
    %p34 = scmp.ne.s32.totalorder %s23, %s26
    %p35 = scmp.eq.s32.totalorder %s18, 1
    %p36 = por %p34, %p35
    %p37 = scmp.ne.s32.totalorder %s26, %s27
    %p38 = scmp.eq.s32.totalorder %s18, 0
    %p39 = por %p37, %p38
    %p40 = scmp.ne.s32.totalorder %s26, %s27
    %p41 = scmp.eq.s32.totalorder %s19, 1
    %p42 = por %p40, %p41
    %p44 = scmp.ne.s32.totalorder %s27, %s43
    %p45 = scmp.eq.s32.totalorder %s19, 0
    %p46 = por %p44, %p45
    %s48 = sadd.s32 %s47, 1
    %p51 = scmp.eq.s32.totalorder %s13, 1
    %p52 = scmp.ne.s32.totalorder %s47, %s49
    %p53 = scmp.eq.s32.totalorder %s13, 0
    %p54 = por %p52, %p53
    %p55 = scmp.ne.s32.totalorder %s47, %s49
    %p56 = scmp.eq.s32.totalorder %s18, 1
    %p57 = por %p55, %p56
    %p58 = scmp.ne.s32.totalorder %s49, %s50
    %p59 = scmp.eq.s32.totalorder %s18, 0
    %p60 = por %p58, %p59
    %p61 = scmp.ne.s32.totalorder %s49, %s50
    %p62 = scmp.eq.s32.totalorder %s19, 1
    %p63 = por %p61, %p62
    %p65 = scmp.ne.s32.totalorder %s50, %s64
    %p66 = scmp.eq.s32.totalorder %s19, 0
    %p67 = por %p65, %p66
    %s69 = sadd.s32 %s68, 1
    %p72 = scmp.eq.s32.totalorder %s13, 1
    %p73 = scmp.ne.s32.totalorder %s68, %s70
    %p74 = scmp.eq.s32.totalorder %s13, 0
    %p75 = por %p73, %p74
    %p76 = scmp.ne.s32.totalorder %s68, %s70
    %p77 = scmp.eq.s32.totalorder %s18, 1
    %p78 = por %p76, %p77
    %p79 = scmp.ne.s32.totalorder %s70, %s71
    %p80 = scmp.eq.s32.totalorder %s18, 0
    %p81 = por %p79, %p80
    %p82 = scmp.ne.s32.totalorder %s70, %s71
    %p83 = scmp.eq.s32.totalorder %s19, 1
    %p84 = por %p82, %p83
    %p86 = scmp.ne.s32.totalorder %s71, %s85
    %p87 = scmp.eq.s32.totalorder %s19, 0
    %p88 = por %p86, %p87
    %s90 = sadd.s32 %s89, 1
    %p93 = scmp.eq.s32.totalorder %s13, 1
    %p94 = scmp.ne.s32.totalorder %s89, %s91
    %p95 = scmp.eq.s32.totalorder %s13, 0
    %p96 = por %p94, %p95
    %p97 = scmp.ne.s32.totalorder %s89, %s91
    %p98 = scmp.eq.s32.totalorder %s18, 1
    %p99 = por %p97, %p98
    %p100 = scmp.ne.s32.totalorder %s91, %s92
    %p101 = scmp.eq.s32.totalorder %s18, 0
    %p102 = por %p100, %p101
    %p103 = scmp.ne.s32.totalorder %s91, %s92
    %p104 = scmp.eq.s32.totalorder %s19, 1
    %p105 = por %p103, %p104
    %p107 = scmp.ne.s32.totalorder %s92, %s106
    %p108 = scmp.eq.s32.totalorder %s19, 0
    %p109 = por %p107, %p108
    %s111 = sadd.s32 %s110, 1
    %p114 = scmp.eq.s32.totalorder %s13, 1
    %p115 = scmp.ne.s32.totalorder %s110, %s112
    %p116 = scmp.eq.s32.totalorder %s13, 0
    %p117 = por %p115, %p116
    %p118 = scmp.ne.s32.totalorder %s110, %s112
    %p119 = scmp.eq.s32.totalorder %s18, 1
    %p120 = por %p118, %p119
    %p121 = scmp.ne.s32.totalorder %s112, %s113
    %p122 = scmp.eq.s32.totalorder %s18, 0
    %p123 = por %p121, %p122
    %p124 = scmp.ne.s32.totalorder %s112, %s113
    %p125 = scmp.eq.s32.totalorder %s19, 1
    %p126 = por %p124, %p125
    %p128 = scmp.ne.s32.totalorder %s113, %s127
    %p129 = scmp.eq.s32.totalorder %s19, 0
    %p130 = por %p128, %p129
    %s132 = sadd.s32 %s131, 1
    %p135 = scmp.eq.s32.totalorder %s13, 1
    %p136 = scmp.ne.s32.totalorder %s131, %s133
    %p137 = scmp.eq.s32.totalorder %s13, 0
    %p138 = por %p136, %p137
    %p139 = scmp.ne.s32.totalorder %s131, %s133
    %p140 = scmp.eq.s32.totalorder %s18, 1
    %p141 = por %p139, %p140
    %p142 = scmp.ne.s32.totalorder %s133, %s134
    %p143 = scmp.eq.s32.totalorder %s18, 0
    %p144 = por %p142, %p143
    %p145 = scmp.ne.s32.totalorder %s133, %s134
    %p146 = scmp.eq.s32.totalorder %s19, 1
    %p147 = por %p145, %p146
    %p149 = scmp.ne.s32.totalorder %s134, %s148
    %p150 = scmp.eq.s32.totalorder %s19, 0
    %p151 = por %p149, %p150
    %s153 = sadd.s32 %s152, 1
    %p156 = scmp.eq.s32.totalorder %s13, 1
    %p157 = scmp.ne.s32.totalorder %s152, %s154
    %p158 = scmp.eq.s32.totalorder %s13, 0
    %p159 = por %p157, %p158
    %p160 = scmp.ne.s32.totalorder %s152, %s154
    %p161 = scmp.eq.s32.totalorder %s18, 1
    %p162 = por %p160, %p161
    %p163 = scmp.ne.s32.totalorder %s154, %s155
    %p164 = scmp.eq.s32.totalorder %s18, 0
    %p165 = por %p163, %p164
    %p166 = scmp.ne.s32.totalorder %s154, %s155
    %p167 = scmp.eq.s32.totalorder %s19, 1
    %p168 = por %p166, %p167
    %p170 = scmp.ne.s32.totalorder %s155, %s169
    %p171 = scmp.eq.s32.totalorder %s19, 0
    %p172 = por %p170, %p171
    %s173 = ssub.s32 %s13, %s20
    %p174 = scmp.eq.s32.totalorder %s173, 0
    %s176 = sadd.s32 %s175, 1
    %s177 = scalar_select %p174, %s175, %s176
    %p180 = pneg %p174
    %p181 = scmp.eq.s32.totalorder %s13, 1
    %p182 = por %p180, %p181
    %p183 = scmp.ne.s32.totalorder %s175, %s178
    %p184 = scmp.eq.s32.totalorder %s13, 0
    %p185 = por %p183, %p184
    %p186 = scmp.ne.s32.totalorder %s175, %s178
    %p187 = scmp.eq.s32.totalorder %s18, 1
    %p188 = por %p186, %p187
    %p189 = scmp.ne.s32.totalorder %s178, %s179
    %p190 = scmp.eq.s32.totalorder %s18, 0
    %p191 = por %p189, %p190
    %p192 = scmp.ne.s32.totalorder %s178, %s179
    %p193 = scmp.eq.s32.totalorder %s19, 1
    %p194 = por %p192, %p193
    %p196 = scmp.ne.s32.totalorder %s179, %s195
    %p197 = scmp.eq.s32.totalorder %s19, 0
    %p198 = por %p196, %p197
    %p199 = scmp.le.s32.totalorder 1, %s13
    %p200 = scmp.lt.s32.totalorder %s13, 3
    %p201 = pnand %p199, %p200
    %p202 = pneg %p201
    // Predicated region
    $region9: #{transformer_decoder.8} parent=5 // pred_check
      _
    $region10: #{transformer_decoder.8} parent=5 // pred_check_branch
      %204 = sbr.rel (%p201) target = $region12
    $region11: #{transformer_decoder.8} parent=5 // pred_region
      %s205 = ssub.s32 %s13, 1
      // Predicated region
      $region13: #{transformer_decoder.8} parent=11 // pred_check
        %p206 = pneg %p60
      $region14: #{transformer_decoder.8} parent=11 // pred_check_branch
        %208 = sbr.rel (%p206) target = $region16
      $region15: #{transformer_decoder.8} parent=11 // pred_region
        _
      $region16: #{transformer_decoder.8} parent=11 // pred_fallthru
        _
      // Predicated region
      $region17: #{transformer_decoder.8} parent=11 // pred_check
        %p209 = pneg %p81
      $region18: #{transformer_decoder.8} parent=11 // pred_check_branch
        %211 = sbr.rel (%p209) target = $region20
      $region19: #{transformer_decoder.8} parent=11 // pred_region
        _
      $region20: #{transformer_decoder.8} parent=11 // pred_fallthru
        _
      // Predicated region
      $region21: #{transformer_decoder.8} parent=11 // pred_check
        %p212 = pneg %p102
      $region22: #{transformer_decoder.8} parent=11 // pred_check_branch
        %214 = sbr.rel (%p212) target = $region24
      $region23: #{transformer_decoder.8} parent=11 // pred_region
        _
      $region24: #{transformer_decoder.8} parent=11 // pred_fallthru
        _
      // Predicated region
      $region25: #{transformer_decoder.8} parent=11 // pred_check
        %p215 = pneg %p123
      $region26: #{transformer_decoder.8} parent=11 // pred_check_branch
        %217 = sbr.rel (%p215) target = $region28
      $region27: #{transformer_decoder.8} parent=11 // pred_region
        _
      $region28: #{transformer_decoder.8} parent=11 // pred_fallthru
        _
      // Predicated region
      $region29: #{transformer_decoder.8} parent=11 // pred_check
        %p218 = pneg %p144
      $region30: #{transformer_decoder.8} parent=11 // pred_check_branch
        %220 = sbr.rel (%p218) target = $region32
      $region31: #{transformer_decoder.8} parent=11 // pred_region
        _
      $region32: #{transformer_decoder.8} parent=11 // pred_fallthru
        _
      // Predicated region
      $region33: #{transformer_decoder.8} parent=11 // pred_check
        %p221 = pneg %p165
      $region34: #{transformer_decoder.8} parent=11 // pred_check_branch
        %223 = sbr.rel (%p221) target = $region36
      $region35: #{transformer_decoder.8} parent=11 // pred_region
        _
      $region36: #{transformer_decoder.8} parent=11 // pred_fallthru
        _
    $region12: #{transformer_decoder.8} parent=5 // pred_fallthru
      _
    %p224 = scmp.lt.s32.totalorder %s13, 2
    // Predicated region
    $region37: #{transformer_decoder.8} parent=5 // pred_check
      %p225 = pneg %p224
    $region38: #{transformer_decoder.8} parent=5 // pred_check_branch
      %227 = sbr.rel (%p225) target = $region40
    $region39: #{transformer_decoder.8} parent=5 // pred_region
      // Predicated region
      $region41: #{transformer_decoder.8} parent=39 // pred_check
        %p228 = pneg %p33
      $region42: #{transformer_decoder.8} parent=39 // pred_check_branch
        %230 = sbr.rel (%p228) target = $region44
      $region43: #{transformer_decoder.8} parent=39 // pred_region
        %p231 = scmp.lt.s32.totalorder %s13, 1
        %s232 = scalar_select %p231, %s13, 1
        %s233 = smul.addr %s232, 8
        %s234 = scalar_lea.vmem %s0, %s233
      $region44: #{transformer_decoder.8} parent=39 // pred_fallthru
        _
    $region40: #{transformer_decoder.8} parent=5 // pred_fallthru
      _
    %p235 = scmp.le.s32.totalorder 1, %s13
    %p236 = scmp.lt.s32.totalorder %s13, 3
    %p237 = pnand %p235, %p236
    %p238 = pneg %p237
    // Predicated region
    $region45: #{transformer_decoder.8} parent=5 // pred_check
      _
    $region46: #{transformer_decoder.8} parent=5 // pred_check_branch
      %240 = sbr.rel (%p237) target = $region48
    $region47: #{transformer_decoder.8} parent=5 // pred_region
      %s241 = ssub.s32 %s13, 1
      %p242 = scmp.lt.s32.totalorder %s18, 1
      %s243 = scalar_select %p242, %s18, 1
      %s244 = smul.addr %s243, 8
      %s245 = scalar_lea.vmem %s0, %s244
      %p246 = pneg %p39
      %p247 = pneg %p36
      %p248 = pneg %p60
      %p249 = pneg %p57
      %p250 = pneg %p81
      %p251 = pneg %p78
      %p252 = pneg %p102
      %p253 = pneg %p99
      %p254 = pneg %p123
      %p255 = pneg %p120
      %p256 = pneg %p144
      %p257 = pneg %p141
      %p258 = pneg %p165
      %p259 = pneg %p162
      %p260 = pneg %p191
      %p261 = pneg %p188
      %p262 = scmp.lt.s32.totalorder %s18, 1
      %s263 = scalar_select %p262, %s18, 1
      %s264 = smul.addr %s263, 8
      %s265 = scalar_lea.vmem %s7, %s264
      %p266 = scmp.lt.s32.totalorder %s18, 1
      %s267 = scalar_select %p266, %s18, 1
      %s268 = smul.addr %s267, 8
      %s269 = scalar_lea.vmem %s0, %s268
      %p270 = scmp.lt.s32.totalorder %s18, 1
      %s271 = scalar_select %p270, %s18, 1
      %s272 = smul.addr %s271, 8
      %s273 = scalar_lea.vmem %s7, %s272
      %v275 = vld [vmem:[%s269] sm:$0xff]
      %v276 = vpack.c.bf16 %v275, %v275
      %v277 = vld [vmem:[%s1] sm:$0xf]
      %v278 = vld [vmem:[%s1 + $0x4] sm:$0xf]
      %v279 = vld [vmem:[%s1 + $0x8] sm:$0xf]
      %v280 = vld [vmem:[%s1 + $0xc] sm:$0xf]
      %v281 = vld [vmem:[%s2] sm:$0x1]
      %v283 = vlaneseq
      %v284 = vshrl.u32 %v283, 7
      %v285 = vsub.s32 0, %v284
      %v286 = vrot.slane %v281, %v285
      %v292 = vunpack.c.l.b16 %v277
      %v293 = vunpack.c.l.b16 %v278
      %v294 = vunpack.c.l.b16 %v279
      %v295 = vunpack.c.l.b16 %v280
      %v296 = vpack.c.b16 %v293, %v292
      %v297 = vpack.c.b16 %v295, %v294
      %vm300 = vcmask 261120
      %v302 = vsel %vm300, %v276, 0
      %304 = vmatprep.subr.bf16.mxu0 0
      %305 = vmatpush1.bf16.msra.mxu0 %v296
      %306 = vmatprep.subr.bf16.mxu0 0
      %307 = vmatpush1.bf16.msra.mxu0 %v297
      %308 = vmatprep.subr.bf16.mxu0 0
      %309 = vmatpush1.bf16.msra.mxu0 0
      %310 = vmatprep.subr.bf16.mxu0 0
      %311 = vmatpush1.bf16.msra.mxu0 0
      %312 = vmatprep.subr.bf16.mxu0 0
      %313 = vmatpush1.bf16.msra.mxu0 0
      %314 = vmatprep.subr.bf16.mxu0 0
      %315 = vmatpush1.bf16.msra.mxu0 0
      %316 = vmatprep.subr.bf16.mxu0 0
      %317 = vmatpush1.bf16.msra.mxu0 0
      %318 = vmatprep.subr.bf16.mxu0 0
      %319 = vmatpush1.bf16.msra.mxu0 0
      %320 = vmatprep.subr.bf16.mxu0 0
      %321 = vmatpush1.bf16.msra.mxu0 0
      %322 = vmatprep.subr.bf16.mxu0 0
      %323 = vmatpush1.bf16.msra.mxu0 0
      %324 = vmatprep.subr.bf16.mxu0 0
      %325 = vmatpush1.bf16.msra.mxu0 0
      %326 = vmatprep.subr.bf16.mxu0 0
      %327 = vmatpush1.bf16.msra.mxu0 0
      %328 = vmatprep.subr.bf16.mxu0 0
      %329 = vmatpush1.bf16.msra.mxu0 0
      %330 = vmatprep.subr.bf16.mxu0 0
      %331 = vmatpush1.bf16.msra.mxu0 0
      %332 = vmatprep.subr.bf16.mxu0 0
      %333 = vmatpush1.bf16.msra.mxu0 0
      %334 = vmatprep.subr.bf16.mxu0 0
      %335 = vmatpush1.bf16.msra.mxu0 0
      %336 = vmatprep.mubr.bf16.mxu0 0
      %337 = vmatmul.mubr.bf16.gmra.mrb[0].mxu0 %v302
      %v338 = vpop.f32.mrb[0].mxu0
      %v339 = vadd.f32 %v286, %v338
      %v340 = vpop.f32.mrb[0].mxu0
      %v341 = vpop.f32.mrb[0].mxu0
      %v342 = vpop.f32.mrb[0].mxu0
      %343 = vdwg.mxu0
      %v344 = vmul.f32 %v339, 0.35355338
      %v345 = vlaneseq
      %v346 = vshrl.u32 %v345, 7
      %v347 = vlaneseq
      %v348 = vand.u32 %v347, 127
      %vm349 = vcmp.ge.s32.totalorder %v346, %v348
      %v350 = vsel %vm349, 0.0, -1e+09
      %v351 = vpack.c.bf16 %v344, %v344
      %v352 = vpack.c.bf16 %v339, %v339
      %354 = vrot.lane.b32.xlu0 %v352, 96
      %v355 = vpop.permute.xlu0 %354
      %vm356 = vcmask 64512
      %v358 = vsel %vm356, %v351, 0
      %v361 = vsel %vm356, %v355, 0
      %363 = vmatprep.subr.bf16.mxu0 0
      %364 = vmatpush1.bf16.xpose.msra.mxu0 %v361
      %365 = vmatprep.subr.bf16.mxu0 0
      %366 = vmatpush1.bf16.xpose.msra.mxu0 0
      %367 = vmatprep.subr.bf16.mxu0 0
      %368 = vmatpush1.bf16.xpose.msra.mxu0 0
      %369 = vmatprep.subr.bf16.mxu0 0
      %370 = vmatpush1.bf16.xpose.msra.mxu0 0
      %371 = vmatprep.subr.bf16.mxu0 0
      %372 = vmatpush1.bf16.xpose.msra.mxu0 0
      %373 = vmatprep.subr.bf16.mxu0 0
      %374 = vmatpush1.bf16.xpose.msra.mxu0 0
      %375 = vmatprep.subr.bf16.mxu0 0
      %376 = vmatpush1.bf16.xpose.msra.mxu0 0
      %377 = vmatprep.subr.bf16.mxu0 0
      %378 = vmatpush1.bf16.xpose.msra.mxu0 0
      %379 = vmatprep.subr.bf16.mxu0 0
      %380 = vmatpush1.bf16.xpose.msra.mxu0 0
      %381 = vmatprep.subr.bf16.mxu0 0
      %382 = vmatpush1.bf16.xpose.msra.mxu0 0
      %383 = vmatprep.subr.bf16.mxu0 0
      %384 = vmatpush1.bf16.xpose.msra.mxu0 0
      %385 = vmatprep.subr.bf16.mxu0 0
      %386 = vmatpush1.bf16.xpose.msra.mxu0 0
      %387 = vmatprep.subr.bf16.mxu0 0
      %388 = vmatpush1.bf16.xpose.msra.mxu0 0
      %389 = vmatprep.subr.bf16.mxu0 0
      %390 = vmatpush1.bf16.xpose.msra.mxu0 0
      %391 = vmatprep.subr.bf16.mxu0 0
      %392 = vmatpush1.bf16.xpose.msra.mxu0 0
      %393 = vmatprep.subr.bf16.mxu0 0
      %394 = vmatpush1.bf16.xpose.msra.mxu0 0
      %395 = vmatprep.mubr.bf16.mxu0 0
      %396 = vmatmul.mubr.bf16.gmra.mrb[0].mxu0 %v358
      %v397 = vpop.f32.mrb[0].mxu0
      %v398 = vadd.f32 %v350, %v397
      %v399 = vpop.f32.mrb[0].mxu0
      %v400 = vpop.f32.mrb[0].mxu0
      %v401 = vpop.f32.mrb[0].mxu0
      %402 = vdwg.mxu0
      %v403 = vsel %vm356, %v398, -inf
      %404 = vmax.xlane.f32.xlu0 %v403
      %v405 = vpop.xlane.xlu0 %404
      %v406 = vsub.f32 %v398, %v405
      %v407 = vmul.f32 %v406, 1.442695
      %v408 = vpow.pop %v407
      %v409 = vsel %vm356, %v408, 0.0
      %410 = vadd.xlane.f32.xlu0 %v409
      %v411 = vpop.xlane.xlu0 %410
      %v412 = vpack.c.bf16 %v408, %v408
      %413 = vrot.lane.b32.xlu0 %v352, 64
      %v414 = vpop.permute.xlu0 %413
      %v416 = vsel %vm356, %v412, 0
      %vm418 = vcmask 1043456
      %v420 = vsel %vm418, %v414, 0
      %422 = vmatprep.subr.bf16.mxu0 0
      %423 = vmatpush1.bf16.msra.mxu0 %v420
      %424 = vmatprep.subr.bf16.mxu0 0
      %425 = vmatpush1.bf16.msra.mxu0 0
      %426 = vmatprep.subr.bf16.mxu0 0
      %427 = vmatpush1.bf16.msra.mxu0 0
      %428 = vmatprep.subr.bf16.mxu0 0
      %429 = vmatpush1.bf16.msra.mxu0 0
      %430 = vmatprep.subr.bf16.mxu0 0
      %431 = vmatpush1.bf16.msra.mxu0 0
      %432 = vmatprep.subr.bf16.mxu0 0
      %433 = vmatpush1.bf16.msra.mxu0 0
      %434 = vmatprep.subr.bf16.mxu0 0
      %435 = vmatpush1.bf16.msra.mxu0 0
      %436 = vmatprep.subr.bf16.mxu0 0
      %437 = vmatpush1.bf16.msra.mxu0 0
      %438 = vmatprep.subr.bf16.mxu0 0
      %439 = vmatpush1.bf16.msra.mxu0 0
      %440 = vmatprep.subr.bf16.mxu0 0
      %441 = vmatpush1.bf16.msra.mxu0 0
      %442 = vmatprep.subr.bf16.mxu0 0
      %443 = vmatpush1.bf16.msra.mxu0 0
      %444 = vmatprep.subr.bf16.mxu0 0
      %445 = vmatpush1.bf16.msra.mxu0 0
      %446 = vmatprep.subr.bf16.mxu0 0
      %447 = vmatpush1.bf16.msra.mxu0 0
      %448 = vmatprep.subr.bf16.mxu0 0
      %449 = vmatpush1.bf16.msra.mxu0 0
      %450 = vmatprep.subr.bf16.mxu0 0
      %451 = vmatpush1.bf16.msra.mxu0 0
      %452 = vmatprep.subr.bf16.mxu0 0
      %453 = vmatpush1.bf16.msra.mxu0 0
      %454 = vmatprep.mubr.bf16.mxu0 0
      %455 = vmatmul.mubr.bf16.gmra.mrb[0].mxu0 %v416
      %v456 = vpop.f32.mrb[0].mxu0
      %v457 = vadd.f32 0.0, %v456
      %v458 = vpop.f32.mrb[0].mxu0
      %v459 = vpop.f32.mrb[0].mxu0
      %v460 = vpop.f32.mrb[0].mxu0
      %461 = vdwg.mxu0
      %v462 = vrcp.pop %v411
      %v463 = vmul.f32 %v457, %v462
      %465 = vrot.lane.b32.xlu0 %v351, 120
      %v466 = vpop.permute.xlu0 %465
      %467 = vrot.lane.b32.xlu0 %v352, 88
      %v468 = vpop.permute.xlu0 %467
      %v470 = vsel %vm356, %v466, 0
      %v473 = vsel %vm356, %v468, 0
      %475 = vmatprep.subr.bf16.mxu0 0
      %476 = vmatpush1.bf16.xpose.msra.mxu0 %v473
      %477 = vmatprep.subr.bf16.mxu0 0
      %478 = vmatpush1.bf16.xpose.msra.mxu0 0
      %479 = vmatprep.subr.bf16.mxu0 0
      %480 = vmatpush1.bf16.xpose.msra.mxu0 0
      %481 = vmatprep.subr.bf16.mxu0 0
      %482 = vmatpush1.bf16.xpose.msra.mxu0 0
      %483 = vmatprep.subr.bf16.mxu0 0
      %484 = vmatpush1.bf16.xpose.msra.mxu0 0
      %485 = vmatprep.subr.bf16.mxu0 0
      %486 = vmatpush1.bf16.xpose.msra.mxu0 0
      %487 = vmatprep.subr.bf16.mxu0 0
      %488 = vmatpush1.bf16.xpose.msra.mxu0 0
      %489 = vmatprep.subr.bf16.mxu0 0
      %490 = vmatpush1.bf16.xpose.msra.mxu0 0
      %491 = vmatprep.subr.bf16.mxu0 0
      %492 = vmatpush1.bf16.xpose.msra.mxu0 0
      %493 = vmatprep.subr.bf16.mxu0 0
      %494 = vmatpush1.bf16.xpose.msra.mxu0 0
      %495 = vmatprep.subr.bf16.mxu0 0
      %496 = vmatpush1.bf16.xpose.msra.mxu0 0
      %497 = vmatprep.subr.bf16.mxu0 0
      %498 = vmatpush1.bf16.xpose.msra.mxu0 0
      %499 = vmatprep.subr.bf16.mxu0 0
      %500 = vmatpush1.bf16.xpose.msra.mxu0 0
      %501 = vmatprep.subr.bf16.mxu0 0
      %502 = vmatpush1.bf16.xpose.msra.mxu0 0
      %503 = vmatprep.subr.bf16.mxu0 0
      %504 = vmatpush1.bf16.xpose.msra.mxu0 0
      %505 = vmatprep.subr.bf16.mxu0 0
      %506 = vmatpush1.bf16.xpose.msra.mxu0 0
      %507 = vmatprep.mubr.bf16.mxu0 0
      %508 = vmatmul.mubr.bf16.gmra.mrb[0].mxu0 %v470
      %v509 = vpop.f32.mrb[0].mxu0
      %v510 = vadd.f32 %v350, %v509
      %v511 = vpop.f32.mrb[0].mxu0
      %v512 = vpop.f32.mrb[0].mxu0
      %v513 = vpop.f32.mrb[0].mxu0
      %514 = vdwg.mxu0
      %v515 = vsel %vm356, %v510, -inf
      %516 = vmax.xlane.f32.xlu0 %v515
      %v517 = vpop.xlane.xlu0 %516
      %v518 = vsub.f32 %v510, %v517
      %v519 = vmul.f32 %v518, 1.442695
      %v520 = vpow.pop %v519
      %v521 = vsel %vm356, %v520, 0.0
      %522 = vadd.xlane.f32.xlu0 %v521
      %v523 = vpop.xlane.xlu0 %522
      %v524 = vpack.c.bf16 %v520, %v520
      %525 = vrot.lane.b32.xlu0 %v352, 56
      %v526 = vpop.permute.xlu0 %525
      %v528 = vsel %vm356, %v524, 0
      %v531 = vsel %vm418, %v526, 0
      %533 = vmatprep.subr.bf16.mxu0 0
      %534 = vmatpush1.bf16.msra.mxu0 %v531
      %535 = vmatprep.subr.bf16.mxu0 0
      %536 = vmatpush1.bf16.msra.mxu0 0
      %537 = vmatprep.subr.bf16.mxu0 0
      %538 = vmatpush1.bf16.msra.mxu0 0
      %539 = vmatprep.subr.bf16.mxu0 0
      %540 = vmatpush1.bf16.msra.mxu0 0
      %541 = vmatprep.subr.bf16.mxu0 0
      %542 = vmatpush1.bf16.msra.mxu0 0
      %543 = vmatprep.subr.bf16.mxu0 0
      %544 = vmatpush1.bf16.msra.mxu0 0
      %545 = vmatprep.subr.bf16.mxu0 0
      %546 = vmatpush1.bf16.msra.mxu0 0
      %547 = vmatprep.subr.bf16.mxu0 0
      %548 = vmatpush1.bf16.msra.mxu0 0
      %549 = vmatprep.subr.bf16.mxu0 0
      %550 = vmatpush1.bf16.msra.mxu0 0
      %551 = vmatprep.subr.bf16.mxu0 0
      %552 = vmatpush1.bf16.msra.mxu0 0
      %553 = vmatprep.subr.bf16.mxu0 0
      %554 = vmatpush1.bf16.msra.mxu0 0
      %555 = vmatprep.subr.bf16.mxu0 0
      %556 = vmatpush1.bf16.msra.mxu0 0
      %557 = vmatprep.subr.bf16.mxu0 0
      %558 = vmatpush1.bf16.msra.mxu0 0
      %559 = vmatprep.subr.bf16.mxu0 0
      %560 = vmatpush1.bf16.msra.mxu0 0
      %561 = vmatprep.subr.bf16.mxu0 0
      %562 = vmatpush1.bf16.msra.mxu0 0
      %563 = vmatprep.subr.bf16.mxu0 0
      %564 = vmatpush1.bf16.msra.mxu0 0
      %565 = vmatprep.mubr.bf16.mxu0 0
      %566 = vmatmul.mubr.bf16.gmra.mrb[0].mxu0 %v528
      %v567 = vpop.f32.mrb[0].mxu0
      %v568 = vadd.f32 0.0, %v567
      %v569 = vpop.f32.mrb[0].mxu0
      %v570 = vpop.f32.mrb[0].mxu0
      %v571 = vpop.f32.mrb[0].mxu0
      %572 = vdwg.mxu0
      %v573 = vrcp.pop %v523
      %v574 = vmul.f32 %v568, %v573
      %575 = vrot.lane.b32.xlu0 %v351, 112
      %v576 = vpop.permute.xlu0 %575
      %577 = vrot.lane.b32.xlu0 %v352, 80
      %v578 = vpop.permute.xlu0 %577
      %v580 = vsel %vm356, %v576, 0
      %v583 = vsel %vm356, %v578, 0
      %585 = vmatprep.subr.bf16.mxu0 0
      %586 = vmatpush1.bf16.xpose.msra.mxu0 %v583
      %587 = vmatprep.subr.bf16.mxu0 0
      %588 = vmatpush1.bf16.xpose.msra.mxu0 0
      %589 = vmatprep.subr.bf16.mxu0 0
      %590 = vmatpush1.bf16.xpose.msra.mxu0 0
      %591 = vmatprep.subr.bf16.mxu0 0
      %592 = vmatpush1.bf16.xpose.msra.mxu0 0
      %593 = vmatprep.subr.bf16.mxu0 0
      %594 = vmatpush1.bf16.xpose.msra.mxu0 0
      %595 = vmatprep.subr.bf16.mxu0 0
      %596 = vmatpush1.bf16.xpose.msra.mxu0 0
      %597 = vmatprep.subr.bf16.mxu0 0
      %598 = vmatpush1.bf16.xpose.msra.mxu0 0
      %599 = vmatprep.subr.bf16.mxu0 0
      %600 = vmatpush1.bf16.xpose.msra.mxu0 0
      %601 = vmatprep.subr.bf16.mxu0 0
      %602 = vmatpush1.bf16.xpose.msra.mxu0 0
      %603 = vmatprep.subr.bf16.mxu0 0
      %604 = vmatpush1.bf16.xpose.msra.mxu0 0
      %605 = vmatprep.subr.bf16.mxu0 0
      %606 = vmatpush1.bf16.xpose.msra.mxu0 0
      %607 = vmatprep.subr.bf16.mxu0 0
      %608 = vmatpush1.bf16.xpose.msra.mxu0 0
      %609 = vmatprep.subr.bf16.mxu0 0
      %610 = vmatpush1.bf16.xpose.msra.mxu0 0
      %611 = vmatprep.subr.bf16.mxu0 0
      %612 = vmatpush1.bf16.xpose.msra.mxu0 0
      %613 = vmatprep.subr.bf16.mxu0 0
      %614 = vmatpush1.bf16.xpose.msra.mxu0 0
      %615 = vmatprep.subr.bf16.mxu0 0
      %616 = vmatpush1.bf16.xpose.msra.mxu0 0
      %617 = vmatprep.mubr.bf16.mxu0 0
      %618 = vmatmul.mubr.bf16.gmra.mrb[0].mxu0 %v580
      %v619 = vpop.f32.mrb[0].mxu0
      %v620 = vadd.f32 %v350, %v619
      %v621 = vpop.f32.mrb[0].mxu0
      %v622 = vpop.f32.mrb[0].mxu0
      %v623 = vpop.f32.mrb[0].mxu0
      %624 = vdwg.mxu0
      %v625 = vsel %vm356, %v620, -inf
      %626 = vmax.xlane.f32.xlu0 %v625
      %v627 = vpop.xlane.xlu0 %626
      %v628 = vsub.f32 %v620, %v627
      %v629 = vmul.f32 %v628, 1.442695
      %v630 = vpow.pop %v629
      %v631 = vsel %vm356, %v630, 0.0
      %632 = vadd.xlane.f32.xlu0 %v631
      %v633 = vpop.xlane.xlu0 %632
      %v634 = vpack.c.bf16 %v630, %v630
      %635 = vrot.lane.b32.xlu0 %v352, 48
      %v636 = vpop.permute.xlu0 %635
      %v638 = vsel %vm356, %v634, 0
      %v641 = vsel %vm418, %v636, 0
      %643 = vmatprep.subr.bf16.mxu0 0
      %644 = vmatpush1.bf16.msra.mxu0 %v641
      %645 = vmatprep.subr.bf16.mxu0 0
      %646 = vmatpush1.bf16.msra.mxu0 0
      %647 = vmatprep.subr.bf16.mxu0 0
      %648 = vmatpush1.bf16.msra.mxu0 0
      %649 = vmatprep.subr.bf16.mxu0 0
      %650 = vmatpush1.bf16.msra.mxu0 0
      %651 = vmatprep.subr.bf16.mxu0 0
      %652 = vmatpush1.bf16.msra.mxu0 0
      %653 = vmatprep.subr.bf16.mxu0 0
      %654 = vmatpush1.bf16.msra.mxu0 0
      %655 = vmatprep.subr.bf16.mxu0 0
      %656 = vmatpush1.bf16.msra.mxu0 0
      %657 = vmatprep.subr.bf16.mxu0 0
      %658 = vmatpush1.bf16.msra.mxu0 0
      %659 = vmatprep.subr.bf16.mxu0 0
      %660 = vmatpush1.bf16.msra.mxu0 0
      %661 = vmatprep.subr.bf16.mxu0 0
      %662 = vmatpush1.bf16.msra.mxu0 0
      %663 = vmatprep.subr.bf16.mxu0 0
      %664 = vmatpush1.bf16.msra.mxu0 0
      %665 = vmatprep.subr.bf16.mxu0 0
      %666 = vmatpush1.bf16.msra.mxu0 0
      %667 = vmatprep.subr.bf16.mxu0 0
      %668 = vmatpush1.bf16.msra.mxu0 0
      %669 = vmatprep.subr.bf16.mxu0 0
      %670 = vmatpush1.bf16.msra.mxu0 0
      %671 = vmatprep.subr.bf16.mxu0 0
      %672 = vmatpush1.bf16.msra.mxu0 0
      %673 = vmatprep.subr.bf16.mxu0 0
      %674 = vmatpush1.bf16.msra.mxu0 0
      %675 = vmatprep.mubr.bf16.mxu0 0
      %676 = vmatmul.mubr.bf16.gmra.mrb[0].mxu0 %v638
      %v677 = vpop.f32.mrb[0].mxu0
      %v678 = vadd.f32 0.0, %v677
      %v679 = vpop.f32.mrb[0].mxu0
      %v680 = vpop.f32.mrb[0].mxu0
      %v681 = vpop.f32.mrb[0].mxu0
      %682 = vdwg.mxu0
      %v683 = vrcp.pop %v633
      %v684 = vmul.f32 %v678, %v683
      %685 = vrot.lane.b32.xlu0 %v351, 104
      %v686 = vpop.permute.xlu0 %685
      %687 = vrot.lane.b32.xlu0 %v352, 72
      %v688 = vpop.permute.xlu0 %687
      %v690 = vsel %vm356, %v686, 0
      %v693 = vsel %vm356, %v688, 0
      %695 = vmatprep.subr.bf16.mxu0 0
      %696 = vmatpush1.bf16.xpose.msra.mxu0 %v693
      %697 = vmatprep.subr.bf16.mxu0 0
      %698 = vmatpush1.bf16.xpose.msra.mxu0 0
      %699 = vmatprep.subr.bf16.mxu0 0
      %700 = vmatpush1.bf16.xpose.msra.mxu0 0
      %701 = vmatprep.subr.bf16.mxu0 0
      %702 = vmatpush1.bf16.xpose.msra.mxu0 0
      %703 = vmatprep.subr.bf16.mxu0 0
      %704 = vmatpush1.bf16.xpose.msra.mxu0 0
      %705 = vmatprep.subr.bf16.mxu0 0
      %706 = vmatpush1.bf16.xpose.msra.mxu0 0
      %707 = vmatprep.subr.bf16.mxu0 0
      %708 = vmatpush1.bf16.xpose.msra.mxu0 0
      %709 = vmatprep.subr.bf16.mxu0 0
      %710 = vmatpush1.bf16.xpose.msra.mxu0 0
      %711 = vmatprep.subr.bf16.mxu0 0
      %712 = vmatpush1.bf16.xpose.msra.mxu0 0
      %713 = vmatprep.subr.bf16.mxu0 0
      %714 = vmatpush1.bf16.xpose.msra.mxu0 0
      %715 = vmatprep.subr.bf16.mxu0 0
      %716 = vmatpush1.bf16.xpose.msra.mxu0 0
      %717 = vmatprep.subr.bf16.mxu0 0
      %718 = vmatpush1.bf16.xpose.msra.mxu0 0
      %719 = vmatprep.subr.bf16.mxu0 0
      %720 = vmatpush1.bf16.xpose.msra.mxu0 0
      %721 = vmatprep.subr.bf16.mxu0 0
      %722 = vmatpush1.bf16.xpose.msra.mxu0 0
      %723 = vmatprep.subr.bf16.mxu0 0
      %724 = vmatpush1.bf16.xpose.msra.mxu0 0
      %725 = vmatprep.subr.bf16.mxu0 0
      %726 = vmatpush1.bf16.xpose.msra.mxu0 0
      %727 = vmatprep.mubr.bf16.mxu0 0
      %728 = vmatmul.mubr.bf16.gmra.mrb[0].mxu0 %v690
      %v729 = vpop.f32.mrb[0].mxu0
      %v730 = vadd.f32 %v350, %v729
      %v731 = vpop.f32.mrb[0].mxu0
      %v732 = vpop.f32.mrb[0].mxu0
      %v733 = vpop.f32.mrb[0].mxu0
      %734 = vdwg.mxu0
      %v735 = vsel %vm356, %v730, -inf
      %736 = vmax.xlane.f32.xlu0 %v735
      %v737 = vpop.xlane.xlu0 %736
      %v738 = vsub.f32 %v730, %v737
      %v739 = vmul.f32 %v738, 1.442695
      %v740 = vpow.pop %v739
      %v741 = vsel %vm356, %v740, 0.0
      %742 = vadd.xlane.f32.xlu0 %v741
      %v743 = vpop.xlane.xlu0 %742
      %v744 = vpack.c.bf16 %v740, %v740
      %745 = vrot.lane.b32.xlu0 %v352, 40
      %v746 = vpop.permute.xlu0 %745
      %v748 = vsel %vm356, %v744, 0
      %v751 = vsel %vm418, %v746, 0
      %753 = vmatprep.subr.bf16.mxu0 0
      %754 = vmatpush1.bf16.msra.mxu0 %v751
      %755 = vmatprep.subr.bf16.mxu0 0
      %756 = vmatpush1.bf16.msra.mxu0 0
      %757 = vmatprep.subr.bf16.mxu0 0
      %758 = vmatpush1.bf16.msra.mxu0 0
      %759 = vmatprep.subr.bf16.mxu0 0
      %760 = vmatpush1.bf16.msra.mxu0 0
      %761 = vmatprep.subr.bf16.mxu0 0
      %762 = vmatpush1.bf16.msra.mxu0 0
      %763 = vmatprep.subr.bf16.mxu0 0
      %764 = vmatpush1.bf16.msra.mxu0 0
      %765 = vmatprep.subr.bf16.mxu0 0
      %766 = vmatpush1.bf16.msra.mxu0 0
      %767 = vmatprep.subr.bf16.mxu0 0
      %768 = vmatpush1.bf16.msra.mxu0 0
      %769 = vmatprep.subr.bf16.mxu0 0
      %770 = vmatpush1.bf16.msra.mxu0 0
      %771 = vmatprep.subr.bf16.mxu0 0
      %772 = vmatpush1.bf16.msra.mxu0 0
      %773 = vmatprep.subr.bf16.mxu0 0
      %774 = vmatpush1.bf16.msra.mxu0 0
      %775 = vmatprep.subr.bf16.mxu0 0
      %776 = vmatpush1.bf16.msra.mxu0 0
      %777 = vmatprep.subr.bf16.mxu0 0
      %778 = vmatpush1.bf16.msra.mxu0 0
      %779 = vmatprep.subr.bf16.mxu0 0
      %780 = vmatpush1.bf16.msra.mxu0 0
      %781 = vmatprep.subr.bf16.mxu0 0
      %782 = vmatpush1.bf16.msra.mxu0 0
      %783 = vmatprep.subr.bf16.mxu0 0
      %784 = vmatpush1.bf16.msra.mxu0 0
      %785 = vmatprep.mubr.bf16.mxu0 0
      %786 = vmatmul.mubr.bf16.gmra.mrb[0].mxu0 %v748
      %v787 = vpop.f32.mrb[0].mxu0
      %v788 = vadd.f32 0.0, %v787
      %v789 = vpop.f32.mrb[0].mxu0
      %v790 = vpop.f32.mrb[0].mxu0
      %v791 = vpop.f32.mrb[0].mxu0
      %792 = vdwg.mxu0
      %v793 = vrcp.pop %v743
      %v794 = vmul.f32 %v788, %v793
      %796 = vrot.lane.b32.xlu0 %v574, 8
      %v797 = vpop.permute.xlu0 %796
      %800 = vrot.lane.b32.xlu0 %v684, 16
      %v801 = vpop.permute.xlu0 %800
      %804 = vrot.lane.b32.xlu0 %v794, 24
      %v805 = vpop.permute.xlu0 %804
      %v807 = vsel %vm356, %v463, %v797
      %vm808 = vcmask 130048
      %v809 = vsel %vm808, %v807, %v801
      %vm810 = vcmask 195584
      %v811 = vsel %vm810, %v809, %v805
      %v812 = vpack.c.bf16 %v811, %v811
      %v813 = vld [vmem:[%s3] sm:$0xf]
      %v814 = vld [vmem:[%s3 + $0x4] sm:$0xf]
      %v815 = vld [vmem:[%s3 + $0x8] sm:$0xf]
      %v816 = vld [vmem:[%s3 + $0xc] sm:$0xf]
      %v817 = vld [vmem:[%s4] sm:$0x1]
      %v819 = vlaneseq
      %v820 = vshrl.u32 %v819, 7
      %v821 = vsub.s32 0, %v820
      %v822 = vrot.slane %v817, %v821
      %v828 = vunpack.c.l.b16 %v813
      %v829 = vunpack.c.l.b16 %v814
      %v830 = vunpack.c.l.b16 %v815
      %v831 = vunpack.c.l.b16 %v816
      %v832 = vpack.c.b16 %v829, %v828
      %v833 = vpack.c.b16 %v831, %v830
      %v837 = vsel %vm300, %v812, 0
      %839 = vmatprep.subr.bf16.mxu0 0
      %840 = vmatpush1.bf16.msra.mxu0 %v832
      %841 = vmatprep.subr.bf16.mxu0 0
      %842 = vmatpush1.bf16.msra.mxu0 %v833
      %843 = vmatprep.subr.bf16.mxu0 0
      %844 = vmatpush1.bf16.msra.mxu0 0
      %845 = vmatprep.subr.bf16.mxu0 0
      %846 = vmatpush1.bf16.msra.mxu0 0
      %847 = vmatprep.subr.bf16.mxu0 0
      %848 = vmatpush1.bf16.msra.mxu0 0
      %849 = vmatprep.subr.bf16.mxu0 0
      %850 = vmatpush1.bf16.msra.mxu0 0
      %851 = vmatprep.subr.bf16.mxu0 0
      %852 = vmatpush1.bf16.msra.mxu0 0
      %853 = vmatprep.subr.bf16.mxu0 0
      %854 = vmatpush1.bf16.msra.mxu0 0
      %855 = vmatprep.subr.bf16.mxu0 0
      %856 = vmatpush1.bf16.msra.mxu0 0
      %857 = vmatprep.subr.bf16.mxu0 0
      %858 = vmatpush1.bf16.msra.mxu0 0
      %859 = vmatprep.subr.bf16.mxu0 0
      %860 = vmatpush1.bf16.msra.mxu0 0
      %861 = vmatprep.subr.bf16.mxu0 0
      %862 = vmatpush1.bf16.msra.mxu0 0
      %863 = vmatprep.subr.bf16.mxu0 0
      %864 = vmatpush1.bf16.msra.mxu0 0
      %865 = vmatprep.subr.bf16.mxu0 0
      %866 = vmatpush1.bf16.msra.mxu0 0
      %867 = vmatprep.subr.bf16.mxu0 0
      %868 = vmatpush1.bf16.msra.mxu0 0
      %869 = vmatprep.subr.bf16.mxu0 0
      %870 = vmatpush1.bf16.msra.mxu0 0
      %871 = vmatprep.mubr.bf16.mxu0 0
      %872 = vmatmul.mubr.bf16.gmra.mrb[0].mxu0 %v837
      %v873 = vpop.f32.mrb[0].mxu0
      %v874 = vadd.f32 %v822, %v873
      %v875 = vpop.f32.mrb[0].mxu0
      %v876 = vpop.f32.mrb[0].mxu0
      %v877 = vpop.f32.mrb[0].mxu0
      %878 = vdwg.mxu0
      %v879 = vadd.f32 %v275, %v874
      %v880 = vld [vmem:[%s5] sm:$0x1]
      %v881 = vld [vmem:[%s6] sm:$0x1]
      %v882 = vsel %vm300, %v879, 0.0
      %883 = vadd.xlane.f32.xlu0 %v882
      %v884 = vpop.xlane.xlu0 %883
      %v885 = vrcp.pop 32.0
      %v886 = vmul.f32 %v884, %v885
      %v887 = vsub.f32 %v879, %v886
      %v888 = vmul.f32 %v887, %v887
      %v889 = vsel %vm300, %v888, 0.0
      %890 = vadd.xlane.f32.xlu0 %v889
      %v891 = vpop.xlane.xlu0 %890
      %v892 = vmul.f32 %v891, %v885
      %v893 = vadd.f32 %v892, 1e-05
      %v894 = vrsqrt.pop %v893
      %v895 = vmul.f32 %v887, %v894
      %v897 = vlaneseq
      %v898 = vshrl.u32 %v897, 7
      %v899 = vsub.s32 0, %v898
      %v900 = vrot.slane %v880, %v899
      %v902 = vmul.f32 %v895, %v900
      %v904 = vlaneseq
      %v905 = vshrl.u32 %v904, 7
      %v906 = vsub.s32 0, %v905
      %v907 = vrot.slane %v881, %v906
      %v909 = vadd.f32 %v902, %v907
      %910 = vst.msk [vmem:[%s273] sm:$0xff] %vm300, %v909
      %p911 = scmp.lt.s32.totalorder %s18, 1
      %s912 = scalar_select %p911, %s18, 1
      %s913 = smul.addr %s912, 8
      %s914 = scalar_lea.vmem %s7, %s913
      // Predicated region
      $region49: #{transformer_decoder.8} parent=47 // pred_check
        %p915 = pneg %p188
      $region50: #{transformer_decoder.8} parent=47 // pred_check_branch
        %917 = sbr.rel (%p915) target = $region52
      $region51: #{transformer_decoder.8} parent=47 // pred_region
        _
      $region52: #{transformer_decoder.8} parent=47 // pred_fallthru
        _
    $region48: #{transformer_decoder.8} parent=5 // pred_fallthru
      _
    %p918 = scmp.le.s32.totalorder 2, %s13
    // Predicated region
    $region53: #{transformer_decoder.8} parent=5 // pred_check
      %p919 = pneg %p918
    $region54: #{transformer_decoder.8} parent=5 // pred_check_branch
      %921 = sbr.rel (%p919) target = $region56
    $region55: #{transformer_decoder.8} parent=5 // pred_region
      %s922 = ssub.s32 %s13, 2
      // Predicated region
      $region57: #{transformer_decoder.8} parent=55 // pred_check
        %p923 = pneg %p194
      $region58: #{transformer_decoder.8} parent=55 // pred_check_branch
        %925 = sbr.rel (%p923) target = $region60
      $region59: #{transformer_decoder.8} parent=55 // pred_region
        %p926 = scmp.lt.s32.totalorder %s19, 1
        %s927 = scalar_select %p926, %s19, 1
        %s928 = smul.addr %s927, 8
        %s929 = scalar_lea.vmem %s7, %s928
      $region60: #{transformer_decoder.8} parent=55 // pred_fallthru
        _
    $region56: #{transformer_decoder.8} parent=5 // pred_fallthru
      _
  $region6: #{transformer_decoder.8} parent=0 // loop_footer
    %s17 = sadd.s32 1, %s13
  $region7: #{transformer_decoder.8} parent=0 // loop_footer_branch
    %12 = sbr.rel target = $region3
  $region8: #{transformer_decoder.8} parent=0 // loop_exit
    _

// kernel: transformer_decoder.9
$region0: #{transformer_decoder.9}
  #allocation0 [shape = 'u32[]', space=smem, size = 0x4, offset = 0x4, fixed_abs, tag = 'smem constant byte address 0x4 - core index']
  #allocation1 [shape = 'u32[144,128]{1,0:T(1,128)}', space=vmem, size = 0x12000, scoped, tag = 'internal scratch']
  %s0 = inlined_call_operand.vmem [shape: f32[2,8,32], index: 0, kind: input, shape index: {}]
  %s1 = inlined_call_operand.vmem [shape: bf16[2,8,64], index: 1, kind: input, shape index: {}]
  %s2 = inlined_call_operand.vmem [shape: bf16[32,32], index: 2, kind: input, shape index: {}]
  %s3 = inlined_call_operand.vmem [shape: f32[1,32], index: 3, kind: input, shape index: {}]
  %s4 = inlined_call_operand.vmem [shape: bf16[32,32], index: 4, kind: input, shape index: {}]
  %s5 = inlined_call_operand.vmem [shape: f32[1,32], index: 5, kind: input, shape index: {}]
  %s6 = inlined_call_operand.vmem [shape: f32[1,32], index: 6, kind: input, shape index: {}]
  %s7 = inlined_call_operand.vmem [shape: f32[1,32], index: 7, kind: input, shape index: {}]
  %s8 = inlined_call_operand.vmem [shape: f32[2,8,32], index: 8, kind: output, shape index: {}]
  %s9 = sld [smem:[#allocation0]]
  $region65: #{transformer_decoder.9} parent=0
    _
  %s11 = ssub.s32 1, %s9
  %s12 = scalar_select 0, %s11, %s9
  loop: start=0, step=1, limit=4
  $region2: #{transformer_decoder.9} parent=0 // loop_pre_header
    _
  $region3: #{transformer_decoder.9} parent=0 // loop_header
    %s14 = sphi 0, %s18
    %p15 = scmp.ge.s32.totalorder %s14, 4
    %s21 = sphi 0, %s33
    %s22 = sphi 0, %s29
    %s23 = sphi 0, %s21
    %s24 = sphi 0, %s22
    %s25 = sphi 0, %s23
    %s26 = sphi 0, %s24
    %s38 = sphi 0, %s40
    %s41 = sphi 0, %s38
    %s42 = sphi 0, %s41
    %s58 = sphi 0, %s42
    %s64 = sphi 0, %s66
    %s67 = sphi 0, %s64
    %s68 = sphi 0, %s67
    %s84 = sphi 0, %s68
    %s88 = sphi 0, %s88
    %s90 = sphi 0, %s88
    %s91 = sphi 0, %s90
    %s105 = sphi 0, %s91
    %s109 = sphi 0, %s109
    %s111 = sphi 0, %s109
    %s112 = sphi 0, %s111
    %s126 = sphi 0, %s112
    %s130 = sphi 0, %s130
    %s132 = sphi 0, %s130
    %s133 = sphi 0, %s132
    %s147 = sphi 0, %s133
    %s151 = sphi 0, %s151
    %s153 = sphi 0, %s151
    %s154 = sphi 0, %s153
    %s168 = sphi 0, %s154
    %s172 = sphi 0, %s172
    %s174 = sphi 0, %s172
    %s175 = sphi 0, %s174
    %s189 = sphi 0, %s175
    %s193 = sphi 0, %s193
    %s195 = sphi 0, %s193
    %s196 = sphi 0, %s195
    %s210 = sphi 0, %s196
    %s218 = sphi 0, %s220
    %s221 = sphi 0, %s218
    %s222 = sphi 0, %s221
    %s238 = sphi 0, %s222
  $region4: #{transformer_decoder.9} parent=0 // loop_header_branch
    %17 = sbr.rel (%p15) target = $region8
  $region5: #{transformer_decoder.9} parent=0 // loop_body
    %s19 = ssub.s32 %s14, 1
    %s20 = ssub.s32 %s14, 2
    %s27 = sadd.s32 1, %s22
    %p28 = scmp.ge.s32.totalorder %s27, 1
    %s29 = scalar_select %p28, 0, %s27
    %s30 = sadd.s32 1, %s21
    %s31 = scalar_select %p28, %s30, %s21
    %p32 = scmp.ge.s32.totalorder %s31, 2
    %s33 = scalar_select %p32, 0, %s31
    %s34 = ssub.s32 %s21, %s33
    %s35 = ssub.s32 %s22, %s29
    %s36 = sor.u32 %s34, %s35
    %p37 = scmp.eq.s32.totalorder %s36, 0
    %s39 = sadd.s32 %s38, 1
    %s40 = scalar_select %p37, %s38, %s39
    %p43 = pneg %p37
    %p44 = scmp.eq.s32.totalorder %s14, 1
    %p45 = por %p43, %p44
    %p46 = scmp.ne.s32.totalorder %s38, %s41
    %p47 = scmp.eq.s32.totalorder %s14, 0
    %p48 = por %p46, %p47
    %p49 = scmp.ne.s32.totalorder %s38, %s41
    %p50 = scmp.eq.s32.totalorder %s19, 1
    %p51 = por %p49, %p50
    %p52 = scmp.ne.s32.totalorder %s41, %s42
    %p53 = scmp.eq.s32.totalorder %s19, 0
    %p54 = por %p52, %p53
    %p55 = scmp.ne.s32.totalorder %s41, %s42
    %p56 = scmp.eq.s32.totalorder %s20, 1
    %p57 = por %p55, %p56
    %p59 = scmp.ne.s32.totalorder %s42, %s58
    %p60 = scmp.eq.s32.totalorder %s20, 0
    %p61 = por %p59, %p60
    %s62 = ssub.s32 %s21, %s33
    %p63 = scmp.eq.s32.totalorder %s62, 0
    %s65 = sadd.s32 %s64, 1
    %s66 = scalar_select %p63, %s64, %s65
    %p69 = pneg %p63
    %p70 = scmp.eq.s32.totalorder %s14, 1
    %p71 = por %p69, %p70
    %p72 = scmp.ne.s32.totalorder %s64, %s67
    %p73 = scmp.eq.s32.totalorder %s14, 0
    %p74 = por %p72, %p73
    %p75 = scmp.ne.s32.totalorder %s64, %s67
    %p76 = scmp.eq.s32.totalorder %s19, 1
    %p77 = por %p75, %p76
    %p78 = scmp.ne.s32.totalorder %s67, %s68
    %p79 = scmp.eq.s32.totalorder %s19, 0
    %p80 = por %p78, %p79
    %p81 = scmp.ne.s32.totalorder %s67, %s68
    %p82 = scmp.eq.s32.totalorder %s20, 1
    %p83 = por %p81, %p82
    %p85 = scmp.ne.s32.totalorder %s68, %s84
    %p86 = scmp.eq.s32.totalorder %s20, 0
    %p87 = por %p85, %p86
    %s89 = sadd.s32 %s88, 1
    %p92 = scmp.eq.s32.totalorder %s14, 1
    %p93 = scmp.ne.s32.totalorder %s88, %s90
    %p94 = scmp.eq.s32.totalorder %s14, 0
    %p95 = por %p93, %p94
    %p96 = scmp.ne.s32.totalorder %s88, %s90
    %p97 = scmp.eq.s32.totalorder %s19, 1
    %p98 = por %p96, %p97
    %p99 = scmp.ne.s32.totalorder %s90, %s91
    %p100 = scmp.eq.s32.totalorder %s19, 0
    %p101 = por %p99, %p100
    %p102 = scmp.ne.s32.totalorder %s90, %s91
    %p103 = scmp.eq.s32.totalorder %s20, 1
    %p104 = por %p102, %p103
    %p106 = scmp.ne.s32.totalorder %s91, %s105
    %p107 = scmp.eq.s32.totalorder %s20, 0
    %p108 = por %p106, %p107
    %s110 = sadd.s32 %s109, 1
    %p113 = scmp.eq.s32.totalorder %s14, 1
    %p114 = scmp.ne.s32.totalorder %s109, %s111
    %p115 = scmp.eq.s32.totalorder %s14, 0
    %p116 = por %p114, %p115
    %p117 = scmp.ne.s32.totalorder %s109, %s111
    %p118 = scmp.eq.s32.totalorder %s19, 1
    %p119 = por %p117, %p118
    %p120 = scmp.ne.s32.totalorder %s111, %s112
    %p121 = scmp.eq.s32.totalorder %s19, 0
    %p122 = por %p120, %p121
    %p123 = scmp.ne.s32.totalorder %s111, %s112
    %p124 = scmp.eq.s32.totalorder %s20, 1
    %p125 = por %p123, %p124
    %p127 = scmp.ne.s32.totalorder %s112, %s126
    %p128 = scmp.eq.s32.totalorder %s20, 0
    %p129 = por %p127, %p128
    %s131 = sadd.s32 %s130, 1
    %p134 = scmp.eq.s32.totalorder %s14, 1
    %p135 = scmp.ne.s32.totalorder %s130, %s132
    %p136 = scmp.eq.s32.totalorder %s14, 0
    %p137 = por %p135, %p136
    %p138 = scmp.ne.s32.totalorder %s130, %s132
    %p139 = scmp.eq.s32.totalorder %s19, 1
    %p140 = por %p138, %p139
    %p141 = scmp.ne.s32.totalorder %s132, %s133
    %p142 = scmp.eq.s32.totalorder %s19, 0
    %p143 = por %p141, %p142
    %p144 = scmp.ne.s32.totalorder %s132, %s133
    %p145 = scmp.eq.s32.totalorder %s20, 1
    %p146 = por %p144, %p145
    %p148 = scmp.ne.s32.totalorder %s133, %s147
    %p149 = scmp.eq.s32.totalorder %s20, 0
    %p150 = por %p148, %p149
    %s152 = sadd.s32 %s151, 1
    %p155 = scmp.eq.s32.totalorder %s14, 1
    %p156 = scmp.ne.s32.totalorder %s151, %s153
    %p157 = scmp.eq.s32.totalorder %s14, 0
    %p158 = por %p156, %p157
    %p159 = scmp.ne.s32.totalorder %s151, %s153
    %p160 = scmp.eq.s32.totalorder %s19, 1
    %p161 = por %p159, %p160
    %p162 = scmp.ne.s32.totalorder %s153, %s154
    %p163 = scmp.eq.s32.totalorder %s19, 0
    %p164 = por %p162, %p163
    %p165 = scmp.ne.s32.totalorder %s153, %s154
    %p166 = scmp.eq.s32.totalorder %s20, 1
    %p167 = por %p165, %p166
    %p169 = scmp.ne.s32.totalorder %s154, %s168
    %p170 = scmp.eq.s32.totalorder %s20, 0
    %p171 = por %p169, %p170
    %s173 = sadd.s32 %s172, 1
    %p176 = scmp.eq.s32.totalorder %s14, 1
    %p177 = scmp.ne.s32.totalorder %s172, %s174
    %p178 = scmp.eq.s32.totalorder %s14, 0
    %p179 = por %p177, %p178
    %p180 = scmp.ne.s32.totalorder %s172, %s174
    %p181 = scmp.eq.s32.totalorder %s19, 1
    %p182 = por %p180, %p181
    %p183 = scmp.ne.s32.totalorder %s174, %s175
    %p184 = scmp.eq.s32.totalorder %s19, 0
    %p185 = por %p183, %p184
    %p186 = scmp.ne.s32.totalorder %s174, %s175
    %p187 = scmp.eq.s32.totalorder %s20, 1
    %p188 = por %p186, %p187
    %p190 = scmp.ne.s32.totalorder %s175, %s189
    %p191 = scmp.eq.s32.totalorder %s20, 0
    %p192 = por %p190, %p191
    %s194 = sadd.s32 %s193, 1
    %p197 = scmp.eq.s32.totalorder %s14, 1
    %p198 = scmp.ne.s32.totalorder %s193, %s195
    %p199 = scmp.eq.s32.totalorder %s14, 0
    %p200 = por %p198, %p199
    %p201 = scmp.ne.s32.totalorder %s193, %s195
    %p202 = scmp.eq.s32.totalorder %s19, 1
    %p203 = por %p201, %p202
    %p204 = scmp.ne.s32.totalorder %s195, %s196
    %p205 = scmp.eq.s32.totalorder %s19, 0
    %p206 = por %p204, %p205
    %p207 = scmp.ne.s32.totalorder %s195, %s196
    %p208 = scmp.eq.s32.totalorder %s20, 1
    %p209 = por %p207, %p208
    %p211 = scmp.ne.s32.totalorder %s196, %s210
    %p212 = scmp.eq.s32.totalorder %s20, 0
    %p213 = por %p211, %p212
    %s214 = ssub.s32 %s21, %s33
    %s215 = ssub.s32 %s22, %s29
    %s216 = sor.u32 %s214, %s215
    %p217 = scmp.eq.s32.totalorder %s216, 0
    %s219 = sadd.s32 %s218, 1
    %s220 = scalar_select %p217, %s218, %s219
    %p223 = pneg %p217
    %p224 = scmp.eq.s32.totalorder %s14, 1
    %p225 = por %p223, %p224
    %p226 = scmp.ne.s32.totalorder %s218, %s221
    %p227 = scmp.eq.s32.totalorder %s14, 0
    %p228 = por %p226, %p227
    %p229 = scmp.ne.s32.totalorder %s218, %s221
    %p230 = scmp.eq.s32.totalorder %s19, 1
    %p231 = por %p229, %p230
    %p232 = scmp.ne.s32.totalorder %s221, %s222
    %p233 = scmp.eq.s32.totalorder %s19, 0
    %p234 = por %p232, %p233
    %p235 = scmp.ne.s32.totalorder %s221, %s222
    %p236 = scmp.eq.s32.totalorder %s20, 1
    %p237 = por %p235, %p236
    %p239 = scmp.ne.s32.totalorder %s222, %s238
    %p240 = scmp.eq.s32.totalorder %s20, 0
    %p241 = por %p239, %p240
    %p242 = scmp.le.s32.totalorder 1, %s14
    %p243 = scmp.lt.s32.totalorder %s14, 3
    %p244 = pnand %p242, %p243
    %p245 = pneg %p244
    // Predicated region
    $region9: #{transformer_decoder.9} parent=5 // pred_check
      _
    $region10: #{transformer_decoder.9} parent=5 // pred_check_branch
      %247 = sbr.rel (%p244) target = $region12
    $region11: #{transformer_decoder.9} parent=5 // pred_region
      %s248 = ssub.s32 %s14, 1
      // Predicated region
      $region13: #{transformer_decoder.9} parent=11 // pred_check
        %p249 = pneg %p101
      $region14: #{transformer_decoder.9} parent=11 // pred_check_branch
        %251 = sbr.rel (%p249) target = $region16
      $region15: #{transformer_decoder.9} parent=11 // pred_region
        _
      $region16: #{transformer_decoder.9} parent=11 // pred_fallthru
        _
      // Predicated region
      $region17: #{transformer_decoder.9} parent=11 // pred_check
        %p252 = pneg %p122
      $region18: #{transformer_decoder.9} parent=11 // pred_check_branch
        %254 = sbr.rel (%p252) target = $region20
      $region19: #{transformer_decoder.9} parent=11 // pred_region
        _
      $region20: #{transformer_decoder.9} parent=11 // pred_fallthru
        _
      // Predicated region
      $region21: #{transformer_decoder.9} parent=11 // pred_check
        %p255 = pneg %p143
      $region22: #{transformer_decoder.9} parent=11 // pred_check_branch
        %257 = sbr.rel (%p255) target = $region24
      $region23: #{transformer_decoder.9} parent=11 // pred_region
        _
      $region24: #{transformer_decoder.9} parent=11 // pred_fallthru
        _
      // Predicated region
      $region25: #{transformer_decoder.9} parent=11 // pred_check
        %p258 = pneg %p164
      $region26: #{transformer_decoder.9} parent=11 // pred_check_branch
        %260 = sbr.rel (%p258) target = $region28
      $region27: #{transformer_decoder.9} parent=11 // pred_region
        _
      $region28: #{transformer_decoder.9} parent=11 // pred_fallthru
        _
      // Predicated region
      $region29: #{transformer_decoder.9} parent=11 // pred_check
        %p261 = pneg %p185
      $region30: #{transformer_decoder.9} parent=11 // pred_check_branch
        %263 = sbr.rel (%p261) target = $region32
      $region31: #{transformer_decoder.9} parent=11 // pred_region
        _
      $region32: #{transformer_decoder.9} parent=11 // pred_fallthru
        _
      // Predicated region
      $region33: #{transformer_decoder.9} parent=11 // pred_check
        %p264 = pneg %p206
      $region34: #{transformer_decoder.9} parent=11 // pred_check_branch
        %266 = sbr.rel (%p264) target = $region36
      $region35: #{transformer_decoder.9} parent=11 // pred_region
        _
      $region36: #{transformer_decoder.9} parent=11 // pred_fallthru
        _
    $region12: #{transformer_decoder.9} parent=5 // pred_fallthru
      _
    %p267 = scmp.lt.s32.totalorder %s14, 2
    // Predicated region
    $region37: #{transformer_decoder.9} parent=5 // pred_check
      %p268 = pneg %p267
    $region38: #{transformer_decoder.9} parent=5 // pred_check_branch
      %270 = sbr.rel (%p268) target = $region40
    $region39: #{transformer_decoder.9} parent=5 // pred_region
      // Predicated region
      $region41: #{transformer_decoder.9} parent=39 // pred_check
        %p271 = pneg %p48
      $region42: #{transformer_decoder.9} parent=39 // pred_check_branch
        %273 = sbr.rel (%p271) target = $region44
      $region43: #{transformer_decoder.9} parent=39 // pred_region
        %p274 = scmp.lt.s32.totalorder %s21, 1
        %s275 = scalar_select %p274, %s21, 1
        %p276 = scmp.lt.s32.totalorder %s22, 0
        %s277 = scalar_select %p276, %s22, 0
        %s278 = sadd.s32 %s277, %s275
        %s279 = smul.addr %s278, 8
        %s280 = scalar_lea.vmem %s0, %s279
      $region44: #{transformer_decoder.9} parent=39 // pred_fallthru
        _
      // Predicated region
      $region45: #{transformer_decoder.9} parent=39 // pred_check
        %p281 = pneg %p74
      $region46: #{transformer_decoder.9} parent=39 // pred_check_branch
        %283 = sbr.rel (%p281) target = $region48
      $region47: #{transformer_decoder.9} parent=39 // pred_region
        %p284 = scmp.lt.s32.totalorder %s21, 1
        %s285 = scalar_select %p284, %s21, 1
        %s286 = smul.addr %s285, 4
        %s287 = scalar_lea.vmem %s1, %s286
      $region48: #{transformer_decoder.9} parent=39 // pred_fallthru
        _
    $region40: #{transformer_decoder.9} parent=5 // pred_fallthru
      _
    %p288 = scmp.le.s32.totalorder 1, %s14
    %p289 = scmp.lt.s32.totalorder %s14, 3
    %p290 = pnand %p288, %p289
    %p291 = pneg %p290
    // Predicated region
    $region49: #{transformer_decoder.9} parent=5 // pred_check
      _
    $region50: #{transformer_decoder.9} parent=5 // pred_check_branch
      %293 = sbr.rel (%p290) target = $region52
    $region51: #{transformer_decoder.9} parent=5 // pred_region
      %s294 = ssub.s32 %s14, 1
      %p295 = scmp.lt.s32.totalorder %s23, 1
      %s296 = scalar_select %p295, %s23, 1
      %p297 = scmp.lt.s32.totalorder %s24, 0
      %s298 = scalar_select %p297, %s24, 0
      %s299 = sadd.s32 %s298, %s296
      %s300 = smul.addr %s299, 8
      %s301 = scalar_lea.vmem %s0, %s300
      %p302 = pneg %p54
      %p303 = pneg %p51
      %p304 = scmp.lt.s32.totalorder %s23, 1
      %s305 = scalar_select %p304, %s23, 1
      %s306 = smul.addr %s305, 4
      %s307 = scalar_lea.vmem %s1, %s306
      %p308 = pneg %p80
      %p309 = pneg %p77
      %p310 = pneg %p101
      %p311 = pneg %p98
      %p312 = pneg %p122
      %p313 = pneg %p119
      %p314 = pneg %p143
      %p315 = pneg %p140
      %p316 = pneg %p164
      %p317 = pneg %p161
      %p318 = pneg %p185
      %p319 = pneg %p182
      %p320 = pneg %p206
      %p321 = pneg %p203
      %p322 = pneg %p234
      %p323 = pneg %p231
      %p324 = scmp.lt.s32.totalorder %s23, 1
      %s325 = scalar_select %p324, %s23, 1
      %p326 = scmp.lt.s32.totalorder %s24, 0
      %s327 = scalar_select %p326, %s24, 0
      %s328 = sadd.s32 %s327, %s325
      %s329 = smul.addr %s328, 8
      %s330 = scalar_lea.vmem %s8, %s329
      %p331 = scmp.lt.s32.totalorder %s23, 1
      %s332 = scalar_select %p331, %s23, 1
      %p333 = scmp.lt.s32.totalorder %s24, 0
      %s334 = scalar_select %p333, %s24, 0
      %s335 = sadd.s32 %s334, %s332
      %s336 = smul.addr %s335, 8
      %s337 = scalar_lea.vmem %s0, %s336
      %p338 = scmp.lt.s32.totalorder %s23, 1
      %s339 = scalar_select %p338, %s23, 1
      %s340 = smul.addr %s339, 4
      %s341 = scalar_lea.vmem %s1, %s340
      %p342 = scmp.lt.s32.totalorder %s23, 1
      %s343 = scalar_select %p342, %s23, 1
      %p344 = scmp.lt.s32.totalorder %s24, 0
      %s345 = scalar_select %p344, %s24, 0
      %s346 = sadd.s32 %s345, %s343
      %s347 = smul.addr %s346, 8
      %s348 = scalar_lea.vmem %s8, %s347
      %v350 = vld [vmem:[%s337] sm:$0xff]
      %v351 = vld [vmem:[%s341] sm:$0xf]
      %v352 = vunpack.c.l.bf16 %v351
      %v353 = vpack.c.bf16 %v350, %v350
      %v354 = vld [vmem:[%s2] sm:$0xf]
      %v355 = vld [vmem:[%s2 + $0x4] sm:$0xf]
      %v356 = vld [vmem:[%s2 + $0x8] sm:$0xf]
      %v357 = vld [vmem:[%s2 + $0xc] sm:$0xf]
      %v358 = vld [vmem:[%s3] sm:$0x1]
      %v360 = vlaneseq
      %v361 = vshrl.u32 %v360, 7
      %v362 = vsub.s32 0, %v361
      %v363 = vrot.slane %v358, %v362
      %v369 = vunpack.c.l.b16 %v354
      %v370 = vunpack.c.l.b16 %v355
      %v371 = vunpack.c.l.b16 %v356
      %v372 = vunpack.c.l.b16 %v357
      %v373 = vpack.c.b16 %v370, %v369
      %v374 = vpack.c.b16 %v372, %v371
      %vm377 = vcmask 261120
      %v379 = vsel %vm377, %v353, 0
      %381 = vmatprep.subr.bf16.mxu0 0
      %382 = vmatpush1.bf16.msra.mxu0 %v373
      %383 = vmatprep.subr.bf16.mxu0 0
      %384 = vmatpush1.bf16.msra.mxu0 %v374
      %385 = vmatprep.subr.bf16.mxu0 0
      %386 = vmatpush1.bf16.msra.mxu0 0
      %387 = vmatprep.subr.bf16.mxu0 0
      %388 = vmatpush1.bf16.msra.mxu0 0
      %389 = vmatprep.subr.bf16.mxu0 0
      %390 = vmatpush1.bf16.msra.mxu0 0
      %391 = vmatprep.subr.bf16.mxu0 0
      %392 = vmatpush1.bf16.msra.mxu0 0
      %393 = vmatprep.subr.bf16.mxu0 0
      %394 = vmatpush1.bf16.msra.mxu0 0
      %395 = vmatprep.subr.bf16.mxu0 0
      %396 = vmatpush1.bf16.msra.mxu0 0
      %397 = vmatprep.subr.bf16.mxu0 0
      %398 = vmatpush1.bf16.msra.mxu0 0
      %399 = vmatprep.subr.bf16.mxu0 0
      %400 = vmatpush1.bf16.msra.mxu0 0
      %401 = vmatprep.subr.bf16.mxu0 0
      %402 = vmatpush1.bf16.msra.mxu0 0
      %403 = vmatprep.subr.bf16.mxu0 0
      %404 = vmatpush1.bf16.msra.mxu0 0
      %405 = vmatprep.subr.bf16.mxu0 0
      %406 = vmatpush1.bf16.msra.mxu0 0
      %407 = vmatprep.subr.bf16.mxu0 0
      %408 = vmatpush1.bf16.msra.mxu0 0
      %409 = vmatprep.subr.bf16.mxu0 0
      %410 = vmatpush1.bf16.msra.mxu0 0
      %411 = vmatprep.subr.bf16.mxu0 0
      %412 = vmatpush1.bf16.msra.mxu0 0
      %413 = vmatprep.mubr.bf16.mxu0 0
      %414 = vmatmul.mubr.bf16.gmra.mrb[0].mxu0 %v379
      %v415 = vpop.f32.mrb[0].mxu0
      %v416 = vadd.f32 %v363, %v415
      %v417 = vpop.f32.mrb[0].mxu0
      %v418 = vpop.f32.mrb[0].mxu0
      %v419 = vpop.f32.mrb[0].mxu0
      %420 = vdwg.mxu0
      %v421 = vmul.f32 %v416, 0.35355338
      %v422 = vpack.c.bf16 %v421, %v421
      %v423 = vpack.c.bf16 %v352, %v352
      %vm424 = vcmask 64512
      %v426 = vsel %vm424, %v422, 0
      %v429 = vsel %vm424, %v423, 0
      %431 = vmatprep.subr.bf16.mxu0 0
      %432 = vmatpush1.bf16.xpose.msra.mxu0 %v429
      %433 = vmatprep.subr.bf16.mxu0 0
      %434 = vmatpush1.bf16.xpose.msra.mxu0 0
      %435 = vmatprep.subr.bf16.mxu0 0
      %436 = vmatpush1.bf16.xpose.msra.mxu0 0
      %437 = vmatprep.subr.bf16.mxu0 0
      %438 = vmatpush1.bf16.xpose.msra.mxu0 0
      %439 = vmatprep.subr.bf16.mxu0 0
      %440 = vmatpush1.bf16.xpose.msra.mxu0 0
      %441 = vmatprep.subr.bf16.mxu0 0
      %442 = vmatpush1.bf16.xpose.msra.mxu0 0
      %443 = vmatprep.subr.bf16.mxu0 0
      %444 = vmatpush1.bf16.xpose.msra.mxu0 0
      %445 = vmatprep.subr.bf16.mxu0 0
      %446 = vmatpush1.bf16.xpose.msra.mxu0 0
      %447 = vmatprep.subr.bf16.mxu0 0
      %448 = vmatpush1.bf16.xpose.msra.mxu0 0
      %449 = vmatprep.subr.bf16.mxu0 0
      %450 = vmatpush1.bf16.xpose.msra.mxu0 0
      %451 = vmatprep.subr.bf16.mxu0 0
      %452 = vmatpush1.bf16.xpose.msra.mxu0 0
      %453 = vmatprep.subr.bf16.mxu0 0
      %454 = vmatpush1.bf16.xpose.msra.mxu0 0
      %455 = vmatprep.subr.bf16.mxu0 0
      %456 = vmatpush1.bf16.xpose.msra.mxu0 0
      %457 = vmatprep.subr.bf16.mxu0 0
      %458 = vmatpush1.bf16.xpose.msra.mxu0 0
      %459 = vmatprep.subr.bf16.mxu0 0
      %460 = vmatpush1.bf16.xpose.msra.mxu0 0
      %461 = vmatprep.subr.bf16.mxu0 0
      %462 = vmatpush1.bf16.xpose.msra.mxu0 0
      %463 = vmatprep.mubr.bf16.mxu0 0
      %464 = vmatmul.mubr.bf16.gmra.mrb[0].mxu0 %v426
      %v465 = vpop.f32.mrb[0].mxu0
      %v466 = vadd.f32 0.0, %v465
      %v467 = vpop.f32.mrb[0].mxu0
      %v468 = vpop.f32.mrb[0].mxu0
      %v469 = vpop.f32.mrb[0].mxu0
      %470 = vdwg.mxu0
      %v471 = vsel %vm424, %v466, -inf
      %472 = vmax.xlane.f32.xlu0 %v471
      %v473 = vpop.xlane.xlu0 %472
      %v474 = vsub.f32 %v466, %v473
      %v475 = vmul.f32 %v474, 1.442695
      %v476 = vpow.pop %v475
      %v477 = vsel %vm424, %v476, 0.0
      %478 = vadd.xlane.f32.xlu0 %v477
      %v479 = vpop.xlane.xlu0 %478
      %v480 = vpack.c.bf16 %v476, %v476
      %482 = vrot.lane.b32.xlu0 %v423, 96
      %v483 = vpop.permute.xlu0 %482
      %v485 = vsel %vm424, %v480, 0
      %vm487 = vcmask 1043456
      %v489 = vsel %vm487, %v483, 0
      %491 = vmatprep.subr.bf16.mxu0 0
      %492 = vmatpush1.bf16.msra.mxu0 %v489
      %493 = vmatprep.subr.bf16.mxu0 0
      %494 = vmatpush1.bf16.msra.mxu0 0
      %495 = vmatprep.subr.bf16.mxu0 0
      %496 = vmatpush1.bf16.msra.mxu0 0
      %497 = vmatprep.subr.bf16.mxu0 0
      %498 = vmatpush1.bf16.msra.mxu0 0
      %499 = vmatprep.subr.bf16.mxu0 0
      %500 = vmatpush1.bf16.msra.mxu0 0
      %501 = vmatprep.subr.bf16.mxu0 0
      %502 = vmatpush1.bf16.msra.mxu0 0
      %503 = vmatprep.subr.bf16.mxu0 0
      %504 = vmatpush1.bf16.msra.mxu0 0
      %505 = vmatprep.subr.bf16.mxu0 0
      %506 = vmatpush1.bf16.msra.mxu0 0
      %507 = vmatprep.subr.bf16.mxu0 0
      %508 = vmatpush1.bf16.msra.mxu0 0
      %509 = vmatprep.subr.bf16.mxu0 0
      %510 = vmatpush1.bf16.msra.mxu0 0
      %511 = vmatprep.subr.bf16.mxu0 0
      %512 = vmatpush1.bf16.msra.mxu0 0
      %513 = vmatprep.subr.bf16.mxu0 0
      %514 = vmatpush1.bf16.msra.mxu0 0
      %515 = vmatprep.subr.bf16.mxu0 0
      %516 = vmatpush1.bf16.msra.mxu0 0
      %517 = vmatprep.subr.bf16.mxu0 0
      %518 = vmatpush1.bf16.msra.mxu0 0
      %519 = vmatprep.subr.bf16.mxu0 0
      %520 = vmatpush1.bf16.msra.mxu0 0
      %521 = vmatprep.subr.bf16.mxu0 0
      %522 = vmatpush1.bf16.msra.mxu0 0
      %523 = vmatprep.mubr.bf16.mxu0 0
      %524 = vmatmul.mubr.bf16.gmra.mrb[0].mxu0 %v485
      %v525 = vpop.f32.mrb[0].mxu0
      %v526 = vadd.f32 0.0, %v525
      %v527 = vpop.f32.mrb[0].mxu0
      %v528 = vpop.f32.mrb[0].mxu0
      %v529 = vpop.f32.mrb[0].mxu0
      %530 = vdwg.mxu0
      %v531 = vrcp.pop %v479
      %v532 = vmul.f32 %v526, %v531
      %534 = vrot.lane.b32.xlu0 %v422, 120
      %v535 = vpop.permute.xlu0 %534
      %536 = vrot.lane.b32.xlu0 %v423, 120
      %v537 = vpop.permute.xlu0 %536
      %v539 = vsel %vm424, %v535, 0
      %v542 = vsel %vm424, %v537, 0
      %544 = vmatprep.subr.bf16.mxu0 0
      %545 = vmatpush1.bf16.xpose.msra.mxu0 %v542
      %546 = vmatprep.subr.bf16.mxu0 0
      %547 = vmatpush1.bf16.xpose.msra.mxu0 0
      %548 = vmatprep.subr.bf16.mxu0 0
      %549 = vmatpush1.bf16.xpose.msra.mxu0 0
      %550 = vmatprep.subr.bf16.mxu0 0
      %551 = vmatpush1.bf16.xpose.msra.mxu0 0
      %552 = vmatprep.subr.bf16.mxu0 0
      %553 = vmatpush1.bf16.xpose.msra.mxu0 0
      %554 = vmatprep.subr.bf16.mxu0 0
      %555 = vmatpush1.bf16.xpose.msra.mxu0 0
      %556 = vmatprep.subr.bf16.mxu0 0
      %557 = vmatpush1.bf16.xpose.msra.mxu0 0
      %558 = vmatprep.subr.bf16.mxu0 0
      %559 = vmatpush1.bf16.xpose.msra.mxu0 0
      %560 = vmatprep.subr.bf16.mxu0 0
      %561 = vmatpush1.bf16.xpose.msra.mxu0 0
      %562 = vmatprep.subr.bf16.mxu0 0
      %563 = vmatpush1.bf16.xpose.msra.mxu0 0
      %564 = vmatprep.subr.bf16.mxu0 0
      %565 = vmatpush1.bf16.xpose.msra.mxu0 0
      %566 = vmatprep.subr.bf16.mxu0 0
      %567 = vmatpush1.bf16.xpose.msra.mxu0 0
      %568 = vmatprep.subr.bf16.mxu0 0
      %569 = vmatpush1.bf16.xpose.msra.mxu0 0
      %570 = vmatprep.subr.bf16.mxu0 0
      %571 = vmatpush1.bf16.xpose.msra.mxu0 0
      %572 = vmatprep.subr.bf16.mxu0 0
      %573 = vmatpush1.bf16.xpose.msra.mxu0 0
      %574 = vmatprep.subr.bf16.mxu0 0
      %575 = vmatpush1.bf16.xpose.msra.mxu0 0
      %576 = vmatprep.mubr.bf16.mxu0 0
      %577 = vmatmul.mubr.bf16.gmra.mrb[0].mxu0 %v539
      %v578 = vpop.f32.mrb[0].mxu0
      %v579 = vadd.f32 0.0, %v578
      %v580 = vpop.f32.mrb[0].mxu0
      %v581 = vpop.f32.mrb[0].mxu0
      %v582 = vpop.f32.mrb[0].mxu0
      %583 = vdwg.mxu0
      %v584 = vsel %vm424, %v579, -inf
      %585 = vmax.xlane.f32.xlu0 %v584
      %v586 = vpop.xlane.xlu0 %585
      %v587 = vsub.f32 %v579, %v586
      %v588 = vmul.f32 %v587, 1.442695
      %v589 = vpow.pop %v588
      %v590 = vsel %vm424, %v589, 0.0
      %591 = vadd.xlane.f32.xlu0 %v590
      %v592 = vpop.xlane.xlu0 %591
      %v593 = vpack.c.bf16 %v589, %v589
      %594 = vrot.lane.b32.xlu0 %v423, 88
      %v595 = vpop.permute.xlu0 %594
      %v597 = vsel %vm424, %v593, 0
      %v600 = vsel %vm487, %v595, 0
      %602 = vmatprep.subr.bf16.mxu0 0
      %603 = vmatpush1.bf16.msra.mxu0 %v600
      %604 = vmatprep.subr.bf16.mxu0 0
      %605 = vmatpush1.bf16.msra.mxu0 0
      %606 = vmatprep.subr.bf16.mxu0 0
      %607 = vmatpush1.bf16.msra.mxu0 0
      %608 = vmatprep.subr.bf16.mxu0 0
      %609 = vmatpush1.bf16.msra.mxu0 0
      %610 = vmatprep.subr.bf16.mxu0 0
      %611 = vmatpush1.bf16.msra.mxu0 0
      %612 = vmatprep.subr.bf16.mxu0 0
      %613 = vmatpush1.bf16.msra.mxu0 0
      %614 = vmatprep.subr.bf16.mxu0 0
      %615 = vmatpush1.bf16.msra.mxu0 0
      %616 = vmatprep.subr.bf16.mxu0 0
      %617 = vmatpush1.bf16.msra.mxu0 0
      %618 = vmatprep.subr.bf16.mxu0 0
      %619 = vmatpush1.bf16.msra.mxu0 0
      %620 = vmatprep.subr.bf16.mxu0 0
      %621 = vmatpush1.bf16.msra.mxu0 0
      %622 = vmatprep.subr.bf16.mxu0 0
      %623 = vmatpush1.bf16.msra.mxu0 0
      %624 = vmatprep.subr.bf16.mxu0 0
      %625 = vmatpush1.bf16.msra.mxu0 0
      %626 = vmatprep.subr.bf16.mxu0 0
      %627 = vmatpush1.bf16.msra.mxu0 0
      %628 = vmatprep.subr.bf16.mxu0 0
      %629 = vmatpush1.bf16.msra.mxu0 0
      %630 = vmatprep.subr.bf16.mxu0 0
      %631 = vmatpush1.bf16.msra.mxu0 0
      %632 = vmatprep.subr.bf16.mxu0 0
      %633 = vmatpush1.bf16.msra.mxu0 0
      %634 = vmatprep.mubr.bf16.mxu0 0
      %635 = vmatmul.mubr.bf16.gmra.mrb[0].mxu0 %v597
      %v636 = vpop.f32.mrb[0].mxu0
      %v637 = vadd.f32 0.0, %v636
      %v638 = vpop.f32.mrb[0].mxu0
      %v639 = vpop.f32.mrb[0].mxu0
      %v640 = vpop.f32.mrb[0].mxu0
      %641 = vdwg.mxu0
      %v642 = vrcp.pop %v592
      %v643 = vmul.f32 %v637, %v642
      %644 = vrot.lane.b32.xlu0 %v422, 112
      %v645 = vpop.permute.xlu0 %644
      %646 = vrot.lane.b32.xlu0 %v423, 112
      %v647 = vpop.permute.xlu0 %646
      %v649 = vsel %vm424, %v645, 0
      %v652 = vsel %vm424, %v647, 0
      %654 = vmatprep.subr.bf16.mxu0 0
      %655 = vmatpush1.bf16.xpose.msra.mxu0 %v652
      %656 = vmatprep.subr.bf16.mxu0 0
      %657 = vmatpush1.bf16.xpose.msra.mxu0 0
      %658 = vmatprep.subr.bf16.mxu0 0
      %659 = vmatpush1.bf16.xpose.msra.mxu0 0
      %660 = vmatprep.subr.bf16.mxu0 0
      %661 = vmatpush1.bf16.xpose.msra.mxu0 0
      %662 = vmatprep.subr.bf16.mxu0 0
      %663 = vmatpush1.bf16.xpose.msra.mxu0 0
      %664 = vmatprep.subr.bf16.mxu0 0
      %665 = vmatpush1.bf16.xpose.msra.mxu0 0
      %666 = vmatprep.subr.bf16.mxu0 0
      %667 = vmatpush1.bf16.xpose.msra.mxu0 0
      %668 = vmatprep.subr.bf16.mxu0 0
      %669 = vmatpush1.bf16.xpose.msra.mxu0 0
      %670 = vmatprep.subr.bf16.mxu0 0
      %671 = vmatpush1.bf16.xpose.msra.mxu0 0
      %672 = vmatprep.subr.bf16.mxu0 0
      %673 = vmatpush1.bf16.xpose.msra.mxu0 0
      %674 = vmatprep.subr.bf16.mxu0 0
      %675 = vmatpush1.bf16.xpose.msra.mxu0 0
      %676 = vmatprep.subr.bf16.mxu0 0
      %677 = vmatpush1.bf16.xpose.msra.mxu0 0
      %678 = vmatprep.subr.bf16.mxu0 0
      %679 = vmatpush1.bf16.xpose.msra.mxu0 0
      %680 = vmatprep.subr.bf16.mxu0 0
      %681 = vmatpush1.bf16.xpose.msra.mxu0 0
      %682 = vmatprep.subr.bf16.mxu0 0
      %683 = vmatpush1.bf16.xpose.msra.mxu0 0
      %684 = vmatprep.subr.bf16.mxu0 0
      %685 = vmatpush1.bf16.xpose.msra.mxu0 0
      %686 = vmatprep.mubr.bf16.mxu0 0
      %687 = vmatmul.mubr.bf16.gmra.mrb[0].mxu0 %v649
      %v688 = vpop.f32.mrb[0].mxu0
      %v689 = vadd.f32 0.0, %v688
      %v690 = vpop.f32.mrb[0].mxu0
      %v691 = vpop.f32.mrb[0].mxu0
      %v692 = vpop.f32.mrb[0].mxu0
      %693 = vdwg.mxu0
      %v694 = vsel %vm424, %v689, -inf
      %695 = vmax.xlane.f32.xlu0 %v694
      %v696 = vpop.xlane.xlu0 %695
      %v697 = vsub.f32 %v689, %v696
      %v698 = vmul.f32 %v697, 1.442695
      %v699 = vpow.pop %v698
      %v700 = vsel %vm424, %v699, 0.0
      %701 = vadd.xlane.f32.xlu0 %v700
      %v702 = vpop.xlane.xlu0 %701
      %v703 = vpack.c.bf16 %v699, %v699
      %704 = vrot.lane.b32.xlu0 %v423, 80
      %v705 = vpop.permute.xlu0 %704
      %v707 = vsel %vm424, %v703, 0
      %v710 = vsel %vm487, %v705, 0
      %712 = vmatprep.subr.bf16.mxu0 0
      %713 = vmatpush1.bf16.msra.mxu0 %v710
      %714 = vmatprep.subr.bf16.mxu0 0
      %715 = vmatpush1.bf16.msra.mxu0 0
      %716 = vmatprep.subr.bf16.mxu0 0
      %717 = vmatpush1.bf16.msra.mxu0 0
      %718 = vmatprep.subr.bf16.mxu0 0
      %719 = vmatpush1.bf16.msra.mxu0 0
      %720 = vmatprep.subr.bf16.mxu0 0
      %721 = vmatpush1.bf16.msra.mxu0 0
      %722 = vmatprep.subr.bf16.mxu0 0
      %723 = vmatpush1.bf16.msra.mxu0 0
      %724 = vmatprep.subr.bf16.mxu0 0
      %725 = vmatpush1.bf16.msra.mxu0 0
      %726 = vmatprep.subr.bf16.mxu0 0
      %727 = vmatpush1.bf16.msra.mxu0 0
      %728 = vmatprep.subr.bf16.mxu0 0
      %729 = vmatpush1.bf16.msra.mxu0 0
      %730 = vmatprep.subr.bf16.mxu0 0
      %731 = vmatpush1.bf16.msra.mxu0 0
      %732 = vmatprep.subr.bf16.mxu0 0
      %733 = vmatpush1.bf16.msra.mxu0 0
      %734 = vmatprep.subr.bf16.mxu0 0
      %735 = vmatpush1.bf16.msra.mxu0 0
      %736 = vmatprep.subr.bf16.mxu0 0
      %737 = vmatpush1.bf16.msra.mxu0 0
      %738 = vmatprep.subr.bf16.mxu0 0
      %739 = vmatpush1.bf16.msra.mxu0 0
      %740 = vmatprep.subr.bf16.mxu0 0
      %741 = vmatpush1.bf16.msra.mxu0 0
      %742 = vmatprep.subr.bf16.mxu0 0
      %743 = vmatpush1.bf16.msra.mxu0 0
      %744 = vmatprep.mubr.bf16.mxu0 0
      %745 = vmatmul.mubr.bf16.gmra.mrb[0].mxu0 %v707
      %v746 = vpop.f32.mrb[0].mxu0
      %v747 = vadd.f32 0.0, %v746
      %v748 = vpop.f32.mrb[0].mxu0
      %v749 = vpop.f32.mrb[0].mxu0
      %v750 = vpop.f32.mrb[0].mxu0
      %751 = vdwg.mxu0
      %v752 = vrcp.pop %v702
      %v753 = vmul.f32 %v747, %v752
      %754 = vrot.lane.b32.xlu0 %v422, 104
      %v755 = vpop.permute.xlu0 %754
      %756 = vrot.lane.b32.xlu0 %v423, 104
      %v757 = vpop.permute.xlu0 %756
      %v759 = vsel %vm424, %v755, 0
      %v762 = vsel %vm424, %v757, 0
      %764 = vmatprep.subr.bf16.mxu0 0
      %765 = vmatpush1.bf16.xpose.msra.mxu0 %v762
      %766 = vmatprep.subr.bf16.mxu0 0
      %767 = vmatpush1.bf16.xpose.msra.mxu0 0
      %768 = vmatprep.subr.bf16.mxu0 0
      %769 = vmatpush1.bf16.xpose.msra.mxu0 0
      %770 = vmatprep.subr.bf16.mxu0 0
      %771 = vmatpush1.bf16.xpose.msra.mxu0 0
      %772 = vmatprep.subr.bf16.mxu0 0
      %773 = vmatpush1.bf16.xpose.msra.mxu0 0
      %774 = vmatprep.subr.bf16.mxu0 0
      %775 = vmatpush1.bf16.xpose.msra.mxu0 0
      %776 = vmatprep.subr.bf16.mxu0 0
      %777 = vmatpush1.bf16.xpose.msra.mxu0 0
      %778 = vmatprep.subr.bf16.mxu0 0
      %779 = vmatpush1.bf16.xpose.msra.mxu0 0
      %780 = vmatprep.subr.bf16.mxu0 0
      %781 = vmatpush1.bf16.xpose.msra.mxu0 0
      %782 = vmatprep.subr.bf16.mxu0 0
      %783 = vmatpush1.bf16.xpose.msra.mxu0 0
      %784 = vmatprep.subr.bf16.mxu0 0
      %785 = vmatpush1.bf16.xpose.msra.mxu0 0
      %786 = vmatprep.subr.bf16.mxu0 0
      %787 = vmatpush1.bf16.xpose.msra.mxu0 0
      %788 = vmatprep.subr.bf16.mxu0 0
      %789 = vmatpush1.bf16.xpose.msra.mxu0 0
      %790 = vmatprep.subr.bf16.mxu0 0
      %791 = vmatpush1.bf16.xpose.msra.mxu0 0
      %792 = vmatprep.subr.bf16.mxu0 0
      %793 = vmatpush1.bf16.xpose.msra.mxu0 0
      %794 = vmatprep.subr.bf16.mxu0 0
      %795 = vmatpush1.bf16.xpose.msra.mxu0 0
      %796 = vmatprep.mubr.bf16.mxu0 0
      %797 = vmatmul.mubr.bf16.gmra.mrb[0].mxu0 %v759
      %v798 = vpop.f32.mrb[0].mxu0
      %v799 = vadd.f32 0.0, %v798
      %v800 = vpop.f32.mrb[0].mxu0
      %v801 = vpop.f32.mrb[0].mxu0
      %v802 = vpop.f32.mrb[0].mxu0
      %803 = vdwg.mxu0
      %v804 = vsel %vm424, %v799, -inf
      %805 = vmax.xlane.f32.xlu0 %v804
      %v806 = vpop.xlane.xlu0 %805
      %v807 = vsub.f32 %v799, %v806
      %v808 = vmul.f32 %v807, 1.442695
      %v809 = vpow.pop %v808
      %v810 = vsel %vm424, %v809, 0.0
      %811 = vadd.xlane.f32.xlu0 %v810
      %v812 = vpop.xlane.xlu0 %811
      %v813 = vpack.c.bf16 %v809, %v809
      %814 = vrot.lane.b32.xlu0 %v423, 72
      %v815 = vpop.permute.xlu0 %814
      %v817 = vsel %vm424, %v813, 0
      %v820 = vsel %vm487, %v815, 0
      %822 = vmatprep.subr.bf16.mxu0 0
      %823 = vmatpush1.bf16.msra.mxu0 %v820
      %824 = vmatprep.subr.bf16.mxu0 0
      %825 = vmatpush1.bf16.msra.mxu0 0
      %826 = vmatprep.subr.bf16.mxu0 0
      %827 = vmatpush1.bf16.msra.mxu0 0
      %828 = vmatprep.subr.bf16.mxu0 0
      %829 = vmatpush1.bf16.msra.mxu0 0
      %830 = vmatprep.subr.bf16.mxu0 0
      %831 = vmatpush1.bf16.msra.mxu0 0
      %832 = vmatprep.subr.bf16.mxu0 0
      %833 = vmatpush1.bf16.msra.mxu0 0
      %834 = vmatprep.subr.bf16.mxu0 0
      %835 = vmatpush1.bf16.msra.mxu0 0
      %836 = vmatprep.subr.bf16.mxu0 0
      %837 = vmatpush1.bf16.msra.mxu0 0
      %838 = vmatprep.subr.bf16.mxu0 0
      %839 = vmatpush1.bf16.msra.mxu0 0
      %840 = vmatprep.subr.bf16.mxu0 0
      %841 = vmatpush1.bf16.msra.mxu0 0
      %842 = vmatprep.subr.bf16.mxu0 0
      %843 = vmatpush1.bf16.msra.mxu0 0
      %844 = vmatprep.subr.bf16.mxu0 0
      %845 = vmatpush1.bf16.msra.mxu0 0
      %846 = vmatprep.subr.bf16.mxu0 0
      %847 = vmatpush1.bf16.msra.mxu0 0
      %848 = vmatprep.subr.bf16.mxu0 0
      %849 = vmatpush1.bf16.msra.mxu0 0
      %850 = vmatprep.subr.bf16.mxu0 0
      %851 = vmatpush1.bf16.msra.mxu0 0
      %852 = vmatprep.subr.bf16.mxu0 0
      %853 = vmatpush1.bf16.msra.mxu0 0
      %854 = vmatprep.mubr.bf16.mxu0 0
      %855 = vmatmul.mubr.bf16.gmra.mrb[0].mxu0 %v817
      %v856 = vpop.f32.mrb[0].mxu0
      %v857 = vadd.f32 0.0, %v856
      %v858 = vpop.f32.mrb[0].mxu0
      %v859 = vpop.f32.mrb[0].mxu0
      %v860 = vpop.f32.mrb[0].mxu0
      %861 = vdwg.mxu0
      %v862 = vrcp.pop %v812
      %v863 = vmul.f32 %v857, %v862
      %865 = vrot.lane.b32.xlu0 %v643, 8
      %v866 = vpop.permute.xlu0 %865
      %869 = vrot.lane.b32.xlu0 %v753, 16
      %v870 = vpop.permute.xlu0 %869
      %873 = vrot.lane.b32.xlu0 %v863, 24
      %v874 = vpop.permute.xlu0 %873
      %v876 = vsel %vm424, %v532, %v866
      %vm877 = vcmask 130048
      %v878 = vsel %vm877, %v876, %v870
      %vm879 = vcmask 195584
      %v880 = vsel %vm879, %v878, %v874
      %v881 = vpack.c.bf16 %v880, %v880
      %v882 = vld [vmem:[%s4] sm:$0xf]
      %v883 = vld [vmem:[%s4 + $0x4] sm:$0xf]
      %v884 = vld [vmem:[%s4 + $0x8] sm:$0xf]
      %v885 = vld [vmem:[%s4 + $0xc] sm:$0xf]
      %v886 = vld [vmem:[%s5] sm:$0x1]
      %v888 = vlaneseq
      %v889 = vshrl.u32 %v888, 7
      %v890 = vsub.s32 0, %v889
      %v891 = vrot.slane %v886, %v890
      %v897 = vunpack.c.l.b16 %v882
      %v898 = vunpack.c.l.b16 %v883
      %v899 = vunpack.c.l.b16 %v884
      %v900 = vunpack.c.l.b16 %v885
      %v901 = vpack.c.b16 %v898, %v897
      %v902 = vpack.c.b16 %v900, %v899
      %v906 = vsel %vm377, %v881, 0
      %908 = vmatprep.subr.bf16.mxu0 0
      %909 = vmatpush1.bf16.msra.mxu0 %v901
      %910 = vmatprep.subr.bf16.mxu0 0
      %911 = vmatpush1.bf16.msra.mxu0 %v902
      %912 = vmatprep.subr.bf16.mxu0 0
      %913 = vmatpush1.bf16.msra.mxu0 0
      %914 = vmatprep.subr.bf16.mxu0 0
      %915 = vmatpush1.bf16.msra.mxu0 0
      %916 = vmatprep.subr.bf16.mxu0 0
      %917 = vmatpush1.bf16.msra.mxu0 0
      %918 = vmatprep.subr.bf16.mxu0 0
      %919 = vmatpush1.bf16.msra.mxu0 0
      %920 = vmatprep.subr.bf16.mxu0 0
      %921 = vmatpush1.bf16.msra.mxu0 0
      %922 = vmatprep.subr.bf16.mxu0 0
      %923 = vmatpush1.bf16.msra.mxu0 0
      %924 = vmatprep.subr.bf16.mxu0 0
      %925 = vmatpush1.bf16.msra.mxu0 0
      %926 = vmatprep.subr.bf16.mxu0 0
      %927 = vmatpush1.bf16.msra.mxu0 0
      %928 = vmatprep.subr.bf16.mxu0 0
      %929 = vmatpush1.bf16.msra.mxu0 0
      %930 = vmatprep.subr.bf16.mxu0 0
      %931 = vmatpush1.bf16.msra.mxu0 0
      %932 = vmatprep.subr.bf16.mxu0 0
      %933 = vmatpush1.bf16.msra.mxu0 0
      %934 = vmatprep.subr.bf16.mxu0 0
      %935 = vmatpush1.bf16.msra.mxu0 0
      %936 = vmatprep.subr.bf16.mxu0 0
      %937 = vmatpush1.bf16.msra.mxu0 0
      %938 = vmatprep.subr.bf16.mxu0 0
      %939 = vmatpush1.bf16.msra.mxu0 0
      %940 = vmatprep.mubr.bf16.mxu0 0
      %941 = vmatmul.mubr.bf16.gmra.mrb[0].mxu0 %v906
      %v942 = vpop.f32.mrb[0].mxu0
      %v943 = vadd.f32 %v891, %v942
      %v944 = vpop.f32.mrb[0].mxu0
      %v945 = vpop.f32.mrb[0].mxu0
      %v946 = vpop.f32.mrb[0].mxu0
      %947 = vdwg.mxu0
      %v948 = vadd.f32 %v350, %v943
      %v949 = vld [vmem:[%s6] sm:$0x1]
      %v950 = vld [vmem:[%s7] sm:$0x1]
      %v951 = vsel %vm377, %v948, 0.0
      %952 = vadd.xlane.f32.xlu0 %v951
      %v953 = vpop.xlane.xlu0 %952
      %v954 = vrcp.pop 32.0
      %v955 = vmul.f32 %v953, %v954
      %v956 = vsub.f32 %v948, %v955
      %v957 = vmul.f32 %v956, %v956
      %v958 = vsel %vm377, %v957, 0.0
      %959 = vadd.xlane.f32.xlu0 %v958
      %v960 = vpop.xlane.xlu0 %959
      %v961 = vmul.f32 %v960, %v954
      %v962 = vadd.f32 %v961, 1e-05
      %v963 = vrsqrt.pop %v962
      %v964 = vmul.f32 %v956, %v963
      %v966 = vlaneseq
      %v967 = vshrl.u32 %v966, 7
      %v968 = vsub.s32 0, %v967
      %v969 = vrot.slane %v949, %v968
      %v971 = vmul.f32 %v964, %v969
      %v973 = vlaneseq
      %v974 = vshrl.u32 %v973, 7
      %v975 = vsub.s32 0, %v974
      %v976 = vrot.slane %v950, %v975
      %v978 = vadd.f32 %v971, %v976
      %979 = vst.msk [vmem:[%s348] sm:$0xff] %vm377, %v978
      %p980 = scmp.lt.s32.totalorder %s23, 1
      %s981 = scalar_select %p980, %s23, 1
      %p982 = scmp.lt.s32.totalorder %s24, 0
      %s983 = scalar_select %p982, %s24, 0
      %s984 = sadd.s32 %s983, %s981
      %s985 = smul.addr %s984, 8
      %s986 = scalar_lea.vmem %s8, %s985
      // Predicated region
      $region53: #{transformer_decoder.9} parent=51 // pred_check
        %p987 = pneg %p231
      $region54: #{transformer_decoder.9} parent=51 // pred_check_branch
        %989 = sbr.rel (%p987) target = $region56
      $region55: #{transformer_decoder.9} parent=51 // pred_region
        _
      $region56: #{transformer_decoder.9} parent=51 // pred_fallthru
        _
    $region52: #{transformer_decoder.9} parent=5 // pred_fallthru
      _
    %p990 = scmp.le.s32.totalorder 2, %s14
    // Predicated region
    $region57: #{transformer_decoder.9} parent=5 // pred_check
      %p991 = pneg %p990
    $region58: #{transformer_decoder.9} parent=5 // pred_check_branch
      %993 = sbr.rel (%p991) target = $region60
    $region59: #{transformer_decoder.9} parent=5 // pred_region
      %s994 = ssub.s32 %s14, 2
      // Predicated region
      $region61: #{transformer_decoder.9} parent=59 // pred_check
        %p995 = pneg %p237
      $region62: #{transformer_decoder.9} parent=59 // pred_check_branch
        %997 = sbr.rel (%p995) target = $region64
      $region63: #{transformer_decoder.9} parent=59 // pred_region
        %p998 = scmp.lt.s32.totalorder %s25, 1
        %s999 = scalar_select %p998, %s25, 1
        %p1000 = scmp.lt.s32.totalorder %s26, 0
        %s1001 = scalar_select %p1000, %s26, 0
        %s1002 = sadd.s32 %s1001, %s999
        %s1003 = smul.addr %s1002, 8
        %s1004 = scalar_lea.vmem %s8, %s1003
      $region64: #{transformer_decoder.9} parent=59 // pred_fallthru
        _
    $region60: #{transformer_decoder.9} parent=5 // pred_fallthru
      _
  $region6: #{transformer_decoder.9} parent=0 // loop_footer
    %s18 = sadd.s32 1, %s14
  $region7: #{transformer_decoder.9} parent=0 // loop_footer_branch
    %13 = sbr.rel target = $region3
  $region8: #{transformer_decoder.9} parent=0 // loop_exit
    _

// kernel: transformer_decoder.10
$region0: #{transformer_decoder.10}
  #allocation0 [shape = 'u32[]', space=smem, size = 0x4, offset = 0x4, fixed_abs, tag = 'smem constant byte address 0x4 - core index']
  #allocation1 [shape = 'u32[144,128]{1,0:T(1,128)}', space=vmem, size = 0x12000, scoped, tag = 'internal scratch']
  %s0 = inlined_call_operand.vmem [shape: f32[16,32], index: 0, kind: input, shape index: {}]
  %s1 = inlined_call_operand.vmem [shape: bf16[32,64], index: 1, kind: input, shape index: {}]
  %s2 = inlined_call_operand.vmem [shape: f32[1,64], index: 2, kind: input, shape index: {}]
  %s3 = inlined_call_operand.vmem [shape: bf16[64,32], index: 3, kind: input, shape index: {}]
  %s4 = inlined_call_operand.vmem [shape: f32[1,32], index: 4, kind: input, shape index: {}]
  %s5 = inlined_call_operand.vmem [shape: f32[1,32], index: 5, kind: input, shape index: {}]
  %s6 = inlined_call_operand.vmem [shape: f32[1,32], index: 6, kind: input, shape index: {}]
  %s7 = inlined_call_operand.vmem [shape: f32[16,32], index: 7, kind: output, shape index: {}]
  %s8 = sld [smem:[#allocation0]]
  $region38: #{transformer_decoder.10} parent=0
    _
  %s10 = ssub.s32 1, %s8
  %s11 = scalar_select 0, %s10, %s8
  // Predicated region
  $region2: #{transformer_decoder.10} parent=0 // pred_check
    _
  $region3: #{transformer_decoder.10} parent=0 // pred_check_branch
    %13 = sbr.rel (0) target = $region5
  $region4: #{transformer_decoder.10} parent=0 // pred_region
    _
  $region5: #{transformer_decoder.10} parent=0 // pred_fallthru
    _
  // Predicated region
  $region6: #{transformer_decoder.10} parent=0 // pred_check
    _
  $region7: #{transformer_decoder.10} parent=0 // pred_check_branch
    %15 = sbr.rel (0) target = $region9
  $region8: #{transformer_decoder.10} parent=0 // pred_region
    _
  $region9: #{transformer_decoder.10} parent=0 // pred_fallthru
    _
  // Predicated region
  $region10: #{transformer_decoder.10} parent=0 // pred_check
    _
  $region11: #{transformer_decoder.10} parent=0 // pred_check_branch
    %17 = sbr.rel (0) target = $region13
  $region12: #{transformer_decoder.10} parent=0 // pred_region
    _
  $region13: #{transformer_decoder.10} parent=0 // pred_fallthru
    _
  // Predicated region
  $region14: #{transformer_decoder.10} parent=0 // pred_check
    _
  $region15: #{transformer_decoder.10} parent=0 // pred_check_branch
    %19 = sbr.rel (0) target = $region17
  $region16: #{transformer_decoder.10} parent=0 // pred_region
    _
  $region17: #{transformer_decoder.10} parent=0 // pred_fallthru
    _
  // Predicated region
  $region18: #{transformer_decoder.10} parent=0 // pred_check
    _
  $region19: #{transformer_decoder.10} parent=0 // pred_check_branch
    %21 = sbr.rel (0) target = $region21
  $region20: #{transformer_decoder.10} parent=0 // pred_region
    _
  $region21: #{transformer_decoder.10} parent=0 // pred_fallthru
    _
  // Predicated region
  $region22: #{transformer_decoder.10} parent=0 // pred_check
    _
  $region23: #{transformer_decoder.10} parent=0 // pred_check_branch
    %23 = sbr.rel (0) target = $region25
  $region24: #{transformer_decoder.10} parent=0 // pred_region
    _
  $region25: #{transformer_decoder.10} parent=0 // pred_fallthru
    _
  // Predicated region
  $region26: #{transformer_decoder.10} parent=0 // pred_check
    _
  $region27: #{transformer_decoder.10} parent=0 // pred_check_branch
    %25 = sbr.rel (0) target = $region29
  $region28: #{transformer_decoder.10} parent=0 // pred_region
    _
  $region29: #{transformer_decoder.10} parent=0 // pred_fallthru
    _
  %v27 = vld [vmem:[%s0] sm:$0xff]
  %v28 = vld [vmem:[%s0 + $0x8] sm:$0xff]
  %v29 = vpack.c.bf16 %v28, %v27
  %v30 = vld [vmem:[%s1] sm:$0xf]
  %v31 = vld [vmem:[%s1 + $0x4] sm:$0xf]
  %v32 = vld [vmem:[%s1 + $0x8] sm:$0xf]
  %v33 = vld [vmem:[%s1 + $0xc] sm:$0xf]
  %v34 = vld [vmem:[%s2] sm:$0x1]
  %v36 = vlaneseq
  %v37 = vshrl.u32 %v36, 7
  %v38 = vsub.s32 0, %v37
  %v39 = vrot.slane %v34, %v38
  %v45 = vunpack.c.l.b16 %v30
  %v46 = vunpack.c.l.b16 %v31
  %v47 = vunpack.c.l.b16 %v32
  %v48 = vunpack.c.l.b16 %v33
  %v49 = vpack.c.b16 %v46, %v45
  %v50 = vpack.c.b16 %v48, %v47
  %vm53 = vcmask 261120
  %v55 = vsel %vm53, %v29, 0
  %57 = vmatprep.subr.bf16.mxu0 0
  %58 = vmatpush1.bf16.msra.mxu0 %v49
  %59 = vmatprep.subr.bf16.mxu0 0
  %60 = vmatpush1.bf16.msra.mxu0 %v50
  %61 = vmatprep.subr.bf16.mxu0 0
  %62 = vmatpush1.bf16.msra.mxu0 0
  %63 = vmatprep.subr.bf16.mxu0 0
  %64 = vmatpush1.bf16.msra.mxu0 0
  %65 = vmatprep.subr.bf16.mxu0 0
  %66 = vmatpush1.bf16.msra.mxu0 0
  %67 = vmatprep.subr.bf16.mxu0 0
  %68 = vmatpush1.bf16.msra.mxu0 0
  %69 = vmatprep.subr.bf16.mxu0 0
  %70 = vmatpush1.bf16.msra.mxu0 0
  %71 = vmatprep.subr.bf16.mxu0 0
  %72 = vmatpush1.bf16.msra.mxu0 0
  %73 = vmatprep.subr.bf16.mxu0 0
  %74 = vmatpush1.bf16.msra.mxu0 0
  %75 = vmatprep.subr.bf16.mxu0 0
  %76 = vmatpush1.bf16.msra.mxu0 0
  %77 = vmatprep.subr.bf16.mxu0 0
  %78 = vmatpush1.bf16.msra.mxu0 0
  %79 = vmatprep.subr.bf16.mxu0 0
  %80 = vmatpush1.bf16.msra.mxu0 0
  %81 = vmatprep.subr.bf16.mxu0 0
  %82 = vmatpush1.bf16.msra.mxu0 0
  %83 = vmatprep.subr.bf16.mxu0 0
  %84 = vmatpush1.bf16.msra.mxu0 0
  %85 = vmatprep.subr.bf16.mxu0 0
  %86 = vmatpush1.bf16.msra.mxu0 0
  %87 = vmatprep.subr.bf16.mxu0 0
  %88 = vmatpush1.bf16.msra.mxu0 0
  %89 = vmatprep.mubr.bf16.mxu0 0
  %90 = vmatmul.mubr.bf16.gmra.mrb[0].mxu0 %v55
  %v91 = vpop.f32.mrb[0].mxu0
  %v92 = vadd.f32 %v39, %v91
  %v93 = vpop.f32.mrb[0].mxu0
  %v94 = vpop.f32.mrb[0].mxu0
  %v95 = vadd.f32 %v39, %v94
  %v96 = vpop.f32.mrb[0].mxu0
  %97 = vdwg.mxu0
  %v98 = vmax.f32 %v92, 0.0
  %v99 = vmax.f32 %v95, 0.0
  %v100 = vpack.c.bf16 %v99, %v98
  %v101 = vld [vmem:[%s3] sm:$0xf]
  %v102 = vld [vmem:[%s3 + $0x4] sm:$0xf]
  %v103 = vld [vmem:[%s3 + $0x8] sm:$0xf]
  %v104 = vld [vmem:[%s3 + $0xc] sm:$0xf]
  %v105 = vld [vmem:[%s3 + $0x10] sm:$0xf]
  %v106 = vld [vmem:[%s3 + $0x14] sm:$0xf]
  %v107 = vld [vmem:[%s3 + $0x18] sm:$0xf]
  %v108 = vld [vmem:[%s3 + $0x1c] sm:$0xf]
  %v109 = vld [vmem:[%s4] sm:$0x1]
  %v111 = vlaneseq
  %v112 = vshrl.u32 %v111, 7
  %v113 = vsub.s32 0, %v112
  %v114 = vrot.slane %v109, %v113
  %v124 = vunpack.c.l.b16 %v101
  %v125 = vunpack.c.l.b16 %v102
  %v126 = vunpack.c.l.b16 %v103
  %v127 = vunpack.c.l.b16 %v104
  %v128 = vunpack.c.l.b16 %v105
  %v129 = vunpack.c.l.b16 %v106
  %v130 = vunpack.c.l.b16 %v107
  %v131 = vunpack.c.l.b16 %v108
  %v132 = vpack.c.b16 %v125, %v124
  %v133 = vpack.c.b16 %v127, %v126
  %v134 = vpack.c.b16 %v129, %v128
  %v135 = vpack.c.b16 %v131, %v130
  %vm140 = vcmask 523264
  %v142 = vsel %vm140, %v100, 0
  %144 = vmatprep.subr.bf16.mxu0 0
  %145 = vmatpush1.bf16.msra.mxu0 %v132
  %146 = vmatprep.subr.bf16.mxu0 0
  %147 = vmatpush1.bf16.msra.mxu0 %v133
  %148 = vmatprep.subr.bf16.mxu0 0
  %149 = vmatpush1.bf16.msra.mxu0 %v134
  %150 = vmatprep.subr.bf16.mxu0 0
  %151 = vmatpush1.bf16.msra.mxu0 %v135
  %152 = vmatprep.subr.bf16.mxu0 0
  %153 = vmatpush1.bf16.msra.mxu0 0
  %154 = vmatprep.subr.bf16.mxu0 0
  %155 = vmatpush1.bf16.msra.mxu0 0
  %156 = vmatprep.subr.bf16.mxu0 0
  %157 = vmatpush1.bf16.msra.mxu0 0
  %158 = vmatprep.subr.bf16.mxu0 0
  %159 = vmatpush1.bf16.msra.mxu0 0
  %160 = vmatprep.subr.bf16.mxu0 0
  %161 = vmatpush1.bf16.msra.mxu0 0
  %162 = vmatprep.subr.bf16.mxu0 0
  %163 = vmatpush1.bf16.msra.mxu0 0
  %164 = vmatprep.subr.bf16.mxu0 0
  %165 = vmatpush1.bf16.msra.mxu0 0
  %166 = vmatprep.subr.bf16.mxu0 0
  %167 = vmatpush1.bf16.msra.mxu0 0
  %168 = vmatprep.subr.bf16.mxu0 0
  %169 = vmatpush1.bf16.msra.mxu0 0
  %170 = vmatprep.subr.bf16.mxu0 0
  %171 = vmatpush1.bf16.msra.mxu0 0
  %172 = vmatprep.subr.bf16.mxu0 0
  %173 = vmatpush1.bf16.msra.mxu0 0
  %174 = vmatprep.subr.bf16.mxu0 0
  %175 = vmatpush1.bf16.msra.mxu0 0
  %176 = vmatprep.mubr.bf16.mxu0 0
  %177 = vmatmul.mubr.bf16.gmra.mrb[0].mxu0 %v142
  %v178 = vpop.f32.mrb[0].mxu0
  %v179 = vadd.f32 %v114, %v178
  %v180 = vpop.f32.mrb[0].mxu0
  %v181 = vpop.f32.mrb[0].mxu0
  %v182 = vadd.f32 %v114, %v181
  %v183 = vpop.f32.mrb[0].mxu0
  %184 = vdwg.mxu0
  %v185 = vadd.f32 %v27, %v179
  %v186 = vadd.f32 %v28, %v182
  %v187 = vld [vmem:[%s5] sm:$0x1]
  %v188 = vld [vmem:[%s6] sm:$0x1]
  %v189 = vsel %vm53, %v185, 0.0
  %190 = vadd.xlane.f32.xlu0 %v189
  %v191 = vpop.xlane.xlu0 %190
  %v192 = vsel %vm53, %v186, 0.0
  %193 = vadd.xlane.f32.xlu0 %v192
  %v194 = vpop.xlane.xlu0 %193
  %v195 = vrcp.pop 32.0
  %v196 = vmul.f32 %v191, %v195
  %v197 = vmul.f32 %v194, %v195
  %v198 = vsub.f32 %v185, %v196
  %v199 = vsub.f32 %v186, %v197
  %v200 = vmul.f32 %v198, %v198
  %v201 = vmul.f32 %v199, %v199
  %v202 = vsel %vm53, %v200, 0.0
  %203 = vadd.xlane.f32.xlu0 %v202
  %v204 = vpop.xlane.xlu0 %203
  %v205 = vsel %vm53, %v201, 0.0
  %206 = vadd.xlane.f32.xlu0 %v205
  %v207 = vpop.xlane.xlu0 %206
  %v208 = vmul.f32 %v204, %v195
  %v209 = vmul.f32 %v207, %v195
  %v210 = vadd.f32 %v208, 1e-05
  %v211 = vadd.f32 %v209, 1e-05
  %v212 = vrsqrt.pop %v210
  %v213 = vrsqrt.pop %v211
  %v214 = vmul.f32 %v198, %v212
  %v215 = vmul.f32 %v199, %v213
  %v217 = vlaneseq
  %v218 = vshrl.u32 %v217, 7
  %v219 = vsub.s32 0, %v218
  %v220 = vrot.slane %v187, %v219
  %v222 = vmul.f32 %v214, %v220
  %v223 = vmul.f32 %v215, %v220
  %v225 = vlaneseq
  %v226 = vshrl.u32 %v225, 7
  %v227 = vsub.s32 0, %v226
  %v228 = vrot.slane %v188, %v227
  %v230 = vadd.f32 %v222, %v228
  %v231 = vadd.f32 %v223, %v228
  %232 = vst.msk [vmem:[%s7] sm:$0xff] %vm53, %v230
  %233 = vst.msk [vmem:[%s7 + $0x8] sm:$0xff] %vm53, %v231
  // Predicated region
  $region30: #{transformer_decoder.10} parent=0 // pred_check
    _
  $region31: #{transformer_decoder.10} parent=0 // pred_check_branch
    %235 = sbr.rel (0) target = $region33
  $region32: #{transformer_decoder.10} parent=0 // pred_region
    _
  $region33: #{transformer_decoder.10} parent=0 // pred_fallthru
    _
  // Predicated region
  $region34: #{transformer_decoder.10} parent=0 // pred_check
    _
  $region35: #{transformer_decoder.10} parent=0 // pred_check_branch
    %237 = sbr.rel (0) target = $region37
  $region36: #{transformer_decoder.10} parent=0 // pred_region
    _
  $region37: #{transformer_decoder.10} parent=0 // pred_fallthru
    _

// kernel: transformer_decoder.13
$region0: #{transformer_decoder.13}
  #allocation0 [shape = 'u32[]', space=smem, size = 0x4, offset = 0x4, fixed_abs, tag = 'smem constant byte address 0x4 - core index']
  #allocation1 [shape = 'u32[144,128]{1,0:T(1,128)}', space=vmem, size = 0x12000, scoped, tag = 'internal scratch']
  %s0 = inlined_call_operand.vmem [shape: f32[16,32], index: 0, kind: input, shape index: {}]
  %s1 = inlined_call_operand.vmem [shape: bf16[32,64], index: 1, kind: input, shape index: {}]
  %s2 = inlined_call_operand.vmem [shape: f32[1,64], index: 2, kind: input, shape index: {}]
  %s3 = inlined_call_operand.vmem [shape: bf16[64,32], index: 3, kind: input, shape index: {}]
  %s4 = inlined_call_operand.vmem [shape: f32[1,32], index: 4, kind: input, shape index: {}]
  %s5 = inlined_call_operand.vmem [shape: f32[1,32], index: 5, kind: input, shape index: {}]
  %s6 = inlined_call_operand.vmem [shape: f32[1,32], index: 6, kind: input, shape index: {}]
  %s7 = inlined_call_operand.hbm [shape: f32[16,32], index: 7, kind: output, shape index: {}]
  %s8 = sld [smem:[#allocation0]]
  $region38: #{transformer_decoder.13} parent=0
    _
  %s10 = ssub.s32 1, %s8
  %s11 = scalar_select 0, %s10, %s8
  $region1: #{transformer_decoder.13} parent=0
    #allocation2 [shape = 'u8[8192]{0}', space=vmem, size = 0x2000, scoped, tag = 'output window, operand 0, single buffered']
    #allocation3 [shape = 's32[1]{0}', space=sflag, size = 0x4, scoped, tag = 'scoped memory for transformer_decoder.13']
    %12 = vsyncpa [#allocation3], 0
    // Predicated region
    $region2: #{transformer_decoder.13} parent=1 // pred_check
      _
    $region3: #{transformer_decoder.13} parent=1 // pred_check_branch
      %14 = sbr.rel (0) target = $region5
    $region4: #{transformer_decoder.13} parent=1 // pred_region
      _
    $region5: #{transformer_decoder.13} parent=1 // pred_fallthru
      _
    // Predicated region
    $region6: #{transformer_decoder.13} parent=1 // pred_check
      _
    $region7: #{transformer_decoder.13} parent=1 // pred_check_branch
      %16 = sbr.rel (0) target = $region9
    $region8: #{transformer_decoder.13} parent=1 // pred_region
      _
    $region9: #{transformer_decoder.13} parent=1 // pred_fallthru
      _
    // Predicated region
    $region10: #{transformer_decoder.13} parent=1 // pred_check
      _
    $region11: #{transformer_decoder.13} parent=1 // pred_check_branch
      %18 = sbr.rel (0) target = $region13
    $region12: #{transformer_decoder.13} parent=1 // pred_region
      _
    $region13: #{transformer_decoder.13} parent=1 // pred_fallthru
      _
    // Predicated region
    $region14: #{transformer_decoder.13} parent=1 // pred_check
      _
    $region15: #{transformer_decoder.13} parent=1 // pred_check_branch
      %20 = sbr.rel (0) target = $region17
    $region16: #{transformer_decoder.13} parent=1 // pred_region
      _
    $region17: #{transformer_decoder.13} parent=1 // pred_fallthru
      _
    // Predicated region
    $region18: #{transformer_decoder.13} parent=1 // pred_check
      _
    $region19: #{transformer_decoder.13} parent=1 // pred_check_branch
      %22 = sbr.rel (0) target = $region21
    $region20: #{transformer_decoder.13} parent=1 // pred_region
      _
    $region21: #{transformer_decoder.13} parent=1 // pred_fallthru
      _
    // Predicated region
    $region22: #{transformer_decoder.13} parent=1 // pred_check
      _
    $region23: #{transformer_decoder.13} parent=1 // pred_check_branch
      %24 = sbr.rel (0) target = $region25
    $region24: #{transformer_decoder.13} parent=1 // pred_region
      _
    $region25: #{transformer_decoder.13} parent=1 // pred_fallthru
      _
    // Predicated region
    $region26: #{transformer_decoder.13} parent=1 // pred_check
      _
    $region27: #{transformer_decoder.13} parent=1 // pred_check_branch
      %26 = sbr.rel (0) target = $region29
    $region28: #{transformer_decoder.13} parent=1 // pred_region
      _
    $region29: #{transformer_decoder.13} parent=1 // pred_fallthru
      _
    %v28 = vld [vmem:[%s0] sm:$0xff]
    %v29 = vld [vmem:[%s0 + $0x8] sm:$0xff]
    %v30 = vpack.c.bf16 %v29, %v28
    %v31 = vld [vmem:[%s1] sm:$0xf]
    %v32 = vld [vmem:[%s1 + $0x4] sm:$0xf]
    %v33 = vld [vmem:[%s1 + $0x8] sm:$0xf]
    %v34 = vld [vmem:[%s1 + $0xc] sm:$0xf]
    %v35 = vld [vmem:[%s2] sm:$0x1]
    %v37 = vlaneseq
    %v38 = vshrl.u32 %v37, 7
    %v39 = vsub.s32 0, %v38
    %v40 = vrot.slane %v35, %v39
    %v46 = vunpack.c.l.b16 %v31
    %v47 = vunpack.c.l.b16 %v32
    %v48 = vunpack.c.l.b16 %v33
    %v49 = vunpack.c.l.b16 %v34
    %v50 = vpack.c.b16 %v47, %v46
    %v51 = vpack.c.b16 %v49, %v48
    %vm54 = vcmask 261120
    %v56 = vsel %vm54, %v30, 0
    %58 = vmatprep.subr.bf16.mxu0 0
    %59 = vmatpush1.bf16.msra.mxu0 %v50
    %60 = vmatprep.subr.bf16.mxu0 0
    %61 = vmatpush1.bf16.msra.mxu0 %v51
    %62 = vmatprep.subr.bf16.mxu0 0
    %63 = vmatpush1.bf16.msra.mxu0 0
    %64 = vmatprep.subr.bf16.mxu0 0
    %65 = vmatpush1.bf16.msra.mxu0 0
    %66 = vmatprep.subr.bf16.mxu0 0
    %67 = vmatpush1.bf16.msra.mxu0 0
    %68 = vmatprep.subr.bf16.mxu0 0
    %69 = vmatpush1.bf16.msra.mxu0 0
    %70 = vmatprep.subr.bf16.mxu0 0
    %71 = vmatpush1.bf16.msra.mxu0 0
    %72 = vmatprep.subr.bf16.mxu0 0
    %73 = vmatpush1.bf16.msra.mxu0 0
    %74 = vmatprep.subr.bf16.mxu0 0
    %75 = vmatpush1.bf16.msra.mxu0 0
    %76 = vmatprep.subr.bf16.mxu0 0
    %77 = vmatpush1.bf16.msra.mxu0 0
    %78 = vmatprep.subr.bf16.mxu0 0
    %79 = vmatpush1.bf16.msra.mxu0 0
    %80 = vmatprep.subr.bf16.mxu0 0
    %81 = vmatpush1.bf16.msra.mxu0 0
    %82 = vmatprep.subr.bf16.mxu0 0
    %83 = vmatpush1.bf16.msra.mxu0 0
    %84 = vmatprep.subr.bf16.mxu0 0
    %85 = vmatpush1.bf16.msra.mxu0 0
    %86 = vmatprep.subr.bf16.mxu0 0
    %87 = vmatpush1.bf16.msra.mxu0 0
    %88 = vmatprep.subr.bf16.mxu0 0
    %89 = vmatpush1.bf16.msra.mxu0 0
    %90 = vmatprep.mubr.bf16.mxu0 0
    %91 = vmatmul.mubr.bf16.gmra.mrb[0].mxu0 %v56
    %v92 = vpop.f32.mrb[0].mxu0
    %v93 = vadd.f32 %v40, %v92
    %v94 = vpop.f32.mrb[0].mxu0
    %v95 = vpop.f32.mrb[0].mxu0
    %v96 = vadd.f32 %v40, %v95
    %v97 = vpop.f32.mrb[0].mxu0
    %98 = vdwg.mxu0
    %v99 = vmax.f32 %v93, 0.0
    %v100 = vmax.f32 %v96, 0.0
    %v101 = vpack.c.bf16 %v100, %v99
    %v102 = vld [vmem:[%s3] sm:$0xf]
    %v103 = vld [vmem:[%s3 + $0x4] sm:$0xf]
    %v104 = vld [vmem:[%s3 + $0x8] sm:$0xf]
    %v105 = vld [vmem:[%s3 + $0xc] sm:$0xf]
    %v106 = vld [vmem:[%s3 + $0x10] sm:$0xf]
    %v107 = vld [vmem:[%s3 + $0x14] sm:$0xf]
    %v108 = vld [vmem:[%s3 + $0x18] sm:$0xf]
    %v109 = vld [vmem:[%s3 + $0x1c] sm:$0xf]
    %v110 = vld [vmem:[%s4] sm:$0x1]
    %v112 = vlaneseq
    %v113 = vshrl.u32 %v112, 7
    %v114 = vsub.s32 0, %v113
    %v115 = vrot.slane %v110, %v114
    %v125 = vunpack.c.l.b16 %v102
    %v126 = vunpack.c.l.b16 %v103
    %v127 = vunpack.c.l.b16 %v104
    %v128 = vunpack.c.l.b16 %v105
    %v129 = vunpack.c.l.b16 %v106
    %v130 = vunpack.c.l.b16 %v107
    %v131 = vunpack.c.l.b16 %v108
    %v132 = vunpack.c.l.b16 %v109
    %v133 = vpack.c.b16 %v126, %v125
    %v134 = vpack.c.b16 %v128, %v127
    %v135 = vpack.c.b16 %v130, %v129
    %v136 = vpack.c.b16 %v132, %v131
    %vm141 = vcmask 523264
    %v143 = vsel %vm141, %v101, 0
    %145 = vmatprep.subr.bf16.mxu0 0
    %146 = vmatpush1.bf16.msra.mxu0 %v133
    %147 = vmatprep.subr.bf16.mxu0 0
    %148 = vmatpush1.bf16.msra.mxu0 %v134
    %149 = vmatprep.subr.bf16.mxu0 0
    %150 = vmatpush1.bf16.msra.mxu0 %v135
    %151 = vmatprep.subr.bf16.mxu0 0
    %152 = vmatpush1.bf16.msra.mxu0 %v136
    %153 = vmatprep.subr.bf16.mxu0 0
    %154 = vmatpush1.bf16.msra.mxu0 0
    %155 = vmatprep.subr.bf16.mxu0 0
    %156 = vmatpush1.bf16.msra.mxu0 0
    %157 = vmatprep.subr.bf16.mxu0 0
    %158 = vmatpush1.bf16.msra.mxu0 0
    %159 = vmatprep.subr.bf16.mxu0 0
    %160 = vmatpush1.bf16.msra.mxu0 0
    %161 = vmatprep.subr.bf16.mxu0 0
    %162 = vmatpush1.bf16.msra.mxu0 0
    %163 = vmatprep.subr.bf16.mxu0 0
    %164 = vmatpush1.bf16.msra.mxu0 0
    %165 = vmatprep.subr.bf16.mxu0 0
    %166 = vmatpush1.bf16.msra.mxu0 0
    %167 = vmatprep.subr.bf16.mxu0 0
    %168 = vmatpush1.bf16.msra.mxu0 0
    %169 = vmatprep.subr.bf16.mxu0 0
    %170 = vmatpush1.bf16.msra.mxu0 0
    %171 = vmatprep.subr.bf16.mxu0 0
    %172 = vmatpush1.bf16.msra.mxu0 0
    %173 = vmatprep.subr.bf16.mxu0 0
    %174 = vmatpush1.bf16.msra.mxu0 0
    %175 = vmatprep.subr.bf16.mxu0 0
    %176 = vmatpush1.bf16.msra.mxu0 0
    %177 = vmatprep.mubr.bf16.mxu0 0
    %178 = vmatmul.mubr.bf16.gmra.mrb[0].mxu0 %v143
    %v179 = vpop.f32.mrb[0].mxu0
    %v180 = vadd.f32 %v115, %v179
    %v181 = vpop.f32.mrb[0].mxu0
    %v182 = vpop.f32.mrb[0].mxu0
    %v183 = vadd.f32 %v115, %v182
    %v184 = vpop.f32.mrb[0].mxu0
    %185 = vdwg.mxu0
    %v186 = vadd.f32 %v28, %v180
    %v187 = vadd.f32 %v29, %v183
    %v188 = vld [vmem:[%s5] sm:$0x1]
    %v189 = vld [vmem:[%s6] sm:$0x1]
    %v190 = vsel %vm54, %v186, 0.0
    %191 = vadd.xlane.f32.xlu0 %v190
    %v192 = vpop.xlane.xlu0 %191
    %v193 = vsel %vm54, %v187, 0.0
    %194 = vadd.xlane.f32.xlu0 %v193
    %v195 = vpop.xlane.xlu0 %194
    %v196 = vrcp.pop 32.0
    %v197 = vmul.f32 %v192, %v196
    %v198 = vmul.f32 %v195, %v196
    %v199 = vsub.f32 %v186, %v197
    %v200 = vsub.f32 %v187, %v198
    %v201 = vmul.f32 %v199, %v199
    %v202 = vmul.f32 %v200, %v200
    %v203 = vsel %vm54, %v201, 0.0
    %204 = vadd.xlane.f32.xlu0 %v203
    %v205 = vpop.xlane.xlu0 %204
    %v206 = vsel %vm54, %v202, 0.0
    %207 = vadd.xlane.f32.xlu0 %v206
    %v208 = vpop.xlane.xlu0 %207
    %v209 = vmul.f32 %v205, %v196
    %v210 = vmul.f32 %v208, %v196
    %v211 = vadd.f32 %v209, 1e-05
    %v212 = vadd.f32 %v210, 1e-05
    %v213 = vrsqrt.pop %v211
    %v214 = vrsqrt.pop %v212
    %v215 = vmul.f32 %v199, %v213
    %v216 = vmul.f32 %v200, %v214
    %v218 = vlaneseq
    %v219 = vshrl.u32 %v218, 7
    %v220 = vsub.s32 0, %v219
    %v221 = vrot.slane %v188, %v220
    %v223 = vmul.f32 %v215, %v221
    %v224 = vmul.f32 %v216, %v221
    %v226 = vlaneseq
    %v227 = vshrl.u32 %v226, 7
    %v228 = vsub.s32 0, %v227
    %v229 = vrot.slane %v189, %v228
    %v231 = vadd.f32 %v223, %v229
    %v232 = vadd.f32 %v224, %v229
    %233 = vst.msk [vmem:[#allocation2] sm:$0xff] %vm54, %v231
    %234 = vst.msk [vmem:[#allocation2 + $0x8] sm:$0xff] %vm54, %v232
    // Predicated region
    $region30: #{transformer_decoder.13} parent=1 // pred_check
      _
    $region31: #{transformer_decoder.13} parent=1 // pred_check_branch
      %236 = sbr.rel (0) target = $region33
    $region32: #{transformer_decoder.13} parent=1 // pred_region
      %s238 = ssub.s32 256, 256
      %239 = vsyncadd [#allocation3], %s238
      %s240 = sshll.u32 [#allocation2], 4
      %s241 = int_to_ptr.vmem [resolvable:$true] %s240
      %246 = dma.vmem_to_hbm [thread:$0]  %s241, 256, %s7, [#allocation3], 128, 128, 8
    $region33: #{transformer_decoder.13} parent=1 // pred_fallthru
      _
    // Predicated region
    $region34: #{transformer_decoder.13} parent=1 // pred_check
      _
    $region35: #{transformer_decoder.13} parent=1 // pred_check_branch
      %248 = sbr.rel (0) target = $region37
    $region36: #{transformer_decoder.13} parent=1 // pred_region
      %249 = dma.done [#allocation3], 256
    $region37: #{transformer_decoder.13} parent=1 // pred_fallthru
      _
    %250 = vsyncpa [#allocation3], 1

</llo_original>
